<compile_context>
chip_gen: v7x
topology: tpu7x:2x2x1
jax: 0.10.0
libtpu: 0.0.40
codegen_flags: <defaults>
</compile_context>

<pallas_src>
import functools

import jax
import jax.numpy as jnp
from jax.experimental import pallas as pl
from jax.experimental.pallas import tpu as pltpu

_INV_SQRT2 = 0.7071067811865476
_LN_EPS = 1e-5


# ----------------------------------------------------------------------------
# Math helpers (shared by kernels and the pure-JAX reference)
# ----------------------------------------------------------------------------
def _layer_norm(x, gamma, beta, eps=_LN_EPS):
    mu = jnp.mean(x, axis=-1, keepdims=True)
    var = jnp.mean(jnp.square(x - mu), axis=-1, keepdims=True)
    return (x - mu) * jax.lax.rsqrt(var + eps) * gamma + beta


def _gelu(h, approximate):
    if approximate:
        # tanh-based GELU: transcendentals go to the EUP slot (frees VALU on v6e/v7x).
        return jax.nn.gelu(h, approximate=True)
    # Exact erf-based GELU, matching torch.nn.GELU() default.
    return 0.5 * h * (1.0 + jax.lax.erf(h * jnp.float32(_INV_SQRT2)))


# ----------------------------------------------------------------------------
# Hardware queries (best effort, safe fallbacks)
# ----------------------------------------------------------------------------
def _vmem_capacity_bytes():
    try:
        cap = pltpu.get_tpu_info().vmem_capacity_bytes
        if cap and int(cap) > 0:
            return int(cap)
    except Exception:
        pass
    return 64 << 20  # conservative: v7x per-TensorCore VMEM


def _num_tensorcores():
    try:
        info = pltpu.get_tpu_info()
        for attr in ("num_cores", "num_tensorcores", "tensorcore_count", "cores_per_chip"):
            v = getattr(info, attr, None)
            if isinstance(v, int) and v > 0:
                return v
    except Exception:
        pass
    try:
        v = getattr(jax.devices()[0], "num_cores", None)
        if isinstance(v, int) and v > 0:
            return v
    except Exception:
        pass
    return 1


# ----------------------------------------------------------------------------
# Kernel 1: weights resident in VMEM (v5e/v6e, and v7x when they fit)
# ----------------------------------------------------------------------------
def _ffn_resident_kernel(x_ref, g1_ref, b1_ref, w1_ref, bb1_ref,
                         g2_ref, b2_ref, w2_ref, bb2_ref, o_ref,
                         *, gelu_approx):
    # LayerNorm(dim) on un-quantized activations, f32 statistics.
    x = x_ref[...].astype(jnp.float32)
    h = _layer_norm(x, g1_ref[...], b1_ref[...])

    # Linear(dim -> inner): bf16 operands, f32 MXU accumulation.
    h = jnp.dot(h.astype(w1_ref.dtype), w1_ref[...],
                preferred_element_type=jnp.float32) + bb1_ref[...]
    h = _gelu(h, gelu_approx)
    # Dropout(p=0.0) is the identity.

    # LayerNorm(inner) directly on the live intermediate (no VMEM round trip).
    h = _layer_norm(h, g2_ref[...], b2_ref[...])

    # Linear(inner -> dim_out).
    out = jnp.dot(h.astype(w2_ref.dtype), w2_ref[...],
                  preferred_element_type=jnp.float32) + bb2_ref[...]
    o_ref[...] = out.astype(o_ref.dtype)


# ----------------------------------------------------------------------------
# Kernel 2: inner-dimension tiled path (weights streamed; for v7x / huge FFNs)
#
# LayerNorm2 is applied analytically so that matmul2 can be accumulated while
# streaming inner tiles:
#   LN2(h) @ W2 = r * [ (h*g2) @ W2 - mu * (g2 @ W2) ] + b2 @ W2
# with mu, r = per-row mean / rsqrt(var+eps) of h, accumulated via sum / sum^2.
# ----------------------------------------------------------------------------
def _ffn_tiled_kernel(x_ref, g1_ref, b1_ref, w1_ref, bb1_ref,
                      g2_ref, b2_ref, w2_ref, bb2_ref, o_ref,
                      ln1_ref, acc_ref, gvec_ref, bvec_ref, sum_ref, ssq_ref,
                      *, inner_total, gelu_approx):
    j = pl.program_id(1)
    nj = pl.num_programs(1)

    @pl.when(j == 0)
    def _init():
        x = x_ref[...].astype(jnp.float32)
        ln1_ref[...] = _layer_norm(x, g1_ref[...], b1_ref[...]).astype(ln1_ref.dtype)
        acc_ref[...] = jnp.zeros_like(acc_ref)
        gvec_ref[...] = jnp.zeros_like(gvec_ref)
        bvec_ref[...] = jnp.zeros_like(bvec_ref)
        sum_ref[...] = jnp.zeros_like(sum_ref)
        ssq_ref[...] = jnp.zeros_like(ssq_ref)

    # h tile = GELU(LN1(x) @ W1[:, tile] + b1[tile])   -> [row_tile, inner_tile] f32
    h = jnp.dot(ln1_ref[...], w1_ref[...],
                preferred_element_type=jnp.float32) + bb1_ref[...]
    h = _gelu(h, gelu_approx)
    # Dropout(p=0.0) is the identity.

    # Streaming LayerNorm2 statistics.
    sum_ref[...] += jnp.sum(h, axis=-1, keepdims=True)
    ssq_ref[...] += jnp.sum(h * h, axis=-1, keepdims=True)

    g2 = g2_ref[...]                       # (1, inner_tile) f32
    b2 = b2_ref[...]                       # (1, inner_tile) f32
    w2 = w2_ref[...]                       # (inner_tile, dim_out) bf16

    hg = (h * g2).astype(w2.dtype)
    acc_ref[...] += jnp.dot(hg, w2, preferred_element_type=jnp.float32)
    gvec_ref[...] += jnp.dot(g2.astype(w2.dtype), w2, preferred_element_type=jnp.float32)
    bvec_ref[...] += jnp.dot(b2.astype(w2.dtype), w2, preferred_element_type=jnp.float32)

    @pl.when(j == nj - 1)
    def _finalize():
        inv_n = jnp.float32(1.0 / inner_total)
        mu = sum_ref[...] * inv_n
        var = jnp.maximum(ssq_ref[...] * inv_n - mu * mu, 0.0)
        r = jax.lax.rsqrt(var + jnp.float32(_LN_EPS))
        out = r * (acc_ref[...] - mu * gvec_ref[...]) + bvec_ref[...] + bb2_ref[...]
        o_ref[...] = out.astype(o_ref.dtype)


# ----------------------------------------------------------------------------
# Wrapper
# ----------------------------------------------------------------------------
def feed_forward(x, params, *, row_tile=256, compute_dtype=jnp.bfloat16,
                 inner_tile=None, out_dtype=None, gelu_approx=False,
                 force_tiled=False):
    """x: [B, S, dim] -> [B, S, dim_out]."""
    B, S, dim = x.shape
    g1, b1, w1, bb1, g2, b2, w2, bb2 = params
    inner = w1.shape[1]
    dim_out = w2.shape[1]
    out_dtype = x.dtype if out_dtype is None else out_dtype

    # Weights should already be in compute_dtype (see prepare_params); only cast
    # if the caller passed full-precision weights.
    if w1.dtype != compute_dtype:
        w1 = w1.astype(compute_dtype)
    if w2.dtype != compute_dtype:
        w2 = w2.astype(compute_dtype)
    g1 = g1.reshape(1, dim).astype(jnp.float32)
    b1 = b1.reshape(1, dim).astype(jnp.float32)
    bb1 = bb1.reshape(1, inner).astype(jnp.float32)
    g2 = g2.reshape(1, inner).astype(jnp.float32)
    b2 = b2.reshape(1, inner).astype(jnp.float32)
    bb2 = bb2.reshape(1, dim_out).astype(jnp.float32)

    xbytes = jnp.dtype(x.dtype).itemsize
    obytes = jnp.dtype(out_dtype).itemsize
    wbytes = jnp.dtype(compute_dtype).itemsize

    rows = B * S
    sub = 16 if min(xbytes, obytes) == 2 else 8   # sublane quantum for the row dim

    # Row tile: as large as practical. Only shrink for multi-TensorCore chips
    # (v7x), where >= ncores grid steps are needed for megacore sharding.
    ncores = _num_tensorcores()
    rt = max(sub, (min(row_tile, rows) // sub) * sub)
    if ncores > 1:
        while rows // rt < ncores and rt > sub:
            rt = max(sub, ((rt // 2) // sub) * sub)
    grid_rows = pl.cdiv(rows, rt)
    if ncores > 1 and grid_rows > 1:
        grid_rows = ((grid_rows + ncores - 1) // ncores) * ncores  # balanced split
    rows_p = grid_rows * rt

    x2d = x.reshape(rows, dim)
    if rows_p != rows:
        x2d = jnp.pad(x2d, ((0, rows_p - rows), (0, 0)))

    # --- VMEM accounting (per TensorCore) ------------------------------------
    cap = _vmem_capacity_bytes()
    budget = int(cap * 0.85)

    w_total = (dim * inner + inner * dim_out) * wbytes
    vec_bytes = 2 * 8 * 4 * (2 * dim + 3 * inner + 2 * dim_out)       # padded f32 vectors
    tile_bytes = 2 * rt * dim * xbytes + 2 * rt * dim_out * obytes    # x / out, double-buffered
    # Conservative: 2 weight buffers (so the Buffered(1) fallback can never OOM)
    # plus headroom for the live f32 [rt, inner] intermediate.
    resident_need = tile_bytes + 2 * w_total + vec_bytes + rt * inner * 4

    use_tiled = force_tiled or resident_need > budget

    cost = pl.CostEstimate(
        flops=2 * rows_p * dim * inner + 2 * rows_p * inner * dim_out,
        transcendentals=rows_p * inner,
        bytes_accessed=(rows_p * dim * xbytes + rows_p * dim_out * obytes
                        + w_total + 4 * (2 * dim + 3 * inner + 2 * dim_out)),
    )

    if not use_tiled:
        # ---------------- resident-weight path ----------------
        vmem_limit = min(int(cap * 0.9), max(32 << 20, int(resident_need * 1.15)))
        kern = functools.partial(_ffn_resident_kernel, gelu_approx=gelu_approx)

        def _const_spec(shape, single):
            imap = lambda i: (0,) * len(shape)
            if single:
                return pl.BlockSpec(shape, imap, pipeline_mode=pl.Buffered(1))
            return pl.BlockSpec(shape, imap)

        def _build(single):
            return pl.pallas_call(
                kern,
                out_shape=jax.ShapeDtypeStruct((rows_p, dim_out), out_dtype),
                grid_spec=pltpu.PrefetchScalarGridSpec(
                    num_scalar_prefetch=0,
                    grid=(grid_rows,),
                    in_specs=[
                        pl.BlockSpec((rt, dim), lambda i: (i, 0)),        # x tile
                        _const_spec((1, dim), single),                    # LN1 gamma
                        _const_spec((1, dim), single),                    # LN1 beta
                        _const_spec((dim, inner), single),                # W1 (in, out)
                        _const_spec((1, inner), single),                  # b1
                        _const_spec((1, inner), single),                  # LN2 gamma
                        _const_spec((1, inner), single),                  # LN2 beta
                        _const_spec((inner, dim_out), single),            # W2 (in, out)
                        _const_spec((1, dim_out), single),                # b2
                    ],
                    out_specs=pl.BlockSpec((rt, dim_out), lambda i: (i, 0)),
                ),
                compiler_params=pltpu.CompilerParams(
                    dimension_semantics=("parallel",),
                    vmem_limit_bytes=vmem_limit,
                ),
                cost_estimate=cost,
            )

        args = (x2d, g1, b1, w1, bb1, g2, b2, w2, bb2)
        try:
            out2d = _build(True)(*args)
        except Exception as e:  # narrow fallback: budget already covers 2 weight buffers
            print("feed_forward: Buffered(1) const path unavailable "
                  f"({type(e).__name__}); using default buffering")
            out2d = _build(False)(*args)

    else:
        # ---------------- inner-dimension tiled path ----------------
        ti = inner_tile
        if ti is None:
            ti = 256
            for cand in (4096, 2048, 1024, 512, 256):
                need = (tile_bytes + vec_bytes
                        + 2 * (dim + dim_out) * cand * wbytes      # streamed W1/W2 blocks
                        + 2 * 3 * 8 * cand * 4                     # bb1/g2/b2 blocks
                        + rt * dim * wbytes                        # LN1(x) scratch
                        + rt * dim_out * 4 + 2 * 8 * dim_out * 4   # accumulators
                        + 2 * rt * 128 * 4)                        # sum / sum^2
                if need <= budget:
                    ti = cand
                    break
        ti = max(128, (min(ti, inner) // 128) * 128)
        n_inner = pl.cdiv(inner, ti)
        inner_p = n_inner * ti
        if inner_p != inner:
            pad = inner_p - inner
            w1 = jnp.pad(w1, ((0, 0), (0, pad)))
            bb1 = jnp.pad(bb1, ((0, 0), (0, pad)))
            g2 = jnp.pad(g2, ((0, 0), (0, pad)))
            b2 = jnp.pad(b2, ((0, 0), (0, pad)))
            w2 = jnp.pad(w2, ((0, pad), (0, 0)))

        tiled_need = (tile_bytes + vec_bytes
                      + 2 * (dim + dim_out) * ti * wbytes
                      + 2 * 3 * 8 * ti * 4
                      + rt * dim * wbytes
                      + rt * dim_out * 4 + 2 * 8 * dim_out * 4
                      + 2 * rt * 128 * 4)
        vmem_limit = min(int(cap * 0.9), max(32 << 20, int(tiled_need * 1.2)))

        kern = functools.partial(_ffn_tiled_kernel, inner_total=inner,
                                 gelu_approx=gelu_approx)
        ffn = pl.pallas_call(
            kern,
            out_shape=jax.ShapeDtypeStruct((rows_p, dim_out), out_dtype),
            grid_spec=pltpu.PrefetchScalarGridSpec(
                num_scalar_prefetch=0,
                grid=(grid_rows, n_inner),
                in_specs=[
                    pl.BlockSpec((rt, dim),     lambda i, j: (i, 0)),   # x tile (resident over j)
                    pl.BlockSpec((1, dim),      lambda i, j: (0, 0)),   # LN1 gamma
                    pl.BlockSpec((1, dim),      lambda i, j: (0, 0)),   # LN1 beta
                    pl.BlockSpec((dim, ti),     lambda i, j: (0, j)),   # W1 column tile
                    pl.BlockSpec((1, ti),       lambda i, j: (0, j)),   # b1 tile
                    pl.BlockSpec((1, ti),       lambda i, j: (0, j)),   # LN2 gamma tile
                    pl.BlockSpec((1, ti),       lambda i, j: (0, j)),   # LN2 beta tile
                    pl.BlockSpec((ti, dim_out), lambda i, j: (j, 0)),   # W2 row tile
                    pl.BlockSpec((1, dim_out),  lambda i, j: (0, 0)),   # b2
                ],
                out_specs=pl.BlockSpec((rt, dim_out), lambda i, j: (i, 0)),
                scratch_shapes=[
                    pltpu.VMEM((rt, dim), compute_dtype),     # cached LN1(x)
                    pltpu.VMEM((rt, dim_out), jnp.float32),   # (h*g2) @ W2 accumulator
                    pltpu.VMEM((1, dim_out), jnp.float32),    # g2 @ W2 accumulator
                    pltpu.VMEM((1, dim_out), jnp.float32),    # b2 @ W2 accumulator
                    pltpu.VMEM((rt, 1), jnp.float32),         # sum(h)
                    pltpu.VMEM((rt, 1), jnp.float32),         # sum(h^2)
                ],
            ),
            compiler_params=pltpu.CompilerParams(
                dimension_semantics=("parallel", "arbitrary"),
                vmem_limit_bytes=vmem_limit,
            ),
            cost_estimate=cost,
        )
        out2d = ffn(x2d, g1, b1, w1, bb1, g2, b2, w2, bb2)

    return out2d[:rows].reshape(B, S, dim_out)


# ----------------------------------------------------------------------------
# Parameters
# ----------------------------------------------------------------------------
def init_params(key, dim, mult=4, dim_out=None, dtype=jnp.float32):
    """Parameter shapes matching the PyTorch module (weights stored as (in, out))."""
    inner = int(dim * mult)
    dim_out = dim if dim_out is None else dim_out
    k1, k2, k3, k4 = jax.random.split(key, 4)

    bound1 = 1.0 / (dim ** 0.5)
    w1 = jax.random.uniform(k1, (dim, inner), dtype, -bound1, bound1)
    bb1 = jax.random.uniform(k2, (inner,), dtype, -bound1, bound1)

    bound2 = 1.0 / (inner ** 0.5)
    w2 = jax.random.uniform(k3, (inner, dim_out), dtype, -bound2, bound2)
    bb2 = jax.random.uniform(k4, (dim_out,), dtype, -bound2, bound2)

    g1 = jnp.ones((dim,), dtype)
    b1 = jnp.zeros((dim,), dtype)
    g2 = jnp.ones((inner,), dtype)
    b2 = jnp.zeros((inner,), dtype)
    return (g1, b1, w1, bb1, g2, b2, w2, bb2)


def prepare_params(params, compute_dtype=jnp.bfloat16):
    """One-time cast of matmul weights to the MXU compute dtype (done at parameter
    load time so the per-call wrapper adds no extra HBM round trips)."""
    g1, b1, w1, bb1, g2, b2, w2, bb2 = params
    f32 = jnp.float32
    return (g1.astype(f32), b1.astype(f32), w1.astype(compute_dtype), bb1.astype(f32),
            g2.astype(f32), b2.astype(f32), w2.astype(compute_dtype), bb2.astype(f32))


def feed_forward_ref(x, params, compute_dtype=jnp.bfloat16):
    """Pure-JAX reference mirroring the kernel's mixed precision."""
    g1, b1, w1, bb1, g2, b2, w2, bb2 = params
    B, S, dim = x.shape
    xf = x.reshape(B * S, dim).astype(jnp.float32)
    h = _layer_norm(xf, g1.astype(jnp.float32), b1.astype(jnp.float32))
    h = jnp.dot(h.astype(compute_dtype), w1.astype(compute_dtype),
                preferred_element_type=jnp.float32) + bb1.astype(jnp.float32)
    h = 0.5 * h * (1.0 + jax.lax.erf(h * jnp.float32(_INV_SQRT2)))
    h = _layer_norm(h, g2.astype(jnp.float32), b2.astype(jnp.float32))
    out = jnp.dot(h.astype(compute_dtype), w2.astype(compute_dtype),
                  preferred_element_type=jnp.float32) + bb2.astype(jnp.float32)
    return out.astype(x.dtype).reshape(B, S, -1)


if __name__ == "__main__":
    # Small but lane-dense shapes: batch=2, seq=64, dim=128, mult=4 (inner=512).
    B, S, dim, mult = 2, 64, 128, 4

    key = jax.random.PRNGKey(0)
    kx, kp = jax.random.split(key)
    x = jax.random.normal(kx, (B, S, dim), jnp.float32)
    params = prepare_params(init_params(kp, dim, mult=mult), jnp.bfloat16)
    ref = feed_forward_ref(x, params)

    # Resident-weight path (default on v5e/v6e and small FFNs on v7x).
    out = jax.block_until_ready(feed_forward(x, params))
    assert out.shape == (B, S, dim)
    assert jnp.allclose(out, ref, atol=2e-2, rtol=2e-2), "resident path mismatch"

    # Inner-dimension tiled path (what v7x uses when weights exceed VMEM);
    # forced here at small shapes so it is exercised and verified too.
    out_t = jax.block_until_ready(
        feed_forward(x, params, force_tiled=True, inner_tile=256))
    assert out_t.shape == (B, S, dim)
    assert jnp.allclose(out_t, ref, atol=4e-2, rtol=4e-2), "tiled path mismatch"

    print("KERNEL_OK")
</pallas_src>

<mosaic_0001>
module attributes {stable_mosaic.version = 11 : i64} {
  func.func @_ffn_resident_kernel(%arg0: i32, %arg1: memref<128x128xf32, #tpu.memory_space<vmem>>, %arg2: memref<1x128xf32, #tpu.memory_space<vmem>>, %arg3: memref<1x128xf32, #tpu.memory_space<vmem>>, %arg4: memref<128x512xbf16, #tpu.memory_space<vmem>>, %arg5: memref<1x512xf32, #tpu.memory_space<vmem>>, %arg6: memref<1x512xf32, #tpu.memory_space<vmem>>, %arg7: memref<1x512xf32, #tpu.memory_space<vmem>>, %arg8: memref<512x128xbf16, #tpu.memory_space<vmem>>, %arg9: memref<1x128xf32, #tpu.memory_space<vmem>>, %arg10: memref<128x128xf32, #tpu.memory_space<vmem>>) attributes {dimension_semantics = [#tpu.dimension_semantics<parallel>], iteration_bounds = array<i64: 1>, scalar_prefetch = 0 : i64, scratch_operands = 0 : i64, tpu.core_type = #tpu.core_type<tc>, window_params = [{transform_indices = @transform_0, window_bounds = array<i64: 128, 128>}, {pipeline_mode = #tpu.pipeline_mode<synchronous>, transform_indices = @transform_1, window_bounds = array<i64: 1, 128>}, {pipeline_mode = #tpu.pipeline_mode<synchronous>, transform_indices = @transform_2, window_bounds = array<i64: 1, 128>}, {pipeline_mode = #tpu.pipeline_mode<synchronous>, transform_indices = @transform_3, window_bounds = array<i64: 128, 512>}, {pipeline_mode = #tpu.pipeline_mode<synchronous>, transform_indices = @transform_4, window_bounds = array<i64: 1, 512>}, {pipeline_mode = #tpu.pipeline_mode<synchronous>, transform_indices = @transform_5, window_bounds = array<i64: 1, 512>}, {pipeline_mode = #tpu.pipeline_mode<synchronous>, transform_indices = @transform_6, window_bounds = array<i64: 1, 512>}, {pipeline_mode = #tpu.pipeline_mode<synchronous>, transform_indices = @transform_7, window_bounds = array<i64: 512, 128>}, {pipeline_mode = #tpu.pipeline_mode<synchronous>, transform_indices = @transform_8, window_bounds = array<i64: 1, 128>}, {transform_indices = @transform_9, window_bounds = array<i64: 128, 128>}]} {
    %c0 = arith.constant 0 : index
    %c0_0 = arith.constant 0 : index
    %0 = vector.load %arg1[%c0, %c0_0] : memref<128x128xf32, #tpu.memory_space<vmem>>, vector<128x128xf32>
    %c0_1 = arith.constant 0 : index
    %c0_2 = arith.constant 0 : index
    %1 = vector.load %arg2[%c0_1, %c0_2] : memref<1x128xf32, #tpu.memory_space<vmem>>, vector<1x128xf32>
    %c0_3 = arith.constant 0 : index
    %c0_4 = arith.constant 0 : index
    %2 = vector.load %arg3[%c0_3, %c0_4] : memref<1x128xf32, #tpu.memory_space<vmem>>, vector<1x128xf32>
    %cst = arith.constant dense<0.000000e+00> : vector<128xf32>
    %3 = vector.multi_reduction <add>, %0, %cst [1] : vector<128x128xf32> to vector<128xf32>
    %4 = vector.shape_cast %3 : vector<128xf32> to vector<128x1xf32>
    %cst_5 = arith.constant 1.280000e+02 : f32
    %5 = vector.broadcast %cst_5 : f32 to vector<128x1xf32>
    %6 = arith.divf %4, %5 : vector<128x1xf32>
    %7 = vector.broadcast %6 : vector<128x1xf32> to vector<128x128xf32>
    %8 = arith.subf %0, %7 : vector<128x128xf32>
    %9 = arith.mulf %8, %8 : vector<128x128xf32>
    %cst_6 = arith.constant dense<0.000000e+00> : vector<128xf32>
    %10 = vector.multi_reduction <add>, %9, %cst_6 [1] : vector<128x128xf32> to vector<128xf32>
    %11 = vector.shape_cast %10 : vector<128xf32> to vector<128x1xf32>
    %cst_7 = arith.constant 1.280000e+02 : f32
    %12 = vector.broadcast %cst_7 : f32 to vector<128x1xf32>
    %13 = arith.divf %11, %12 : vector<128x1xf32>
    %14 = vector.broadcast %6 : vector<128x1xf32> to vector<128x128xf32>
    %15 = arith.subf %0, %14 : vector<128x128xf32>
    %cst_8 = arith.constant 9.99999974E-6 : f32
    %16 = vector.broadcast %cst_8 : f32 to vector<128x1xf32>
    %17 = arith.addf %13, %16 : vector<128x1xf32>
    %18 = math.rsqrt %17 : vector<128x1xf32>
    %19 = vector.broadcast %18 : vector<128x1xf32> to vector<128x128xf32>
    %20 = arith.mulf %15, %19 : vector<128x128xf32>
    %21 = vector.broadcast %1 : vector<1x128xf32> to vector<128x128xf32>
    %22 = arith.mulf %20, %21 : vector<128x128xf32>
    %23 = vector.broadcast %2 : vector<1x128xf32> to vector<128x128xf32>
    %24 = arith.addf %22, %23 : vector<128x128xf32>
    %25 = arith.truncf %24 : vector<128x128xf32> to vector<128x128xbf16>
    %c0_9 = arith.constant 0 : index
    %c0_10 = arith.constant 0 : index
    %26 = vector.load %arg4[%c0_9, %c0_10] : memref<128x512xbf16, #tpu.memory_space<vmem>>, vector<128x512xbf16>
    %cst_11 = arith.constant dense<0.000000e+00> : vector<128x512xf32>
    %27 = tpu.matmul %25, %26, %cst_11 {dimension_numbers = #tpu.dot_dimension_numbers<[1], [0], [0], [1], [0, 0, 1, 1], [], []>} : vector<128x128xbf16>, vector<128x512xbf16>, vector<128x512xf32> -> vector<128x512xf32>
    %c0_12 = arith.constant 0 : index
    %c0_13 = arith.constant 0 : index
    %28 = vector.load %arg5[%c0_12, %c0_13] : memref<1x512xf32, #tpu.memory_space<vmem>>, vector<1x512xf32>
    %29 = vector.broadcast %28 : vector<1x512xf32> to vector<128x512xf32>
    %30 = arith.addf %27, %29 : vector<128x512xf32>
    %cst_14 = arith.constant 5.000000e-01 : f32
    %31 = vector.broadcast %cst_14 : f32 to vector<128x512xf32>
    %32 = arith.mulf %31, %30 : vector<128x512xf32>
    %cst_15 = arith.constant 0.707106769 : f32
    %33 = vector.broadcast %cst_15 : f32 to vector<128x512xf32>
    %34 = arith.mulf %30, %33 : vector<128x512xf32>
    %35 = math.erf %34 : vector<128x512xf32>
    %cst_16 = arith.constant 1.000000e+00 : f32
    %36 = vector.broadcast %cst_16 : f32 to vector<128x512xf32>
    %37 = arith.addf %36, %35 : vector<128x512xf32>
    %38 = arith.mulf %32, %37 : vector<128x512xf32>
    %c0_17 = arith.constant 0 : index
    %c0_18 = arith.constant 0 : index
    %39 = vector.load %arg6[%c0_17, %c0_18] : memref<1x512xf32, #tpu.memory_space<vmem>>, vector<1x512xf32>
    %c0_19 = arith.constant 0 : index
    %c0_20 = arith.constant 0 : index
    %40 = vector.load %arg7[%c0_19, %c0_20] : memref<1x512xf32, #tpu.memory_space<vmem>>, vector<1x512xf32>
    %cst_21 = arith.constant dense<0.000000e+00> : vector<128xf32>
    %41 = vector.multi_reduction <add>, %38, %cst_21 [1] : vector<128x512xf32> to vector<128xf32>
    %42 = vector.shape_cast %41 : vector<128xf32> to vector<128x1xf32>
    %cst_22 = arith.constant 5.120000e+02 : f32
    %43 = vector.broadcast %cst_22 : f32 to vector<128x1xf32>
    %44 = arith.divf %42, %43 : vector<128x1xf32>
    %45 = vector.broadcast %44 : vector<128x1xf32> to vector<128x512xf32>
    %46 = arith.subf %38, %45 : vector<128x512xf32>
    %47 = arith.mulf %46, %46 : vector<128x512xf32>
    %cst_23 = arith.constant dense<0.000000e+00> : vector<128xf32>
    %48 = vector.multi_reduction <add>, %47, %cst_23 [1] : vector<128x512xf32> to vector<128xf32>
    %49 = vector.shape_cast %48 : vector<128xf32> to vector<128x1xf32>
    %cst_24 = arith.constant 5.120000e+02 : f32
    %50 = vector.broadcast %cst_24 : f32 to vector<128x1xf32>
    %51 = arith.divf %49, %50 : vector<128x1xf32>
    %52 = vector.broadcast %44 : vector<128x1xf32> to vector<128x512xf32>
    %53 = arith.subf %38, %52 : vector<128x512xf32>
    %cst_25 = arith.constant 9.99999974E-6 : f32
    %54 = vector.broadcast %cst_25 : f32 to vector<128x1xf32>
    %55 = arith.addf %51, %54 : vector<128x1xf32>
    %56 = math.rsqrt %55 : vector<128x1xf32>
    %57 = vector.broadcast %56 : vector<128x1xf32> to vector<128x512xf32>
    %58 = arith.mulf %53, %57 : vector<128x512xf32>
    %59 = vector.broadcast %39 : vector<1x512xf32> to vector<128x512xf32>
    %60 = arith.mulf %58, %59 : vector<128x512xf32>
    %61 = vector.broadcast %40 : vector<1x512xf32> to vector<128x512xf32>
    %62 = arith.addf %60, %61 : vector<128x512xf32>
    %63 = arith.truncf %62 : vector<128x512xf32> to vector<128x512xbf16>
    %c0_26 = arith.constant 0 : index
    %c0_27 = arith.constant 0 : index
    %64 = vector.load %arg8[%c0_26, %c0_27] : memref<512x128xbf16, #tpu.memory_space<vmem>>, vector<512x128xbf16>
    %cst_28 = arith.constant dense<0.000000e+00> : vector<128x128xf32>
    %65 = tpu.matmul %63, %64, %cst_28 {dimension_numbers = #tpu.dot_dimension_numbers<[1], [0], [0], [1], [0, 0, 1, 1], [], []>} : vector<128x512xbf16>, vector<512x128xbf16>, vector<128x128xf32> -> vector<128x128xf32>
    %c0_29 = arith.constant 0 : index
    %c0_30 = arith.constant 0 : index
    %66 = vector.load %arg9[%c0_29, %c0_30] : memref<1x128xf32, #tpu.memory_space<vmem>>, vector<1x128xf32>
    %67 = vector.broadcast %66 : vector<1x128xf32> to vector<128x128xf32>
    %68 = arith.addf %65, %67 : vector<128x128xf32>
    %c0_31 = arith.constant 0 : index
    %c0_32 = arith.constant 0 : index
    %69 = vector.load %arg10[%c0_31, %c0_32] : memref<128x128xf32, #tpu.memory_space<vmem>>, vector<128x128xf32>
    tpu.vector_store %arg10[%c0_31, %c0_32], %68 {strides = array<i32>} : memref<128x128xf32, #tpu.memory_space<vmem>>, vector<128x128xf32>,
    return
  }
  func.func @transform_0(%arg0: i32) -> (i32, i32) {
    %c0_i32 = arith.constant 0 : i32
    %c0_i32_0 = arith.constant 0 : i32
    return %arg0, %c0_i32 : i32, i32
  }
  func.func @transform_1(%arg0: i32) -> (i32, i32) {
    %c0_i32 = arith.constant 0 : i32
    %c0_i32_0 = arith.constant 0 : i32
    %c0_i32_1 = arith.constant 0 : i32
    return %c0_i32, %c0_i32_0 : i32, i32
  }
  func.func @transform_2(%arg0: i32) -> (i32, i32) {
    %c0_i32 = arith.constant 0 : i32
    %c0_i32_0 = arith.constant 0 : i32
    %c0_i32_1 = arith.constant 0 : i32
    return %c0_i32, %c0_i32_0 : i32, i32
  }
  func.func @transform_3(%arg0: i32) -> (i32, i32) {
    %c0_i32 = arith.constant 0 : i32
    %c0_i32_0 = arith.constant 0 : i32
    %c0_i32_1 = arith.constant 0 : i32
    return %c0_i32, %c0_i32_0 : i32, i32
  }
  func.func @transform_4(%arg0: i32) -> (i32, i32) {
    %c0_i32 = arith.constant 0 : i32
    %c0_i32_0 = arith.constant 0 : i32
    %c0_i32_1 = arith.constant 0 : i32
    return %c0_i32, %c0_i32_0 : i32, i32
  }
  func.func @transform_5(%arg0: i32) -> (i32, i32) {
    %c0_i32 = arith.constant 0 : i32
    %c0_i32_0 = arith.constant 0 : i32
    %c0_i32_1 = arith.constant 0 : i32
    return %c0_i32, %c0_i32_0 : i32, i32
  }
  func.func @transform_6(%arg0: i32) -> (i32, i32) {
    %c0_i32 = arith.constant 0 : i32
    %c0_i32_0 = arith.constant 0 : i32
    %c0_i32_1 = arith.constant 0 : i32
    return %c0_i32, %c0_i32_0 : i32, i32
  }
  func.func @transform_7(%arg0: i32) -> (i32, i32) {
    %c0_i32 = arith.constant 0 : i32
    %c0_i32_0 = arith.constant 0 : i32
    %c0_i32_1 = arith.constant 0 : i32
    return %c0_i32, %c0_i32_0 : i32, i32
  }
  func.func @transform_8(%arg0: i32) -> (i32, i32) {
    %c0_i32 = arith.constant 0 : i32
    %c0_i32_0 = arith.constant 0 : i32
    %c0_i32_1 = arith.constant 0 : i32
    return %c0_i32, %c0_i32_0 : i32, i32
  }
  func.func @transform_9(%arg0: i32) -> (i32, i32) {
    %c0_i32 = arith.constant 0 : i32
    %c0_i32_0 = arith.constant 0 : i32
    return %arg0, %c0_i32 : i32, i32
  }
}

module attributes {stable_mosaic.version = 11 : i64} {
  func.func @_ffn_resident_kernel(%arg0: i32, %arg1: memref<128x128xf32, #tpu.memory_space<vmem>>, %arg2: memref<1x128xf32, #tpu.memory_space<vmem>>, %arg3: memref<1x128xf32, #tpu.memory_space<vmem>>, %arg4: memref<128x512xbf16, #tpu.memory_space<vmem>>, %arg5: memref<1x512xf32, #tpu.memory_space<vmem>>, %arg6: memref<1x512xf32, #tpu.memory_space<vmem>>, %arg7: memref<1x512xf32, #tpu.memory_space<vmem>>, %arg8: memref<512x128xbf16, #tpu.memory_space<vmem>>, %arg9: memref<1x128xf32, #tpu.memory_space<vmem>>, %arg10: memref<128x128xf32, #tpu.memory_space<vmem>>) attributes {dimension_semantics = [#tpu.dimension_semantics<parallel>], iteration_bounds = array<i64: 1>, scalar_prefetch = 0 : i64, scratch_operands = 0 : i64, tpu.core_type = #tpu.core_type<tc>, window_params = [{transform_indices = @transform_0, window_bounds = array<i64: 128, 128>}, {pipeline_mode = #tpu.pipeline_mode<synchronous>, transform_indices = @transform_1, window_bounds = array<i64: 1, 128>}, {pipeline_mode = #tpu.pipeline_mode<synchronous>, transform_indices = @transform_2, window_bounds = array<i64: 1, 128>}, {pipeline_mode = #tpu.pipeline_mode<synchronous>, transform_indices = @transform_3, window_bounds = array<i64: 128, 512>}, {pipeline_mode = #tpu.pipeline_mode<synchronous>, transform_indices = @transform_4, window_bounds = array<i64: 1, 512>}, {pipeline_mode = #tpu.pipeline_mode<synchronous>, transform_indices = @transform_5, window_bounds = array<i64: 1, 512>}, {pipeline_mode = #tpu.pipeline_mode<synchronous>, transform_indices = @transform_6, window_bounds = array<i64: 1, 512>}, {pipeline_mode = #tpu.pipeline_mode<synchronous>, transform_indices = @transform_7, window_bounds = array<i64: 512, 128>}, {pipeline_mode = #tpu.pipeline_mode<synchronous>, transform_indices = @transform_8, window_bounds = array<i64: 1, 128>}, {transform_indices = @transform_9, window_bounds = array<i64: 128, 128>}]} {
    %c0 = arith.constant 0 : index
    %c0_0 = arith.constant 0 : index
    %0 = vector.load %arg1[%c0, %c0_0] : memref<128x128xf32, #tpu.memory_space<vmem>>, vector<128x128xf32>
    %c0_1 = arith.constant 0 : index
    %c0_2 = arith.constant 0 : index
    %1 = vector.load %arg2[%c0_1, %c0_2] : memref<1x128xf32, #tpu.memory_space<vmem>>, vector<1x128xf32>
    %c0_3 = arith.constant 0 : index
    %c0_4 = arith.constant 0 : index
    %2 = vector.load %arg3[%c0_3, %c0_4] : memref<1x128xf32, #tpu.memory_space<vmem>>, vector<1x128xf32>
    %cst = arith.constant dense<0.000000e+00> : vector<128xf32>
    %3 = vector.multi_reduction <add>, %0, %cst [1] : vector<128x128xf32> to vector<128xf32>
    %4 = vector.shape_cast %3 : vector<128xf32> to vector<128x1xf32>
    %cst_5 = arith.constant 1.280000e+02 : f32
    %5 = vector.broadcast %cst_5 : f32 to vector<128x1xf32>
    %6 = arith.divf %4, %5 : vector<128x1xf32>
    %7 = vector.broadcast %6 : vector<128x1xf32> to vector<128x128xf32>
    %8 = arith.subf %0, %7 : vector<128x128xf32>
    %9 = arith.mulf %8, %8 : vector<128x128xf32>
    %cst_6 = arith.constant dense<0.000000e+00> : vector<128xf32>
    %10 = vector.multi_reduction <add>, %9, %cst_6 [1] : vector<128x128xf32> to vector<128xf32>
    %11 = vector.shape_cast %10 : vector<128xf32> to vector<128x1xf32>
    %cst_7 = arith.constant 1.280000e+02 : f32
    %12 = vector.broadcast %cst_7 : f32 to vector<128x1xf32>
    %13 = arith.divf %11, %12 : vector<128x1xf32>
    %14 = vector.broadcast %6 : vector<128x1xf32> to vector<128x128xf32>
    %15 = arith.subf %0, %14 : vector<128x128xf32>
    %cst_8 = arith.constant 9.99999974E-6 : f32
    %16 = vector.broadcast %cst_8 : f32 to vector<128x1xf32>
    %17 = arith.addf %13, %16 : vector<128x1xf32>
    %18 = math.rsqrt %17 : vector<128x1xf32>
    %19 = vector.broadcast %18 : vector<128x1xf32> to vector<128x128xf32>
    %20 = arith.mulf %15, %19 : vector<128x128xf32>
    %21 = vector.broadcast %1 : vector<1x128xf32> to vector<128x128xf32>
    %22 = arith.mulf %20, %21 : vector<128x128xf32>
    %23 = vector.broadcast %2 : vector<1x128xf32> to vector<128x128xf32>
    %24 = arith.addf %22, %23 : vector<128x128xf32>
    %25 = arith.truncf %24 : vector<128x128xf32> to vector<128x128xbf16>
    %c0_9 = arith.constant 0 : index
    %c0_10 = arith.constant 0 : index
    %26 = vector.load %arg4[%c0_9, %c0_10] : memref<128x512xbf16, #tpu.memory_space<vmem>>, vector<128x512xbf16>
    %cst_11 = arith.constant dense<0.000000e+00> : vector<128x512xf32>
    %27 = tpu.matmul %25, %26, %cst_11 {dimension_numbers = #tpu.dot_dimension_numbers<[1], [0], [0], [1], [0, 0, 1, 1], [], []>} : vector<128x128xbf16>, vector<128x512xbf16>, vector<128x512xf32> -> vector<128x512xf32>
    %c0_12 = arith.constant 0 : index
    %c0_13 = arith.constant 0 : index
    %28 = vector.load %arg5[%c0_12, %c0_13] : memref<1x512xf32, #tpu.memory_space<vmem>>, vector<1x512xf32>
    %29 = vector.broadcast %28 : vector<1x512xf32> to vector<128x512xf32>
    %30 = arith.addf %27, %29 : vector<128x512xf32>
    %cst_14 = arith.constant 5.000000e-01 : f32
    %31 = vector.broadcast %cst_14 : f32 to vector<128x512xf32>
    %32 = arith.mulf %31, %30 : vector<128x512xf32>
    %cst_15 = arith.constant 0.707106769 : f32
    %33 = vector.broadcast %cst_15 : f32 to vector<128x512xf32>
    %34 = arith.mulf %30, %33 : vector<128x512xf32>
    %35 = math.erf %34 : vector<128x512xf32>
    %cst_16 = arith.constant 1.000000e+00 : f32
    %36 = vector.broadcast %cst_16 : f32 to vector<128x512xf32>
    %37 = arith.addf %36, %35 : vector<128x512xf32>
    %38 = arith.mulf %32, %37 : vector<128x512xf32>
    %c0_17 = arith.constant 0 : index
    %c0_18 = arith.constant 0 : index
    %39 = vector.load %arg6[%c0_17, %c0_18] : memref<1x512xf32, #tpu.memory_space<vmem>>, vector<1x512xf32>
    %c0_19 = arith.constant 0 : index
    %c0_20 = arith.constant 0 : index
    %40 = vector.load %arg7[%c0_19, %c0_20] : memref<1x512xf32, #tpu.memory_space<vmem>>, vector<1x512xf32>
    %cst_21 = arith.constant dense<0.000000e+00> : vector<128xf32>
    %41 = vector.multi_reduction <add>, %38, %cst_21 [1] : vector<128x512xf32> to vector<128xf32>
    %42 = vector.shape_cast %41 : vector<128xf32> to vector<128x1xf32>
    %cst_22 = arith.constant 5.120000e+02 : f32
    %43 = vector.broadcast %cst_22 : f32 to vector<128x1xf32>
    %44 = arith.divf %42, %43 : vector<128x1xf32>
    %45 = vector.broadcast %44 : vector<128x1xf32> to vector<128x512xf32>
    %46 = arith.subf %38, %45 : vector<128x512xf32>
    %47 = arith.mulf %46, %46 : vector<128x512xf32>
    %cst_23 = arith.constant dense<0.000000e+00> : vector<128xf32>
    %48 = vector.multi_reduction <add>, %47, %cst_23 [1] : vector<128x512xf32> to vector<128xf32>
    %49 = vector.shape_cast %48 : vector<128xf32> to vector<128x1xf32>
    %cst_24 = arith.constant 5.120000e+02 : f32
    %50 = vector.broadcast %cst_24 : f32 to vector<128x1xf32>
    %51 = arith.divf %49, %50 : vector<128x1xf32>
    %52 = vector.broadcast %44 : vector<128x1xf32> to vector<128x512xf32>
    %53 = arith.subf %38, %52 : vector<128x512xf32>
    %cst_25 = arith.constant 9.99999974E-6 : f32
    %54 = vector.broadcast %cst_25 : f32 to vector<128x1xf32>
    %55 = arith.addf %51, %54 : vector<128x1xf32>
    %56 = math.rsqrt %55 : vector<128x1xf32>
    %57 = vector.broadcast %56 : vector<128x1xf32> to vector<128x512xf32>
    %58 = arith.mulf %53, %57 : vector<128x512xf32>
    %59 = vector.broadcast %39 : vector<1x512xf32> to vector<128x512xf32>
    %60 = arith.mulf %58, %59 : vector<128x512xf32>
    %61 = vector.broadcast %40 : vector<1x512xf32> to vector<128x512xf32>
    %62 = arith.addf %60, %61 : vector<128x512xf32>
    %63 = arith.truncf %62 : vector<128x512xf32> to vector<128x512xbf16>
    %c0_26 = arith.constant 0 : index
    %c0_27 = arith.constant 0 : index
    %64 = vector.load %arg8[%c0_26, %c0_27] : memref<512x128xbf16, #tpu.memory_space<vmem>>, vector<512x128xbf16>
    %cst_28 = arith.constant dense<0.000000e+00> : vector<128x128xf32>
    %65 = tpu.matmul %63, %64, %cst_28 {dimension_numbers = #tpu.dot_dimension_numbers<[1], [0], [0], [1], [0, 0, 1, 1], [], []>} : vector<128x512xbf16>, vector<512x128xbf16>, vector<128x128xf32> -> vector<128x128xf32>
    %c0_29 = arith.constant 0 : index
    %c0_30 = arith.constant 0 : index
    %66 = vector.load %arg9[%c0_29, %c0_30] : memref<1x128xf32, #tpu.memory_space<vmem>>, vector<1x128xf32>
    %67 = vector.broadcast %66 : vector<1x128xf32> to vector<128x128xf32>
    %68 = arith.addf %65, %67 : vector<128x128xf32>
    %c0_31 = arith.constant 0 : index
    %c0_32 = arith.constant 0 : index
    %69 = vector.load %arg10[%c0_31, %c0_32] : memref<128x128xf32, #tpu.memory_space<vmem>>, vector<128x128xf32>
    tpu.vector_store %arg10[%c0_31, %c0_32], %68 {strides = array<i32>} : memref<128x128xf32, #tpu.memory_space<vmem>>, vector<128x128xf32>,
    return
  }
  func.func @transform_0(%arg0: i32) -> (i32, i32) {
    %c0_i32 = arith.constant 0 : i32
    %c0_i32_0 = arith.constant 0 : i32
    return %arg0, %c0_i32 : i32, i32
  }
  func.func @transform_1(%arg0: i32) -> (i32, i32) {
    %c0_i32 = arith.constant 0 : i32
    %c0_i32_0 = arith.constant 0 : i32
    %c0_i32_1 = arith.constant 0 : i32
    return %c0_i32, %c0_i32_0 : i32, i32
  }
  func.func @transform_2(%arg0: i32) -> (i32, i32) {
    %c0_i32 = arith.constant 0 : i32
    %c0_i32_0 = arith.constant 0 : i32
    %c0_i32_1 = arith.constant 0 : i32
    return %c0_i32, %c0_i32_0 : i32, i32
  }
  func.func @transform_3(%arg0: i32) -> (i32, i32) {
    %c0_i32 = arith.constant 0 : i32
    %c0_i32_0 = arith.constant 0 : i32
    %c0_i32_1 = arith.constant 0 : i32
    return %c0_i32, %c0_i32_0 : i32, i32
  }
  func.func @transform_4(%arg0: i32) -> (i32, i32) {
    %c0_i32 = arith.constant 0 : i32
    %c0_i32_0 = arith.constant 0 : i32
    %c0_i32_1 = arith.constant 0 : i32
    return %c0_i32, %c0_i32_0 : i32, i32
  }
  func.func @transform_5(%arg0: i32) -> (i32, i32) {
    %c0_i32 = arith.constant 0 : i32
    %c0_i32_0 = arith.constant 0 : i32
    %c0_i32_1 = arith.constant 0 : i32
    return %c0_i32, %c0_i32_0 : i32, i32
  }
  func.func @transform_6(%arg0: i32) -> (i32, i32) {
    %c0_i32 = arith.constant 0 : i32
    %c0_i32_0 = arith.constant 0 : i32
    %c0_i32_1 = arith.constant 0 : i32
    return %c0_i32, %c0_i32_0 : i32, i32
  }
  func.func @transform_7(%arg0: i32) -> (i32, i32) {
    %c0_i32 = arith.constant 0 : i32
    %c0_i32_0 = arith.constant 0 : i32
    %c0_i32_1 = arith.constant 0 : i32
    return %c0_i32, %c0_i32_0 : i32, i32
  }
  func.func @transform_8(%arg0: i32) -> (i32, i32) {
    %c0_i32 = arith.constant 0 : i32
    %c0_i32_0 = arith.constant 0 : i32
    %c0_i32_1 = arith.constant 0 : i32
    return %c0_i32, %c0_i32_0 : i32, i32
  }
  func.func @transform_9(%arg0: i32) -> (i32, i32) {
    %c0_i32 = arith.constant 0 : i32
    %c0_i32_0 = arith.constant 0 : i32
    return %arg0, %c0_i32 : i32, i32
  }
}

</mosaic_0001>

<llo_original>
// kernel: tpu_custom_call.1
$region0: #{tpu_custom_call.1}
  #allocation0 [shape = 'u32[]', space=smem, size = 0x4, offset = 0x4, fixed_abs, tag = 'smem constant byte address 0x4 - core index']
  #allocation1 [shape = 'u32[144,128]{1,0:T(1,128)}', space=vmem, size = 0x12000, scoped, tag = 'internal scratch']
  %s0 = inlined_call_operand.hbm [shape: f32[128,128], index: 0, kind: input, shape index: {}]
  %s1 = inlined_call_operand.vmem [shape: f32[1,128], index: 1, kind: input, shape index: {}]
  %s2 = inlined_call_operand.vmem [shape: f32[1,128], index: 2, kind: input, shape index: {}]
  %s3 = inlined_call_operand.hbm [shape: bf16[128,512], index: 3, kind: input, shape index: {}]
  %s4 = inlined_call_operand.vmem [shape: f32[1,512], index: 4, kind: input, shape index: {}]
  %s5 = inlined_call_operand.vmem [shape: f32[1,512], index: 5, kind: input, shape index: {}]
  %s6 = inlined_call_operand.vmem [shape: f32[1,512], index: 6, kind: input, shape index: {}]
  %s7 = inlined_call_operand.hbm [shape: bf16[512,128], index: 7, kind: input, shape index: {}]
  %s8 = inlined_call_operand.vmem [shape: f32[1,128], index: 8, kind: input, shape index: {}]
  %s9 = inlined_call_operand.hbm [shape: f32[128,128], index: 9, kind: output, shape index: {}]
  %s10 = sld [smem:[#allocation0]]
  $region58: #{tpu_custom_call.1} parent=0
    _
  %s12 = ssub.s32 1, %s10
  %s13 = scalar_select 0, %s12, %s10
  $region1: #{tpu_custom_call.1} parent=0
    #allocation2 [shape = 'u8[65536]{0}', space=vmem, size = 0x10000, scoped, tag = 'input window, operand 0, single buffered']
    #allocation3 [shape = 's32[1]{0}', space=sflag, size = 0x4, scoped, tag = 'scoped memory for tpu_custom_call.1']
    #allocation4 [shape = 's32[1]{0}', space=sflag, size = 0x4, scoped, tag = 'scoped memory for tpu_custom_call.1']
    #allocation5 [shape = 'u8[131072]{0}', space=vmem, size = 0x20000, scoped, tag = 'input window, operand 3, single buffered']
    #allocation6 [shape = 's32[1]{0}', space=sflag, size = 0x4, scoped, tag = 'scoped memory for tpu_custom_call.1']
    #allocation7 [shape = 'u8[131072]{0}', space=vmem, size = 0x20000, scoped, tag = 'input window, operand 7, single buffered']
    #allocation8 [shape = 'u8[65536]{0}', space=vmem, size = 0x10000, scoped, tag = 'output window, operand 0, single buffered']
    %14 = vsyncpa [#allocation3], 0
    %15 = vsyncpa [#allocation6], 0
    %16 = vsyncpa [#allocation4], 0
    // Predicated region
    $region2: #{tpu_custom_call.1} parent=1 // pred_check
      _
    $region3: #{tpu_custom_call.1} parent=1 // pred_check_branch
      %18 = sbr.rel (0) target = $region5
    $region4: #{tpu_custom_call.1} parent=1 // pred_region
      %s20 = ssub.s32 2048, 2048
      %21 = vsyncadd [#allocation3], %s20
      %s22 = sshll.u32 [#allocation2], 4
      %s23 = int_to_ptr.vmem [resolvable:$true] %s22
      %28 = dma.hbm_to_vmem [thread:$0]  %s0, 2048, %s23, [#allocation3], 128, 128, 8
    $region5: #{tpu_custom_call.1} parent=1 // pred_fallthru
      _
    // Predicated region
    $region6: #{tpu_custom_call.1} parent=1 // pred_check
      _
    $region7: #{tpu_custom_call.1} parent=1 // pred_check_branch
      %30 = sbr.rel (0) target = $region9
    $region8: #{tpu_custom_call.1} parent=1 // pred_region
      _
    $region9: #{tpu_custom_call.1} parent=1 // pred_fallthru
      _
    // Predicated region
    $region10: #{tpu_custom_call.1} parent=1 // pred_check
      _
    $region11: #{tpu_custom_call.1} parent=1 // pred_check_branch
      %32 = sbr.rel (0) target = $region13
    $region12: #{tpu_custom_call.1} parent=1 // pred_region
      _
    $region13: #{tpu_custom_call.1} parent=1 // pred_fallthru
      _
    // Predicated region
    $region14: #{tpu_custom_call.1} parent=1 // pred_check
      _
    $region15: #{tpu_custom_call.1} parent=1 // pred_check_branch
      %34 = sbr.rel (0) target = $region17
    $region16: #{tpu_custom_call.1} parent=1 // pred_region
      %s36 = ssub.s32 4096, 4096
      %37 = vsyncadd [#allocation6], %s36
      %s38 = sshll.u32 [#allocation5], 4
      %s39 = int_to_ptr.vmem [resolvable:$true] %s38
      %44 = dma.hbm_to_vmem [thread:$0]  %s3, 4096, %s39, [#allocation6], 256, 256, 16
    $region17: #{tpu_custom_call.1} parent=1 // pred_fallthru
      _
    // Predicated region
    $region18: #{tpu_custom_call.1} parent=1 // pred_check
      _
    $region19: #{tpu_custom_call.1} parent=1 // pred_check_branch
      %46 = sbr.rel (0) target = $region21
    $region20: #{tpu_custom_call.1} parent=1 // pred_region
      _
    $region21: #{tpu_custom_call.1} parent=1 // pred_fallthru
      _
    // Predicated region
    $region22: #{tpu_custom_call.1} parent=1 // pred_check
      _
    $region23: #{tpu_custom_call.1} parent=1 // pred_check_branch
      %48 = sbr.rel (0) target = $region25
    $region24: #{tpu_custom_call.1} parent=1 // pred_region
      _
    $region25: #{tpu_custom_call.1} parent=1 // pred_fallthru
      _
    // Predicated region
    $region26: #{tpu_custom_call.1} parent=1 // pred_check
      _
    $region27: #{tpu_custom_call.1} parent=1 // pred_check_branch
      %50 = sbr.rel (0) target = $region29
    $region28: #{tpu_custom_call.1} parent=1 // pred_region
      _
    $region29: #{tpu_custom_call.1} parent=1 // pred_fallthru
      _
    // Predicated region
    $region30: #{tpu_custom_call.1} parent=1 // pred_check
      _
    $region31: #{tpu_custom_call.1} parent=1 // pred_check_branch
      %52 = sbr.rel (0) target = $region33
    $region32: #{tpu_custom_call.1} parent=1 // pred_region
      %s54 = ssub.s32 4096, 4096
      %55 = vsyncadd [#allocation6], %s54
      %s56 = sshll.u32 [#allocation7], 4
      %s57 = int_to_ptr.vmem [resolvable:$true] %s56
      %62 = dma.hbm_to_vmem [thread:$0]  %s7, 4096, %s57, [#allocation6], 64, 64, 4
    $region33: #{tpu_custom_call.1} parent=1 // pred_fallthru
      _
    // Predicated region
    $region34: #{tpu_custom_call.1} parent=1 // pred_check
      _
    $region35: #{tpu_custom_call.1} parent=1 // pred_check_branch
      %64 = sbr.rel (0) target = $region37
    $region36: #{tpu_custom_call.1} parent=1 // pred_region
      _
    $region37: #{tpu_custom_call.1} parent=1 // pred_fallthru
      _
    // Predicated region
    $region38: #{tpu_custom_call.1} parent=1 // pred_check
      _
    $region39: #{tpu_custom_call.1} parent=1 // pred_check_branch
      %66 = sbr.rel (0) target = $region41
    $region40: #{tpu_custom_call.1} parent=1 // pred_region
      %67 = dma.done [#allocation3], 2048
    $region41: #{tpu_custom_call.1} parent=1 // pred_fallthru
      _
    // Predicated region
    $region42: #{tpu_custom_call.1} parent=1 // pred_check
      _
    $region43: #{tpu_custom_call.1} parent=1 // pred_check_branch
      %69 = sbr.rel (0) target = $region45
    $region44: #{tpu_custom_call.1} parent=1 // pred_region
      %70 = dma.done [#allocation6], 4096
    $region45: #{tpu_custom_call.1} parent=1 // pred_fallthru
      _
    // Predicated region
    $region46: #{tpu_custom_call.1} parent=1 // pred_check
      _
    $region47: #{tpu_custom_call.1} parent=1 // pred_check_branch
      %72 = sbr.rel (0) target = $region49
    $region48: #{tpu_custom_call.1} parent=1 // pred_region
      %73 = dma.done [#allocation6], 4096
    $region49: #{tpu_custom_call.1} parent=1 // pred_fallthru
      _
    %v75 = vld [vmem:[#allocation2] sm:$0xff]
    %v76 = vld [vmem:[#allocation2 + $0x8] sm:$0xff]
    %v77 = vld [vmem:[#allocation2 + $0x10] sm:$0xff]
    %v78 = vld [vmem:[#allocation2 + $0x18] sm:$0xff]
    %v79 = vld [vmem:[#allocation2 + $0x20] sm:$0xff]
    %v80 = vld [vmem:[#allocation2 + $0x28] sm:$0xff]
    %v81 = vld [vmem:[#allocation2 + $0x30] sm:$0xff]
    %v82 = vld [vmem:[#allocation2 + $0x38] sm:$0xff]
    %v83 = vld [vmem:[#allocation2 + $0x40] sm:$0xff]
    %v84 = vld [vmem:[#allocation2 + $0x48] sm:$0xff]
    %v85 = vld [vmem:[#allocation2 + $0x50] sm:$0xff]
    %v86 = vld [vmem:[#allocation2 + $0x58] sm:$0xff]
    %v87 = vld [vmem:[#allocation2 + $0x60] sm:$0xff]
    %v88 = vld [vmem:[#allocation2 + $0x68] sm:$0xff]
    %v89 = vld [vmem:[#allocation2 + $0x70] sm:$0xff]
    %v90 = vld [vmem:[#allocation2 + $0x78] sm:$0xff]
    %v91 = vld [vmem:[%s1] sm:$0x1]
    %v92 = vld [vmem:[%s2] sm:$0x1]
    %93 = vadd.xlane.f32.xlu0 %v75
    %v94 = vpop.xlane.xlu0 %93
    %95 = vadd.xlane.f32.xlu0 %v76
    %v96 = vpop.xlane.xlu0 %95
    %97 = vadd.xlane.f32.xlu0 %v77
    %v98 = vpop.xlane.xlu0 %97
    %99 = vadd.xlane.f32.xlu0 %v78
    %v100 = vpop.xlane.xlu0 %99
    %101 = vadd.xlane.f32.xlu0 %v79
    %v102 = vpop.xlane.xlu0 %101
    %103 = vadd.xlane.f32.xlu0 %v80
    %v104 = vpop.xlane.xlu0 %103
    %105 = vadd.xlane.f32.xlu0 %v81
    %v106 = vpop.xlane.xlu0 %105
    %107 = vadd.xlane.f32.xlu0 %v82
    %v108 = vpop.xlane.xlu0 %107
    %109 = vadd.xlane.f32.xlu0 %v83
    %v110 = vpop.xlane.xlu0 %109
    %111 = vadd.xlane.f32.xlu0 %v84
    %v112 = vpop.xlane.xlu0 %111
    %113 = vadd.xlane.f32.xlu0 %v85
    %v114 = vpop.xlane.xlu0 %113
    %115 = vadd.xlane.f32.xlu0 %v86
    %v116 = vpop.xlane.xlu0 %115
    %117 = vadd.xlane.f32.xlu0 %v87
    %v118 = vpop.xlane.xlu0 %117
    %119 = vadd.xlane.f32.xlu0 %v88
    %v120 = vpop.xlane.xlu0 %119
    %121 = vadd.xlane.f32.xlu0 %v89
    %v122 = vpop.xlane.xlu0 %121
    %123 = vadd.xlane.f32.xlu0 %v90
    %v124 = vpop.xlane.xlu0 %123
    %v125 = vrcp.pop 128.0
    %v126 = vmul.f32 %v94, %v125
    %v127 = vmul.f32 %v96, %v125
    %v128 = vmul.f32 %v98, %v125
    %v129 = vmul.f32 %v100, %v125
    %v130 = vmul.f32 %v102, %v125
    %v131 = vmul.f32 %v104, %v125
    %v132 = vmul.f32 %v106, %v125
    %v133 = vmul.f32 %v108, %v125
    %v134 = vmul.f32 %v110, %v125
    %v135 = vmul.f32 %v112, %v125
    %v136 = vmul.f32 %v114, %v125
    %v137 = vmul.f32 %v116, %v125
    %v138 = vmul.f32 %v118, %v125
    %v139 = vmul.f32 %v120, %v125
    %v140 = vmul.f32 %v122, %v125
    %v141 = vmul.f32 %v124, %v125
    %v142 = vsub.f32 %v75, %v126
    %v143 = vsub.f32 %v76, %v127
    %v144 = vsub.f32 %v77, %v128
    %v145 = vsub.f32 %v78, %v129
    %v146 = vsub.f32 %v79, %v130
    %v147 = vsub.f32 %v80, %v131
    %v148 = vsub.f32 %v81, %v132
    %v149 = vsub.f32 %v82, %v133
    %v150 = vsub.f32 %v83, %v134
    %v151 = vsub.f32 %v84, %v135
    %v152 = vsub.f32 %v85, %v136
    %v153 = vsub.f32 %v86, %v137
    %v154 = vsub.f32 %v87, %v138
    %v155 = vsub.f32 %v88, %v139
    %v156 = vsub.f32 %v89, %v140
    %v157 = vsub.f32 %v90, %v141
    %v158 = vmul.f32 %v142, %v142
    %v159 = vmul.f32 %v143, %v143
    %v160 = vmul.f32 %v144, %v144
    %v161 = vmul.f32 %v145, %v145
    %v162 = vmul.f32 %v146, %v146
    %v163 = vmul.f32 %v147, %v147
    %v164 = vmul.f32 %v148, %v148
    %v165 = vmul.f32 %v149, %v149
    %v166 = vmul.f32 %v150, %v150
    %v167 = vmul.f32 %v151, %v151
    %v168 = vmul.f32 %v152, %v152
    %v169 = vmul.f32 %v153, %v153
    %v170 = vmul.f32 %v154, %v154
    %v171 = vmul.f32 %v155, %v155
    %v172 = vmul.f32 %v156, %v156
    %v173 = vmul.f32 %v157, %v157
    %174 = vadd.xlane.f32.xlu0 %v158
    %v175 = vpop.xlane.xlu0 %174
    %176 = vadd.xlane.f32.xlu0 %v159
    %v177 = vpop.xlane.xlu0 %176
    %178 = vadd.xlane.f32.xlu0 %v160
    %v179 = vpop.xlane.xlu0 %178
    %180 = vadd.xlane.f32.xlu0 %v161
    %v181 = vpop.xlane.xlu0 %180
    %182 = vadd.xlane.f32.xlu0 %v162
    %v183 = vpop.xlane.xlu0 %182
    %184 = vadd.xlane.f32.xlu0 %v163
    %v185 = vpop.xlane.xlu0 %184
    %186 = vadd.xlane.f32.xlu0 %v164
    %v187 = vpop.xlane.xlu0 %186
    %188 = vadd.xlane.f32.xlu0 %v165
    %v189 = vpop.xlane.xlu0 %188
    %190 = vadd.xlane.f32.xlu0 %v166
    %v191 = vpop.xlane.xlu0 %190
    %192 = vadd.xlane.f32.xlu0 %v167
    %v193 = vpop.xlane.xlu0 %192
    %194 = vadd.xlane.f32.xlu0 %v168
    %v195 = vpop.xlane.xlu0 %194
    %196 = vadd.xlane.f32.xlu0 %v169
    %v197 = vpop.xlane.xlu0 %196
    %198 = vadd.xlane.f32.xlu0 %v170
    %v199 = vpop.xlane.xlu0 %198
    %200 = vadd.xlane.f32.xlu0 %v171
    %v201 = vpop.xlane.xlu0 %200
    %202 = vadd.xlane.f32.xlu0 %v172
    %v203 = vpop.xlane.xlu0 %202
    %204 = vadd.xlane.f32.xlu0 %v173
    %v205 = vpop.xlane.xlu0 %204
    %v206 = vmul.f32 %v175, %v125
    %v207 = vmul.f32 %v177, %v125
    %v208 = vmul.f32 %v179, %v125
    %v209 = vmul.f32 %v181, %v125
    %v210 = vmul.f32 %v183, %v125
    %v211 = vmul.f32 %v185, %v125
    %v212 = vmul.f32 %v187, %v125
    %v213 = vmul.f32 %v189, %v125
    %v214 = vmul.f32 %v191, %v125
    %v215 = vmul.f32 %v193, %v125
    %v216 = vmul.f32 %v195, %v125
    %v217 = vmul.f32 %v197, %v125
    %v218 = vmul.f32 %v199, %v125
    %v219 = vmul.f32 %v201, %v125
    %v220 = vmul.f32 %v203, %v125
    %v221 = vmul.f32 %v205, %v125
    %v222 = vadd.f32 %v206, 1e-05
    %v223 = vadd.f32 %v207, 1e-05
    %v224 = vadd.f32 %v208, 1e-05
    %v225 = vadd.f32 %v209, 1e-05
    %v226 = vadd.f32 %v210, 1e-05
    %v227 = vadd.f32 %v211, 1e-05
    %v228 = vadd.f32 %v212, 1e-05
    %v229 = vadd.f32 %v213, 1e-05
    %v230 = vadd.f32 %v214, 1e-05
    %v231 = vadd.f32 %v215, 1e-05
    %v232 = vadd.f32 %v216, 1e-05
    %v233 = vadd.f32 %v217, 1e-05
    %v234 = vadd.f32 %v218, 1e-05
    %v235 = vadd.f32 %v219, 1e-05
    %v236 = vadd.f32 %v220, 1e-05
    %v237 = vadd.f32 %v221, 1e-05
    %v238 = vrsqrt.pop %v222
    %v239 = vrsqrt.pop %v223
    %v240 = vrsqrt.pop %v224
    %v241 = vrsqrt.pop %v225
    %v242 = vrsqrt.pop %v226
    %v243 = vrsqrt.pop %v227
    %v244 = vrsqrt.pop %v228
    %v245 = vrsqrt.pop %v229
    %v246 = vrsqrt.pop %v230
    %v247 = vrsqrt.pop %v231
    %v248 = vrsqrt.pop %v232
    %v249 = vrsqrt.pop %v233
    %v250 = vrsqrt.pop %v234
    %v251 = vrsqrt.pop %v235
    %v252 = vrsqrt.pop %v236
    %v253 = vrsqrt.pop %v237
    %v254 = vmul.f32 %v142, %v238
    %v255 = vmul.f32 %v143, %v239
    %v256 = vmul.f32 %v144, %v240
    %v257 = vmul.f32 %v145, %v241
    %v258 = vmul.f32 %v146, %v242
    %v259 = vmul.f32 %v147, %v243
    %v260 = vmul.f32 %v148, %v244
    %v261 = vmul.f32 %v149, %v245
    %v262 = vmul.f32 %v150, %v246
    %v263 = vmul.f32 %v151, %v247
    %v264 = vmul.f32 %v152, %v248
    %v265 = vmul.f32 %v153, %v249
    %v266 = vmul.f32 %v154, %v250
    %v267 = vmul.f32 %v155, %v251
    %v268 = vmul.f32 %v156, %v252
    %v269 = vmul.f32 %v157, %v253
    %v271 = vlaneseq
    %v272 = vshrl.u32 %v271, 7
    %v273 = vsub.s32 0, %v272
    %v274 = vrot.slane %v91, %v273
    %v276 = vmul.f32 %v254, %v274
    %v277 = vmul.f32 %v255, %v274
    %v278 = vmul.f32 %v256, %v274
    %v279 = vmul.f32 %v257, %v274
    %v280 = vmul.f32 %v258, %v274
    %v281 = vmul.f32 %v259, %v274
    %v282 = vmul.f32 %v260, %v274
    %v283 = vmul.f32 %v261, %v274
    %v284 = vmul.f32 %v262, %v274
    %v285 = vmul.f32 %v263, %v274
    %v286 = vmul.f32 %v264, %v274
    %v287 = vmul.f32 %v265, %v274
    %v288 = vmul.f32 %v266, %v274
    %v289 = vmul.f32 %v267, %v274
    %v290 = vmul.f32 %v268, %v274
    %v291 = vmul.f32 %v269, %v274
    %v293 = vlaneseq
    %v294 = vshrl.u32 %v293, 7
    %v295 = vsub.s32 0, %v294
    %v296 = vrot.slane %v92, %v295
    %v298 = vadd.f32 %v276, %v296
    %v299 = vadd.f32 %v277, %v296
    %v300 = vadd.f32 %v278, %v296
    %v301 = vadd.f32 %v279, %v296
    %v302 = vadd.f32 %v280, %v296
    %v303 = vadd.f32 %v281, %v296
    %v304 = vadd.f32 %v282, %v296
    %v305 = vadd.f32 %v283, %v296
    %v306 = vadd.f32 %v284, %v296
    %v307 = vadd.f32 %v285, %v296
    %v308 = vadd.f32 %v286, %v296
    %v309 = vadd.f32 %v287, %v296
    %v310 = vadd.f32 %v288, %v296
    %v311 = vadd.f32 %v289, %v296
    %v312 = vadd.f32 %v290, %v296
    %v313 = vadd.f32 %v291, %v296
    %v314 = vpack.c.bf16 %v299, %v298
    %v315 = vpack.c.bf16 %v301, %v300
    %v316 = vpack.c.bf16 %v303, %v302
    %v317 = vpack.c.bf16 %v305, %v304
    %v318 = vpack.c.bf16 %v307, %v306
    %v319 = vpack.c.bf16 %v309, %v308
    %v320 = vpack.c.bf16 %v311, %v310
    %v321 = vpack.c.bf16 %v313, %v312
    %v322 = vld [vmem:[#allocation5] sm:$0xff]
    %v323 = vld [vmem:[#allocation5 + $0x8] sm:$0xff]
    %v324 = vld [vmem:[#allocation5 + $0x10] sm:$0xff]
    %v325 = vld [vmem:[#allocation5 + $0x18] sm:$0xff]
    %v326 = vld [vmem:[#allocation5 + $0x20] sm:$0xff]
    %v327 = vld [vmem:[#allocation5 + $0x28] sm:$0xff]
    %v328 = vld [vmem:[#allocation5 + $0x30] sm:$0xff]
    %v329 = vld [vmem:[#allocation5 + $0x38] sm:$0xff]
    %v330 = vld [vmem:[#allocation5 + $0x40] sm:$0xff]
    %v331 = vld [vmem:[#allocation5 + $0x48] sm:$0xff]
    %v332 = vld [vmem:[#allocation5 + $0x50] sm:$0xff]
    %v333 = vld [vmem:[#allocation5 + $0x58] sm:$0xff]
    %v334 = vld [vmem:[#allocation5 + $0x60] sm:$0xff]
    %v335 = vld [vmem:[#allocation5 + $0x68] sm:$0xff]
    %v336 = vld [vmem:[#allocation5 + $0x70] sm:$0xff]
    %v337 = vld [vmem:[#allocation5 + $0x78] sm:$0xff]
    %v338 = vld [vmem:[#allocation5 + $0x80] sm:$0xff]
    %v339 = vld [vmem:[#allocation5 + $0x88] sm:$0xff]
    %v340 = vld [vmem:[#allocation5 + $0x90] sm:$0xff]
    %v341 = vld [vmem:[#allocation5 + $0x98] sm:$0xff]
    %v342 = vld [vmem:[#allocation5 + $0xa0] sm:$0xff]
    %v343 = vld [vmem:[#allocation5 + $0xa8] sm:$0xff]
    %v344 = vld [vmem:[#allocation5 + $0xb0] sm:$0xff]
    %v345 = vld [vmem:[#allocation5 + $0xb8] sm:$0xff]
    %v346 = vld [vmem:[#allocation5 + $0xc0] sm:$0xff]
    %v347 = vld [vmem:[#allocation5 + $0xc8] sm:$0xff]
    %v348 = vld [vmem:[#allocation5 + $0xd0] sm:$0xff]
    %v349 = vld [vmem:[#allocation5 + $0xd8] sm:$0xff]
    %v350 = vld [vmem:[#allocation5 + $0xe0] sm:$0xff]
    %v351 = vld [vmem:[#allocation5 + $0xe8] sm:$0xff]
    %v352 = vld [vmem:[#allocation5 + $0xf0] sm:$0xff]
    %v353 = vld [vmem:[#allocation5 + $0xf8] sm:$0xff]
    %v354 = vld [vmem:[%s4] sm:$0xf]
    %v356 = vlaneseq
    %v357 = vshrl.u32 %v356, 7
    %v358 = vsub.s32 0, %v357
    %v359 = vrot.slane %v354, %v358
    %v360 = vlaneseq
    %v361 = vshrl.u32 %v360, 7
    %v362 = vsub.s32 1, %v361
    %v363 = vrot.slane %v354, %v362
    %v364 = vlaneseq
    %v365 = vshrl.u32 %v364, 7
    %v366 = vsub.s32 2, %v365
    %v367 = vrot.slane %v354, %v366
    %v368 = vlaneseq
    %v369 = vshrl.u32 %v368, 7
    %v370 = vsub.s32 3, %v369
    %v371 = vrot.slane %v354, %v370
    %v408 = vunpack.c.l.b16 %v322
    %v409 = vunpack.c.h.b16 %v322
    %v410 = vunpack.c.l.b16 %v323
    %v411 = vunpack.c.h.b16 %v323
    %v412 = vunpack.c.l.b16 %v324
    %v413 = vunpack.c.h.b16 %v324
    %v414 = vunpack.c.l.b16 %v325
    %v415 = vunpack.c.h.b16 %v325
    %v416 = vunpack.c.l.b16 %v326
    %v417 = vunpack.c.h.b16 %v326
    %v418 = vunpack.c.l.b16 %v327
    %v419 = vunpack.c.h.b16 %v327
    %v420 = vunpack.c.l.b16 %v328
    %v421 = vunpack.c.h.b16 %v328
    %v422 = vunpack.c.l.b16 %v329
    %v423 = vunpack.c.h.b16 %v329
    %v424 = vunpack.c.l.b16 %v330
    %v425 = vunpack.c.h.b16 %v330
    %v426 = vunpack.c.l.b16 %v331
    %v427 = vunpack.c.h.b16 %v331
    %v428 = vunpack.c.l.b16 %v332
    %v429 = vunpack.c.h.b16 %v332
    %v430 = vunpack.c.l.b16 %v333
    %v431 = vunpack.c.h.b16 %v333
    %v432 = vunpack.c.l.b16 %v334
    %v433 = vunpack.c.h.b16 %v334
    %v434 = vunpack.c.l.b16 %v335
    %v435 = vunpack.c.h.b16 %v335
    %v436 = vunpack.c.l.b16 %v336
    %v437 = vunpack.c.h.b16 %v336
    %v438 = vunpack.c.l.b16 %v337
    %v439 = vunpack.c.h.b16 %v337
    %v440 = vunpack.c.l.b16 %v338
    %v441 = vunpack.c.h.b16 %v338
    %v442 = vunpack.c.l.b16 %v339
    %v443 = vunpack.c.h.b16 %v339
    %v444 = vunpack.c.l.b16 %v340
    %v445 = vunpack.c.h.b16 %v340
    %v446 = vunpack.c.l.b16 %v341
    %v447 = vunpack.c.h.b16 %v341
    %v448 = vunpack.c.l.b16 %v342
    %v449 = vunpack.c.h.b16 %v342
    %v450 = vunpack.c.l.b16 %v343
    %v451 = vunpack.c.h.b16 %v343
    %v452 = vunpack.c.l.b16 %v344
    %v453 = vunpack.c.h.b16 %v344
    %v454 = vunpack.c.l.b16 %v345
    %v455 = vunpack.c.h.b16 %v345
    %v456 = vunpack.c.l.b16 %v346
    %v457 = vunpack.c.h.b16 %v346
    %v458 = vunpack.c.l.b16 %v347
    %v459 = vunpack.c.h.b16 %v347
    %v460 = vunpack.c.l.b16 %v348
    %v461 = vunpack.c.h.b16 %v348
    %v462 = vunpack.c.l.b16 %v349
    %v463 = vunpack.c.h.b16 %v349
    %v464 = vunpack.c.l.b16 %v350
    %v465 = vunpack.c.h.b16 %v350
    %v466 = vunpack.c.l.b16 %v351
    %v467 = vunpack.c.h.b16 %v351
    %v468 = vunpack.c.l.b16 %v352
    %v469 = vunpack.c.h.b16 %v352
    %v470 = vunpack.c.l.b16 %v353
    %v471 = vunpack.c.h.b16 %v353
    %v472 = vpack.c.b16 %v412, %v408
    %v473 = vpack.c.b16 %v413, %v409
    %v474 = vpack.c.b16 %v414, %v410
    %v475 = vpack.c.b16 %v415, %v411
    %v476 = vpack.c.b16 %v420, %v416
    %v477 = vpack.c.b16 %v421, %v417
    %v478 = vpack.c.b16 %v422, %v418
    %v479 = vpack.c.b16 %v423, %v419
    %v480 = vpack.c.b16 %v428, %v424
    %v481 = vpack.c.b16 %v429, %v425
    %v482 = vpack.c.b16 %v430, %v426
    %v483 = vpack.c.b16 %v431, %v427
    %v484 = vpack.c.b16 %v436, %v432
    %v485 = vpack.c.b16 %v437, %v433
    %v486 = vpack.c.b16 %v438, %v434
    %v487 = vpack.c.b16 %v439, %v435
    %v488 = vpack.c.b16 %v444, %v440
    %v489 = vpack.c.b16 %v445, %v441
    %v490 = vpack.c.b16 %v446, %v442
    %v491 = vpack.c.b16 %v447, %v443
    %v492 = vpack.c.b16 %v452, %v448
    %v493 = vpack.c.b16 %v453, %v449
    %v494 = vpack.c.b16 %v454, %v450
    %v495 = vpack.c.b16 %v455, %v451
    %v496 = vpack.c.b16 %v460, %v456
    %v497 = vpack.c.b16 %v461, %v457
    %v498 = vpack.c.b16 %v462, %v458
    %v499 = vpack.c.b16 %v463, %v459
    %v500 = vpack.c.b16 %v468, %v464
    %v501 = vpack.c.b16 %v469, %v465
    %v502 = vpack.c.b16 %v470, %v466
    %v503 = vpack.c.b16 %v471, %v467
    %536 = vmatprep.subr.bf16.mxu0 %v473
    %537 = vmatpush1.bf16.msra.mxu0 %v472
    %538 = vmatprep.subr.bf16.mxu0 %v477
    %539 = vmatpush1.bf16.msra.mxu0 %v476
    %540 = vmatprep.subr.bf16.mxu0 %v481
    %541 = vmatpush1.bf16.msra.mxu0 %v480
    %542 = vmatprep.subr.bf16.mxu0 %v485
    %543 = vmatpush1.bf16.msra.mxu0 %v484
    %544 = vmatprep.subr.bf16.mxu0 %v489
    %545 = vmatpush1.bf16.msra.mxu0 %v488
    %546 = vmatprep.subr.bf16.mxu0 %v493
    %547 = vmatpush1.bf16.msra.mxu0 %v492
    %548 = vmatprep.subr.bf16.mxu0 %v497
    %549 = vmatpush1.bf16.msra.mxu0 %v496
    %550 = vmatprep.subr.bf16.mxu0 %v501
    %551 = vmatpush1.bf16.msra.mxu0 %v500
    %552 = vmatprep.subr.bf16.mxu0 0
    %553 = vmatpush1.bf16.msra.mxu0 0
    %554 = vmatprep.subr.bf16.mxu0 0
    %555 = vmatpush1.bf16.msra.mxu0 0
    %556 = vmatprep.subr.bf16.mxu0 0
    %557 = vmatpush1.bf16.msra.mxu0 0
    %558 = vmatprep.subr.bf16.mxu0 0
    %559 = vmatpush1.bf16.msra.mxu0 0
    %560 = vmatprep.subr.bf16.mxu0 0
    %561 = vmatpush1.bf16.msra.mxu0 0
    %562 = vmatprep.subr.bf16.mxu0 0
    %563 = vmatpush1.bf16.msra.mxu0 0
    %564 = vmatprep.subr.bf16.mxu0 0
    %565 = vmatpush1.bf16.msra.mxu0 0
    %566 = vmatprep.subr.bf16.mxu0 0
    %567 = vmatpush1.bf16.msra.mxu0 0
    %568 = vmatprep.mubr.bf16.mxu0 0
    %569 = vmatmul.mubr.bf16.gmra.mrb[0].mxu0 %v314
    %v570 = vpop.f32.mrb[0].mxu0
    %v571 = vadd.f32 %v359, %v570
    %v572 = vpop.f32.mrb[0].mxu0
    %v573 = vadd.f32 %v363, %v572
    %v574 = vpop.f32.mrb[0].mxu0
    %v575 = vadd.f32 %v359, %v574
    %v576 = vpop.f32.mrb[0].mxu0
    %v577 = vadd.f32 %v363, %v576
    %578 = vmatprep.mubr.bf16.mxu0 0
    %579 = vmatmul.mubr.bf16.gmra.mrb[0].mxu0 %v315
    %v580 = vpop.f32.mrb[0].mxu0
    %v581 = vadd.f32 %v359, %v580
    %v582 = vpop.f32.mrb[0].mxu0
    %v583 = vadd.f32 %v363, %v582
    %v584 = vpop.f32.mrb[0].mxu0
    %v585 = vadd.f32 %v359, %v584
    %v586 = vpop.f32.mrb[0].mxu0
    %v587 = vadd.f32 %v363, %v586
    %588 = vmatprep.mubr.bf16.mxu0 0
    %589 = vmatmul.mubr.bf16.gmra.mrb[0].mxu0 %v316
    %v590 = vpop.f32.mrb[0].mxu0
    %v591 = vadd.f32 %v359, %v590
    %v592 = vpop.f32.mrb[0].mxu0
    %v593 = vadd.f32 %v363, %v592
    %v594 = vpop.f32.mrb[0].mxu0
    %v595 = vadd.f32 %v359, %v594
    %v596 = vpop.f32.mrb[0].mxu0
    %v597 = vadd.f32 %v363, %v596
    %598 = vmatprep.mubr.bf16.mxu0 0
    %599 = vmatmul.mubr.bf16.gmra.mrb[0].mxu0 %v317
    %v600 = vpop.f32.mrb[0].mxu0
    %v601 = vadd.f32 %v359, %v600
    %v602 = vpop.f32.mrb[0].mxu0
    %v603 = vadd.f32 %v363, %v602
    %v604 = vpop.f32.mrb[0].mxu0
    %v605 = vadd.f32 %v359, %v604
    %v606 = vpop.f32.mrb[0].mxu0
    %v607 = vadd.f32 %v363, %v606
    %608 = vmatprep.mubr.bf16.mxu0 0
    %609 = vmatmul.mubr.bf16.gmra.mrb[0].mxu0 %v318
    %v610 = vpop.f32.mrb[0].mxu0
    %v611 = vadd.f32 %v359, %v610
    %v612 = vpop.f32.mrb[0].mxu0
    %v613 = vadd.f32 %v363, %v612
    %v614 = vpop.f32.mrb[0].mxu0
    %v615 = vadd.f32 %v359, %v614
    %v616 = vpop.f32.mrb[0].mxu0
    %v617 = vadd.f32 %v363, %v616
    %618 = vmatprep.mubr.bf16.mxu0 0
    %619 = vmatmul.mubr.bf16.gmra.mrb[0].mxu0 %v319
    %v620 = vpop.f32.mrb[0].mxu0
    %v621 = vadd.f32 %v359, %v620
    %v622 = vpop.f32.mrb[0].mxu0
    %v623 = vadd.f32 %v363, %v622
    %v624 = vpop.f32.mrb[0].mxu0
    %v625 = vadd.f32 %v359, %v624
    %v626 = vpop.f32.mrb[0].mxu0
    %v627 = vadd.f32 %v363, %v626
    %628 = vmatprep.mubr.bf16.mxu0 0
    %629 = vmatmul.mubr.bf16.gmra.mrb[0].mxu0 %v320
    %v630 = vpop.f32.mrb[0].mxu0
    %v631 = vadd.f32 %v359, %v630
    %v632 = vpop.f32.mrb[0].mxu0
    %v633 = vadd.f32 %v363, %v632
    %v634 = vpop.f32.mrb[0].mxu0
    %v635 = vadd.f32 %v359, %v634
    %v636 = vpop.f32.mrb[0].mxu0
    %v637 = vadd.f32 %v363, %v636
    %638 = vmatprep.mubr.bf16.mxu0 0
    %639 = vmatmul.mubr.bf16.gmra.mrb[0].mxu0 %v321
    %v640 = vpop.f32.mrb[0].mxu0
    %v641 = vadd.f32 %v359, %v640
    %v642 = vpop.f32.mrb[0].mxu0
    %v643 = vadd.f32 %v363, %v642
    %v644 = vpop.f32.mrb[0].mxu0
    %v645 = vadd.f32 %v359, %v644
    %v646 = vpop.f32.mrb[0].mxu0
    %v647 = vadd.f32 %v363, %v646
    %648 = vdwg.mxu0
    %649 = vmatprep.subr.bf16.mxu0 %v475
    %650 = vmatpush1.bf16.msra.mxu0 %v474
    %651 = vmatprep.subr.bf16.mxu0 %v479
    %652 = vmatpush1.bf16.msra.mxu0 %v478
    %653 = vmatprep.subr.bf16.mxu0 %v483
    %654 = vmatpush1.bf16.msra.mxu0 %v482
    %655 = vmatprep.subr.bf16.mxu0 %v487
    %656 = vmatpush1.bf16.msra.mxu0 %v486
    %657 = vmatprep.subr.bf16.mxu0 %v491
    %658 = vmatpush1.bf16.msra.mxu0 %v490
    %659 = vmatprep.subr.bf16.mxu0 %v495
    %660 = vmatpush1.bf16.msra.mxu0 %v494
    %661 = vmatprep.subr.bf16.mxu0 %v499
    %662 = vmatpush1.bf16.msra.mxu0 %v498
    %663 = vmatprep.subr.bf16.mxu0 %v503
    %664 = vmatpush1.bf16.msra.mxu0 %v502
    %665 = vmatprep.subr.bf16.mxu0 0
    %666 = vmatpush1.bf16.msra.mxu0 0
    %667 = vmatprep.subr.bf16.mxu0 0
    %668 = vmatpush1.bf16.msra.mxu0 0
    %669 = vmatprep.subr.bf16.mxu0 0
    %670 = vmatpush1.bf16.msra.mxu0 0
    %671 = vmatprep.subr.bf16.mxu0 0
    %672 = vmatpush1.bf16.msra.mxu0 0
    %673 = vmatprep.subr.bf16.mxu0 0
    %674 = vmatpush1.bf16.msra.mxu0 0
    %675 = vmatprep.subr.bf16.mxu0 0
    %676 = vmatpush1.bf16.msra.mxu0 0
    %677 = vmatprep.subr.bf16.mxu0 0
    %678 = vmatpush1.bf16.msra.mxu0 0
    %679 = vmatprep.subr.bf16.mxu0 0
    %680 = vmatpush1.bf16.msra.mxu0 0
    %681 = vmatprep.mubr.bf16.mxu0 0
    %682 = vmatmul.mubr.bf16.gmra.mrb[0].mxu0 %v314
    %v683 = vpop.f32.mrb[0].mxu0
    %v684 = vadd.f32 %v367, %v683
    %v685 = vpop.f32.mrb[0].mxu0
    %v686 = vadd.f32 %v371, %v685
    %v687 = vpop.f32.mrb[0].mxu0
    %v688 = vadd.f32 %v367, %v687
    %v689 = vpop.f32.mrb[0].mxu0
    %v690 = vadd.f32 %v371, %v689
    %691 = vmatprep.mubr.bf16.mxu0 0
    %692 = vmatmul.mubr.bf16.gmra.mrb[0].mxu0 %v315
    %v693 = vpop.f32.mrb[0].mxu0
    %v694 = vadd.f32 %v367, %v693
    %v695 = vpop.f32.mrb[0].mxu0
    %v696 = vadd.f32 %v371, %v695
    %v697 = vpop.f32.mrb[0].mxu0
    %v698 = vadd.f32 %v367, %v697
    %v699 = vpop.f32.mrb[0].mxu0
    %v700 = vadd.f32 %v371, %v699
    %701 = vmatprep.mubr.bf16.mxu0 0
    %702 = vmatmul.mubr.bf16.gmra.mrb[0].mxu0 %v316
    %v703 = vpop.f32.mrb[0].mxu0
    %v704 = vadd.f32 %v367, %v703
    %v705 = vpop.f32.mrb[0].mxu0
    %v706 = vadd.f32 %v371, %v705
    %v707 = vpop.f32.mrb[0].mxu0
    %v708 = vadd.f32 %v367, %v707
    %v709 = vpop.f32.mrb[0].mxu0
    %v710 = vadd.f32 %v371, %v709
    %711 = vmatprep.mubr.bf16.mxu0 0
    %712 = vmatmul.mubr.bf16.gmra.mrb[0].mxu0 %v317
    %v713 = vpop.f32.mrb[0].mxu0
    %v714 = vadd.f32 %v367, %v713
    %v715 = vpop.f32.mrb[0].mxu0
    %v716 = vadd.f32 %v371, %v715
    %v717 = vpop.f32.mrb[0].mxu0
    %v718 = vadd.f32 %v367, %v717
    %v719 = vpop.f32.mrb[0].mxu0
    %v720 = vadd.f32 %v371, %v719
    %721 = vmatprep.mubr.bf16.mxu0 0
    %722 = vmatmul.mubr.bf16.gmra.mrb[0].mxu0 %v318
    %v723 = vpop.f32.mrb[0].mxu0
    %v724 = vadd.f32 %v367, %v723
    %v725 = vpop.f32.mrb[0].mxu0
    %v726 = vadd.f32 %v371, %v725
    %v727 = vpop.f32.mrb[0].mxu0
    %v728 = vadd.f32 %v367, %v727
    %v729 = vpop.f32.mrb[0].mxu0
    %v730 = vadd.f32 %v371, %v729
    %731 = vmatprep.mubr.bf16.mxu0 0
    %732 = vmatmul.mubr.bf16.gmra.mrb[0].mxu0 %v319
    %v733 = vpop.f32.mrb[0].mxu0
    %v734 = vadd.f32 %v367, %v733
    %v735 = vpop.f32.mrb[0].mxu0
    %v736 = vadd.f32 %v371, %v735
    %v737 = vpop.f32.mrb[0].mxu0
    %v738 = vadd.f32 %v367, %v737
    %v739 = vpop.f32.mrb[0].mxu0
    %v740 = vadd.f32 %v371, %v739
    %741 = vmatprep.mubr.bf16.mxu0 0
    %742 = vmatmul.mubr.bf16.gmra.mrb[0].mxu0 %v320
    %v743 = vpop.f32.mrb[0].mxu0
    %v744 = vadd.f32 %v367, %v743
    %v745 = vpop.f32.mrb[0].mxu0
    %v746 = vadd.f32 %v371, %v745
    %v747 = vpop.f32.mrb[0].mxu0
    %v748 = vadd.f32 %v367, %v747
    %v749 = vpop.f32.mrb[0].mxu0
    %v750 = vadd.f32 %v371, %v749
    %751 = vmatprep.mubr.bf16.mxu0 0
    %752 = vmatmul.mubr.bf16.gmra.mrb[0].mxu0 %v321
    %v753 = vpop.f32.mrb[0].mxu0
    %v754 = vadd.f32 %v367, %v753
    %v755 = vpop.f32.mrb[0].mxu0
    %v756 = vadd.f32 %v371, %v755
    %v757 = vpop.f32.mrb[0].mxu0
    %v758 = vadd.f32 %v367, %v757
    %v759 = vpop.f32.mrb[0].mxu0
    %v760 = vadd.f32 %v371, %v759
    %761 = vdwg.mxu0
    %v762 = vmul.f32 %v571, 0.5
    %v763 = vmul.f32 %v573, 0.5
    %v764 = vmul.f32 %v684, 0.5
    %v765 = vmul.f32 %v686, 0.5
    %v766 = vmul.f32 %v575, 0.5
    %v767 = vmul.f32 %v577, 0.5
    %v768 = vmul.f32 %v688, 0.5
    %v769 = vmul.f32 %v690, 0.5
    %v770 = vmul.f32 %v581, 0.5
    %v771 = vmul.f32 %v583, 0.5
    %v772 = vmul.f32 %v694, 0.5
    %v773 = vmul.f32 %v696, 0.5
    %v774 = vmul.f32 %v585, 0.5
    %v775 = vmul.f32 %v587, 0.5
    %v776 = vmul.f32 %v698, 0.5
    %v777 = vmul.f32 %v700, 0.5
    %v778 = vmul.f32 %v591, 0.5
    %v779 = vmul.f32 %v593, 0.5
    %v780 = vmul.f32 %v704, 0.5
    %v781 = vmul.f32 %v706, 0.5
    %v782 = vmul.f32 %v595, 0.5
    %v783 = vmul.f32 %v597, 0.5
    %v784 = vmul.f32 %v708, 0.5
    %v785 = vmul.f32 %v710, 0.5
    %v786 = vmul.f32 %v601, 0.5
    %v787 = vmul.f32 %v603, 0.5
    %v788 = vmul.f32 %v714, 0.5
    %v789 = vmul.f32 %v716, 0.5
    %v790 = vmul.f32 %v605, 0.5
    %v791 = vmul.f32 %v607, 0.5
    %v792 = vmul.f32 %v718, 0.5
    %v793 = vmul.f32 %v720, 0.5
    %v794 = vmul.f32 %v611, 0.5
    %v795 = vmul.f32 %v613, 0.5
    %v796 = vmul.f32 %v724, 0.5
    %v797 = vmul.f32 %v726, 0.5
    %v798 = vmul.f32 %v615, 0.5
    %v799 = vmul.f32 %v617, 0.5
    %v800 = vmul.f32 %v728, 0.5
    %v801 = vmul.f32 %v730, 0.5
    %v802 = vmul.f32 %v621, 0.5
    %v803 = vmul.f32 %v623, 0.5
    %v804 = vmul.f32 %v734, 0.5
    %v805 = vmul.f32 %v736, 0.5
    %v806 = vmul.f32 %v625, 0.5
    %v807 = vmul.f32 %v627, 0.5
    %v808 = vmul.f32 %v738, 0.5
    %v809 = vmul.f32 %v740, 0.5
    %v810 = vmul.f32 %v631, 0.5
    %v811 = vmul.f32 %v633, 0.5
    %v812 = vmul.f32 %v744, 0.5
    %v813 = vmul.f32 %v746, 0.5
    %v814 = vmul.f32 %v635, 0.5
    %v815 = vmul.f32 %v637, 0.5
    %v816 = vmul.f32 %v748, 0.5
    %v817 = vmul.f32 %v750, 0.5
    %v818 = vmul.f32 %v641, 0.5
    %v819 = vmul.f32 %v643, 0.5
    %v820 = vmul.f32 %v754, 0.5
    %v821 = vmul.f32 %v756, 0.5
    %v822 = vmul.f32 %v645, 0.5
    %v823 = vmul.f32 %v647, 0.5
    %v824 = vmul.f32 %v758, 0.5
    %v825 = vmul.f32 %v760, 0.5
    %v826 = vmul.f32 %v571, 0.70710677
    %v827 = vmul.f32 %v573, 0.70710677
    %v828 = vmul.f32 %v684, 0.70710677
    %v829 = vmul.f32 %v686, 0.70710677
    %v830 = vmul.f32 %v575, 0.70710677
    %v831 = vmul.f32 %v577, 0.70710677
    %v832 = vmul.f32 %v688, 0.70710677
    %v833 = vmul.f32 %v690, 0.70710677
    %v834 = vmul.f32 %v581, 0.70710677
    %v835 = vmul.f32 %v583, 0.70710677
    %v836 = vmul.f32 %v694, 0.70710677
    %v837 = vmul.f32 %v696, 0.70710677
    %v838 = vmul.f32 %v585, 0.70710677
    %v839 = vmul.f32 %v587, 0.70710677
    %v840 = vmul.f32 %v698, 0.70710677
    %v841 = vmul.f32 %v700, 0.70710677
    %v842 = vmul.f32 %v591, 0.70710677
    %v843 = vmul.f32 %v593, 0.70710677
    %v844 = vmul.f32 %v704, 0.70710677
    %v845 = vmul.f32 %v706, 0.70710677
    %v846 = vmul.f32 %v595, 0.70710677
    %v847 = vmul.f32 %v597, 0.70710677
    %v848 = vmul.f32 %v708, 0.70710677
    %v849 = vmul.f32 %v710, 0.70710677
    %v850 = vmul.f32 %v601, 0.70710677
    %v851 = vmul.f32 %v603, 0.70710677
    %v852 = vmul.f32 %v714, 0.70710677
    %v853 = vmul.f32 %v716, 0.70710677
    %v854 = vmul.f32 %v605, 0.70710677
    %v855 = vmul.f32 %v607, 0.70710677
    %v856 = vmul.f32 %v718, 0.70710677
    %v857 = vmul.f32 %v720, 0.70710677
    %v858 = vmul.f32 %v611, 0.70710677
    %v859 = vmul.f32 %v613, 0.70710677
    %v860 = vmul.f32 %v724, 0.70710677
    %v861 = vmul.f32 %v726, 0.70710677
    %v862 = vmul.f32 %v615, 0.70710677
    %v863 = vmul.f32 %v617, 0.70710677
    %v864 = vmul.f32 %v728, 0.70710677
    %v865 = vmul.f32 %v730, 0.70710677
    %v866 = vmul.f32 %v621, 0.70710677
    %v867 = vmul.f32 %v623, 0.70710677
    %v868 = vmul.f32 %v734, 0.70710677
    %v869 = vmul.f32 %v736, 0.70710677
    %v870 = vmul.f32 %v625, 0.70710677
    %v871 = vmul.f32 %v627, 0.70710677
    %v872 = vmul.f32 %v738, 0.70710677
    %v873 = vmul.f32 %v740, 0.70710677
    %v874 = vmul.f32 %v631, 0.70710677
    %v875 = vmul.f32 %v633, 0.70710677
    %v876 = vmul.f32 %v744, 0.70710677
    %v877 = vmul.f32 %v746, 0.70710677
    %v878 = vmul.f32 %v635, 0.70710677
    %v879 = vmul.f32 %v637, 0.70710677
    %v880 = vmul.f32 %v748, 0.70710677
    %v881 = vmul.f32 %v750, 0.70710677
    %v882 = vmul.f32 %v641, 0.70710677
    %v883 = vmul.f32 %v643, 0.70710677
    %v884 = vmul.f32 %v754, 0.70710677
    %v885 = vmul.f32 %v756, 0.70710677
    %v886 = vmul.f32 %v645, 0.70710677
    %v887 = vmul.f32 %v647, 0.70710677
    %v888 = vmul.f32 %v758, 0.70710677
    %v889 = vmul.f32 %v760, 0.70710677
    %v890 = verf.f32.pop %v826
    %v891 = verf.f32.pop %v827
    %v892 = verf.f32.pop %v828
    %v893 = verf.f32.pop %v829
    %v894 = verf.f32.pop %v830
    %v895 = verf.f32.pop %v831
    %v896 = verf.f32.pop %v832
    %v897 = verf.f32.pop %v833
    %v898 = verf.f32.pop %v834
    %v899 = verf.f32.pop %v835
    %v900 = verf.f32.pop %v836
    %v901 = verf.f32.pop %v837
    %v902 = verf.f32.pop %v838
    %v903 = verf.f32.pop %v839
    %v904 = verf.f32.pop %v840
    %v905 = verf.f32.pop %v841
    %v906 = verf.f32.pop %v842
    %v907 = verf.f32.pop %v843
    %v908 = verf.f32.pop %v844
    %v909 = verf.f32.pop %v845
    %v910 = verf.f32.pop %v846
    %v911 = verf.f32.pop %v847
    %v912 = verf.f32.pop %v848
    %v913 = verf.f32.pop %v849
    %v914 = verf.f32.pop %v850
    %v915 = verf.f32.pop %v851
    %v916 = verf.f32.pop %v852
    %v917 = verf.f32.pop %v853
    %v918 = verf.f32.pop %v854
    %v919 = verf.f32.pop %v855
    %v920 = verf.f32.pop %v856
    %v921 = verf.f32.pop %v857
    %v922 = verf.f32.pop %v858
    %v923 = verf.f32.pop %v859
    %v924 = verf.f32.pop %v860
    %v925 = verf.f32.pop %v861
    %v926 = verf.f32.pop %v862
    %v927 = verf.f32.pop %v863
    %v928 = verf.f32.pop %v864
    %v929 = verf.f32.pop %v865
    %v930 = verf.f32.pop %v866
    %v931 = verf.f32.pop %v867
    %v932 = verf.f32.pop %v868
    %v933 = verf.f32.pop %v869
    %v934 = verf.f32.pop %v870
    %v935 = verf.f32.pop %v871
    %v936 = verf.f32.pop %v872
    %v937 = verf.f32.pop %v873
    %v938 = verf.f32.pop %v874
    %v939 = verf.f32.pop %v875
    %v940 = verf.f32.pop %v876
    %v941 = verf.f32.pop %v877
    %v942 = verf.f32.pop %v878
    %v943 = verf.f32.pop %v879
    %v944 = verf.f32.pop %v880
    %v945 = verf.f32.pop %v881
    %v946 = verf.f32.pop %v882
    %v947 = verf.f32.pop %v883
    %v948 = verf.f32.pop %v884
    %v949 = verf.f32.pop %v885
    %v950 = verf.f32.pop %v886
    %v951 = verf.f32.pop %v887
    %v952 = verf.f32.pop %v888
    %v953 = verf.f32.pop %v889
    %v954 = vadd.f32 %v890, 1.0
    %v955 = vadd.f32 %v891, 1.0
    %v956 = vadd.f32 %v892, 1.0
    %v957 = vadd.f32 %v893, 1.0
    %v958 = vadd.f32 %v894, 1.0
    %v959 = vadd.f32 %v895, 1.0
    %v960 = vadd.f32 %v896, 1.0
    %v961 = vadd.f32 %v897, 1.0
    %v962 = vadd.f32 %v898, 1.0
    %v963 = vadd.f32 %v899, 1.0
    %v964 = vadd.f32 %v900, 1.0
    %v965 = vadd.f32 %v901, 1.0
    %v966 = vadd.f32 %v902, 1.0
    %v967 = vadd.f32 %v903, 1.0
    %v968 = vadd.f32 %v904, 1.0
    %v969 = vadd.f32 %v905, 1.0
    %v970 = vadd.f32 %v906, 1.0
    %v971 = vadd.f32 %v907, 1.0
    %v972 = vadd.f32 %v908, 1.0
    %v973 = vadd.f32 %v909, 1.0
    %v974 = vadd.f32 %v910, 1.0
    %v975 = vadd.f32 %v911, 1.0
    %v976 = vadd.f32 %v912, 1.0
    %v977 = vadd.f32 %v913, 1.0
    %v978 = vadd.f32 %v914, 1.0
    %v979 = vadd.f32 %v915, 1.0
    %v980 = vadd.f32 %v916, 1.0
    %v981 = vadd.f32 %v917, 1.0
    %v982 = vadd.f32 %v918, 1.0
    %v983 = vadd.f32 %v919, 1.0
    %v984 = vadd.f32 %v920, 1.0
    %v985 = vadd.f32 %v921, 1.0
    %v986 = vadd.f32 %v922, 1.0
    %v987 = vadd.f32 %v923, 1.0
    %v988 = vadd.f32 %v924, 1.0
    %v989 = vadd.f32 %v925, 1.0
    %v990 = vadd.f32 %v926, 1.0
    %v991 = vadd.f32 %v927, 1.0
    %v992 = vadd.f32 %v928, 1.0
    %v993 = vadd.f32 %v929, 1.0
    %v994 = vadd.f32 %v930, 1.0
    %v995 = vadd.f32 %v931, 1.0
    %v996 = vadd.f32 %v932, 1.0
    %v997 = vadd.f32 %v933, 1.0
    %v998 = vadd.f32 %v934, 1.0
    %v999 = vadd.f32 %v935, 1.0
    %v1000 = vadd.f32 %v936, 1.0
    %v1001 = vadd.f32 %v937, 1.0
    %v1002 = vadd.f32 %v938, 1.0
    %v1003 = vadd.f32 %v939, 1.0
    %v1004 = vadd.f32 %v940, 1.0
    %v1005 = vadd.f32 %v941, 1.0
    %v1006 = vadd.f32 %v942, 1.0
    %v1007 = vadd.f32 %v943, 1.0
    %v1008 = vadd.f32 %v944, 1.0
    %v1009 = vadd.f32 %v945, 1.0
    %v1010 = vadd.f32 %v946, 1.0
    %v1011 = vadd.f32 %v947, 1.0
    %v1012 = vadd.f32 %v948, 1.0
    %v1013 = vadd.f32 %v949, 1.0
    %v1014 = vadd.f32 %v950, 1.0
    %v1015 = vadd.f32 %v951, 1.0
    %v1016 = vadd.f32 %v952, 1.0
    %v1017 = vadd.f32 %v953, 1.0
    %v1018 = vmul.f32 %v762, %v954
    %v1019 = vmul.f32 %v763, %v955
    %v1020 = vmul.f32 %v764, %v956
    %v1021 = vmul.f32 %v765, %v957
    %v1022 = vmul.f32 %v766, %v958
    %v1023 = vmul.f32 %v767, %v959
    %v1024 = vmul.f32 %v768, %v960
    %v1025 = vmul.f32 %v769, %v961
    %v1026 = vmul.f32 %v770, %v962
    %v1027 = vmul.f32 %v771, %v963
    %v1028 = vmul.f32 %v772, %v964
    %v1029 = vmul.f32 %v773, %v965
    %v1030 = vmul.f32 %v774, %v966
    %v1031 = vmul.f32 %v775, %v967
    %v1032 = vmul.f32 %v776, %v968
    %v1033 = vmul.f32 %v777, %v969
    %v1034 = vmul.f32 %v778, %v970
    %v1035 = vmul.f32 %v779, %v971
    %v1036 = vmul.f32 %v780, %v972
    %v1037 = vmul.f32 %v781, %v973
    %v1038 = vmul.f32 %v782, %v974
    %v1039 = vmul.f32 %v783, %v975
    %v1040 = vmul.f32 %v784, %v976
    %v1041 = vmul.f32 %v785, %v977
    %v1042 = vmul.f32 %v786, %v978
    %v1043 = vmul.f32 %v787, %v979
    %v1044 = vmul.f32 %v788, %v980
    %v1045 = vmul.f32 %v789, %v981
    %v1046 = vmul.f32 %v790, %v982
    %v1047 = vmul.f32 %v791, %v983
    %v1048 = vmul.f32 %v792, %v984
    %v1049 = vmul.f32 %v793, %v985
    %v1050 = vmul.f32 %v794, %v986
    %v1051 = vmul.f32 %v795, %v987
    %v1052 = vmul.f32 %v796, %v988
    %v1053 = vmul.f32 %v797, %v989
    %v1054 = vmul.f32 %v798, %v990
    %v1055 = vmul.f32 %v799, %v991
    %v1056 = vmul.f32 %v800, %v992
    %v1057 = vmul.f32 %v801, %v993
    %v1058 = vmul.f32 %v802, %v994
    %v1059 = vmul.f32 %v803, %v995
    %v1060 = vmul.f32 %v804, %v996
    %v1061 = vmul.f32 %v805, %v997
    %v1062 = vmul.f32 %v806, %v998
    %v1063 = vmul.f32 %v807, %v999
    %v1064 = vmul.f32 %v808, %v1000
    %v1065 = vmul.f32 %v809, %v1001
    %v1066 = vmul.f32 %v810, %v1002
    %v1067 = vmul.f32 %v811, %v1003
    %v1068 = vmul.f32 %v812, %v1004
    %v1069 = vmul.f32 %v813, %v1005
    %v1070 = vmul.f32 %v814, %v1006
    %v1071 = vmul.f32 %v815, %v1007
    %v1072 = vmul.f32 %v816, %v1008
    %v1073 = vmul.f32 %v817, %v1009
    %v1074 = vmul.f32 %v818, %v1010
    %v1075 = vmul.f32 %v819, %v1011
    %v1076 = vmul.f32 %v820, %v1012
    %v1077 = vmul.f32 %v821, %v1013
    %v1078 = vmul.f32 %v822, %v1014
    %v1079 = vmul.f32 %v823, %v1015
    %v1080 = vmul.f32 %v824, %v1016
    %v1081 = vmul.f32 %v825, %v1017
    %v1082 = vld [vmem:[%s5] sm:$0xf]
    %v1083 = vld [vmem:[%s6] sm:$0xf]
    %v1084 = vadd.f32 %v1018, %v1019
    %v1085 = vadd.f32 %v1084, %v1020
    %v1086 = vadd.f32 %v1085, %v1021
    %1087 = vadd.xlane.f32.xlu0 %v1086
    %v1088 = vpop.xlane.xlu0 %1087
    %v1089 = vadd.f32 %v1022, %v1023
    %v1090 = vadd.f32 %v1089, %v1024
    %v1091 = vadd.f32 %v1090, %v1025
    %1092 = vadd.xlane.f32.xlu0 %v1091
    %v1093 = vpop.xlane.xlu0 %1092
    %v1094 = vadd.f32 %v1026, %v1027
    %v1095 = vadd.f32 %v1094, %v1028
    %v1096 = vadd.f32 %v1095, %v1029
    %1097 = vadd.xlane.f32.xlu0 %v1096
    %v1098 = vpop.xlane.xlu0 %1097
    %v1099 = vadd.f32 %v1030, %v1031
    %v1100 = vadd.f32 %v1099, %v1032
    %v1101 = vadd.f32 %v1100, %v1033
    %1102 = vadd.xlane.f32.xlu0 %v1101
    %v1103 = vpop.xlane.xlu0 %1102
    %v1104 = vadd.f32 %v1034, %v1035
    %v1105 = vadd.f32 %v1104, %v1036
    %v1106 = vadd.f32 %v1105, %v1037
    %1107 = vadd.xlane.f32.xlu0 %v1106
    %v1108 = vpop.xlane.xlu0 %1107
    %v1109 = vadd.f32 %v1038, %v1039
    %v1110 = vadd.f32 %v1109, %v1040
    %v1111 = vadd.f32 %v1110, %v1041
    %1112 = vadd.xlane.f32.xlu0 %v1111
    %v1113 = vpop.xlane.xlu0 %1112
    %v1114 = vadd.f32 %v1042, %v1043
    %v1115 = vadd.f32 %v1114, %v1044
    %v1116 = vadd.f32 %v1115, %v1045
    %1117 = vadd.xlane.f32.xlu0 %v1116
    %v1118 = vpop.xlane.xlu0 %1117
    %v1119 = vadd.f32 %v1046, %v1047
    %v1120 = vadd.f32 %v1119, %v1048
    %v1121 = vadd.f32 %v1120, %v1049
    %1122 = vadd.xlane.f32.xlu0 %v1121
    %v1123 = vpop.xlane.xlu0 %1122
    %v1124 = vadd.f32 %v1050, %v1051
    %v1125 = vadd.f32 %v1124, %v1052
    %v1126 = vadd.f32 %v1125, %v1053
    %1127 = vadd.xlane.f32.xlu0 %v1126
    %v1128 = vpop.xlane.xlu0 %1127
    %v1129 = vadd.f32 %v1054, %v1055
    %v1130 = vadd.f32 %v1129, %v1056
    %v1131 = vadd.f32 %v1130, %v1057
    %1132 = vadd.xlane.f32.xlu0 %v1131
    %v1133 = vpop.xlane.xlu0 %1132
    %v1134 = vadd.f32 %v1058, %v1059
    %v1135 = vadd.f32 %v1134, %v1060
    %v1136 = vadd.f32 %v1135, %v1061
    %1137 = vadd.xlane.f32.xlu0 %v1136
    %v1138 = vpop.xlane.xlu0 %1137
    %v1139 = vadd.f32 %v1062, %v1063
    %v1140 = vadd.f32 %v1139, %v1064
    %v1141 = vadd.f32 %v1140, %v1065
    %1142 = vadd.xlane.f32.xlu0 %v1141
    %v1143 = vpop.xlane.xlu0 %1142
    %v1144 = vadd.f32 %v1066, %v1067
    %v1145 = vadd.f32 %v1144, %v1068
    %v1146 = vadd.f32 %v1145, %v1069
    %1147 = vadd.xlane.f32.xlu0 %v1146
    %v1148 = vpop.xlane.xlu0 %1147
    %v1149 = vadd.f32 %v1070, %v1071
    %v1150 = vadd.f32 %v1149, %v1072
    %v1151 = vadd.f32 %v1150, %v1073
    %1152 = vadd.xlane.f32.xlu0 %v1151
    %v1153 = vpop.xlane.xlu0 %1152
    %v1154 = vadd.f32 %v1074, %v1075
    %v1155 = vadd.f32 %v1154, %v1076
    %v1156 = vadd.f32 %v1155, %v1077
    %1157 = vadd.xlane.f32.xlu0 %v1156
    %v1158 = vpop.xlane.xlu0 %1157
    %v1159 = vadd.f32 %v1078, %v1079
    %v1160 = vadd.f32 %v1159, %v1080
    %v1161 = vadd.f32 %v1160, %v1081
    %1162 = vadd.xlane.f32.xlu0 %v1161
    %v1163 = vpop.xlane.xlu0 %1162
    %v1164 = vrcp.pop 512.0
    %v1165 = vmul.f32 %v1088, %v1164
    %v1166 = vmul.f32 %v1093, %v1164
    %v1167 = vmul.f32 %v1098, %v1164
    %v1168 = vmul.f32 %v1103, %v1164
    %v1169 = vmul.f32 %v1108, %v1164
    %v1170 = vmul.f32 %v1113, %v1164
    %v1171 = vmul.f32 %v1118, %v1164
    %v1172 = vmul.f32 %v1123, %v1164
    %v1173 = vmul.f32 %v1128, %v1164
    %v1174 = vmul.f32 %v1133, %v1164
    %v1175 = vmul.f32 %v1138, %v1164
    %v1176 = vmul.f32 %v1143, %v1164
    %v1177 = vmul.f32 %v1148, %v1164
    %v1178 = vmul.f32 %v1153, %v1164
    %v1179 = vmul.f32 %v1158, %v1164
    %v1180 = vmul.f32 %v1163, %v1164
    %v1181 = vsub.f32 %v1018, %v1165
    %v1182 = vsub.f32 %v1019, %v1165
    %v1183 = vsub.f32 %v1020, %v1165
    %v1184 = vsub.f32 %v1021, %v1165
    %v1185 = vsub.f32 %v1022, %v1166
    %v1186 = vsub.f32 %v1023, %v1166
    %v1187 = vsub.f32 %v1024, %v1166
    %v1188 = vsub.f32 %v1025, %v1166
    %v1189 = vsub.f32 %v1026, %v1167
    %v1190 = vsub.f32 %v1027, %v1167
    %v1191 = vsub.f32 %v1028, %v1167
    %v1192 = vsub.f32 %v1029, %v1167
    %v1193 = vsub.f32 %v1030, %v1168
    %v1194 = vsub.f32 %v1031, %v1168
    %v1195 = vsub.f32 %v1032, %v1168
    %v1196 = vsub.f32 %v1033, %v1168
    %v1197 = vsub.f32 %v1034, %v1169
    %v1198 = vsub.f32 %v1035, %v1169
    %v1199 = vsub.f32 %v1036, %v1169
    %v1200 = vsub.f32 %v1037, %v1169
    %v1201 = vsub.f32 %v1038, %v1170
    %v1202 = vsub.f32 %v1039, %v1170
    %v1203 = vsub.f32 %v1040, %v1170
    %v1204 = vsub.f32 %v1041, %v1170
    %v1205 = vsub.f32 %v1042, %v1171
    %v1206 = vsub.f32 %v1043, %v1171
    %v1207 = vsub.f32 %v1044, %v1171
    %v1208 = vsub.f32 %v1045, %v1171
    %v1209 = vsub.f32 %v1046, %v1172
    %v1210 = vsub.f32 %v1047, %v1172
    %v1211 = vsub.f32 %v1048, %v1172
    %v1212 = vsub.f32 %v1049, %v1172
    %v1213 = vsub.f32 %v1050, %v1173
    %v1214 = vsub.f32 %v1051, %v1173
    %v1215 = vsub.f32 %v1052, %v1173
    %v1216 = vsub.f32 %v1053, %v1173
    %v1217 = vsub.f32 %v1054, %v1174
    %v1218 = vsub.f32 %v1055, %v1174
    %v1219 = vsub.f32 %v1056, %v1174
    %v1220 = vsub.f32 %v1057, %v1174
    %v1221 = vsub.f32 %v1058, %v1175
    %v1222 = vsub.f32 %v1059, %v1175
    %v1223 = vsub.f32 %v1060, %v1175
    %v1224 = vsub.f32 %v1061, %v1175
    %v1225 = vsub.f32 %v1062, %v1176
    %v1226 = vsub.f32 %v1063, %v1176
    %v1227 = vsub.f32 %v1064, %v1176
    %v1228 = vsub.f32 %v1065, %v1176
    %v1229 = vsub.f32 %v1066, %v1177
    %v1230 = vsub.f32 %v1067, %v1177
    %v1231 = vsub.f32 %v1068, %v1177
    %v1232 = vsub.f32 %v1069, %v1177
    %v1233 = vsub.f32 %v1070, %v1178
    %v1234 = vsub.f32 %v1071, %v1178
    %v1235 = vsub.f32 %v1072, %v1178
    %v1236 = vsub.f32 %v1073, %v1178
    %v1237 = vsub.f32 %v1074, %v1179
    %v1238 = vsub.f32 %v1075, %v1179
    %v1239 = vsub.f32 %v1076, %v1179
    %v1240 = vsub.f32 %v1077, %v1179
    %v1241 = vsub.f32 %v1078, %v1180
    %v1242 = vsub.f32 %v1079, %v1180
    %v1243 = vsub.f32 %v1080, %v1180
    %v1244 = vsub.f32 %v1081, %v1180
    %v1245 = vmul.f32 %v1181, %v1181
    %v1246 = vmul.f32 %v1182, %v1182
    %v1247 = vmul.f32 %v1183, %v1183
    %v1248 = vmul.f32 %v1184, %v1184
    %v1249 = vmul.f32 %v1185, %v1185
    %v1250 = vmul.f32 %v1186, %v1186
    %v1251 = vmul.f32 %v1187, %v1187
    %v1252 = vmul.f32 %v1188, %v1188
    %v1253 = vmul.f32 %v1189, %v1189
    %v1254 = vmul.f32 %v1190, %v1190
    %v1255 = vmul.f32 %v1191, %v1191
    %v1256 = vmul.f32 %v1192, %v1192
    %v1257 = vmul.f32 %v1193, %v1193
    %v1258 = vmul.f32 %v1194, %v1194
    %v1259 = vmul.f32 %v1195, %v1195
    %v1260 = vmul.f32 %v1196, %v1196
    %v1261 = vmul.f32 %v1197, %v1197
    %v1262 = vmul.f32 %v1198, %v1198
    %v1263 = vmul.f32 %v1199, %v1199
    %v1264 = vmul.f32 %v1200, %v1200
    %v1265 = vmul.f32 %v1201, %v1201
    %v1266 = vmul.f32 %v1202, %v1202
    %v1267 = vmul.f32 %v1203, %v1203
    %v1268 = vmul.f32 %v1204, %v1204
    %v1269 = vmul.f32 %v1205, %v1205
    %v1270 = vmul.f32 %v1206, %v1206
    %v1271 = vmul.f32 %v1207, %v1207
    %v1272 = vmul.f32 %v1208, %v1208
    %v1273 = vmul.f32 %v1209, %v1209
    %v1274 = vmul.f32 %v1210, %v1210
    %v1275 = vmul.f32 %v1211, %v1211
    %v1276 = vmul.f32 %v1212, %v1212
    %v1277 = vmul.f32 %v1213, %v1213
    %v1278 = vmul.f32 %v1214, %v1214
    %v1279 = vmul.f32 %v1215, %v1215
    %v1280 = vmul.f32 %v1216, %v1216
    %v1281 = vmul.f32 %v1217, %v1217
    %v1282 = vmul.f32 %v1218, %v1218
    %v1283 = vmul.f32 %v1219, %v1219
    %v1284 = vmul.f32 %v1220, %v1220
    %v1285 = vmul.f32 %v1221, %v1221
    %v1286 = vmul.f32 %v1222, %v1222
    %v1287 = vmul.f32 %v1223, %v1223
    %v1288 = vmul.f32 %v1224, %v1224
    %v1289 = vmul.f32 %v1225, %v1225
    %v1290 = vmul.f32 %v1226, %v1226
    %v1291 = vmul.f32 %v1227, %v1227
    %v1292 = vmul.f32 %v1228, %v1228
    %v1293 = vmul.f32 %v1229, %v1229
    %v1294 = vmul.f32 %v1230, %v1230
    %v1295 = vmul.f32 %v1231, %v1231
    %v1296 = vmul.f32 %v1232, %v1232
    %v1297 = vmul.f32 %v1233, %v1233
    %v1298 = vmul.f32 %v1234, %v1234
    %v1299 = vmul.f32 %v1235, %v1235
    %v1300 = vmul.f32 %v1236, %v1236
    %v1301 = vmul.f32 %v1237, %v1237
    %v1302 = vmul.f32 %v1238, %v1238
    %v1303 = vmul.f32 %v1239, %v1239
    %v1304 = vmul.f32 %v1240, %v1240
    %v1305 = vmul.f32 %v1241, %v1241
    %v1306 = vmul.f32 %v1242, %v1242
    %v1307 = vmul.f32 %v1243, %v1243
    %v1308 = vmul.f32 %v1244, %v1244
    %v1309 = vadd.f32 %v1245, %v1246
    %v1310 = vadd.f32 %v1309, %v1247
    %v1311 = vadd.f32 %v1310, %v1248
    %1312 = vadd.xlane.f32.xlu0 %v1311
    %v1313 = vpop.xlane.xlu0 %1312
    %v1314 = vadd.f32 %v1249, %v1250
    %v1315 = vadd.f32 %v1314, %v1251
    %v1316 = vadd.f32 %v1315, %v1252
    %1317 = vadd.xlane.f32.xlu0 %v1316
    %v1318 = vpop.xlane.xlu0 %1317
    %v1319 = vadd.f32 %v1253, %v1254
    %v1320 = vadd.f32 %v1319, %v1255
    %v1321 = vadd.f32 %v1320, %v1256
    %1322 = vadd.xlane.f32.xlu0 %v1321
    %v1323 = vpop.xlane.xlu0 %1322
    %v1324 = vadd.f32 %v1257, %v1258
    %v1325 = vadd.f32 %v1324, %v1259
    %v1326 = vadd.f32 %v1325, %v1260
    %1327 = vadd.xlane.f32.xlu0 %v1326
    %v1328 = vpop.xlane.xlu0 %1327
    %v1329 = vadd.f32 %v1261, %v1262
    %v1330 = vadd.f32 %v1329, %v1263
    %v1331 = vadd.f32 %v1330, %v1264
    %1332 = vadd.xlane.f32.xlu0 %v1331
    %v1333 = vpop.xlane.xlu0 %1332
    %v1334 = vadd.f32 %v1265, %v1266
    %v1335 = vadd.f32 %v1334, %v1267
    %v1336 = vadd.f32 %v1335, %v1268
    %1337 = vadd.xlane.f32.xlu0 %v1336
    %v1338 = vpop.xlane.xlu0 %1337
    %v1339 = vadd.f32 %v1269, %v1270
    %v1340 = vadd.f32 %v1339, %v1271
    %v1341 = vadd.f32 %v1340, %v1272
    %1342 = vadd.xlane.f32.xlu0 %v1341
    %v1343 = vpop.xlane.xlu0 %1342
    %v1344 = vadd.f32 %v1273, %v1274
    %v1345 = vadd.f32 %v1344, %v1275
    %v1346 = vadd.f32 %v1345, %v1276
    %1347 = vadd.xlane.f32.xlu0 %v1346
    %v1348 = vpop.xlane.xlu0 %1347
    %v1349 = vadd.f32 %v1277, %v1278
    %v1350 = vadd.f32 %v1349, %v1279
    %v1351 = vadd.f32 %v1350, %v1280
    %1352 = vadd.xlane.f32.xlu0 %v1351
    %v1353 = vpop.xlane.xlu0 %1352
    %v1354 = vadd.f32 %v1281, %v1282
    %v1355 = vadd.f32 %v1354, %v1283
    %v1356 = vadd.f32 %v1355, %v1284
    %1357 = vadd.xlane.f32.xlu0 %v1356
    %v1358 = vpop.xlane.xlu0 %1357
    %v1359 = vadd.f32 %v1285, %v1286
    %v1360 = vadd.f32 %v1359, %v1287
    %v1361 = vadd.f32 %v1360, %v1288
    %1362 = vadd.xlane.f32.xlu0 %v1361
    %v1363 = vpop.xlane.xlu0 %1362
    %v1364 = vadd.f32 %v1289, %v1290
    %v1365 = vadd.f32 %v1364, %v1291
    %v1366 = vadd.f32 %v1365, %v1292
    %1367 = vadd.xlane.f32.xlu0 %v1366
    %v1368 = vpop.xlane.xlu0 %1367
    %v1369 = vadd.f32 %v1293, %v1294
    %v1370 = vadd.f32 %v1369, %v1295
    %v1371 = vadd.f32 %v1370, %v1296
    %1372 = vadd.xlane.f32.xlu0 %v1371
    %v1373 = vpop.xlane.xlu0 %1372
    %v1374 = vadd.f32 %v1297, %v1298
    %v1375 = vadd.f32 %v1374, %v1299
    %v1376 = vadd.f32 %v1375, %v1300
    %1377 = vadd.xlane.f32.xlu0 %v1376
    %v1378 = vpop.xlane.xlu0 %1377
    %v1379 = vadd.f32 %v1301, %v1302
    %v1380 = vadd.f32 %v1379, %v1303
    %v1381 = vadd.f32 %v1380, %v1304
    %1382 = vadd.xlane.f32.xlu0 %v1381
    %v1383 = vpop.xlane.xlu0 %1382
    %v1384 = vadd.f32 %v1305, %v1306
    %v1385 = vadd.f32 %v1384, %v1307
    %v1386 = vadd.f32 %v1385, %v1308
    %1387 = vadd.xlane.f32.xlu0 %v1386
    %v1388 = vpop.xlane.xlu0 %1387
    %v1389 = vmul.f32 %v1313, %v1164
    %v1390 = vmul.f32 %v1318, %v1164
    %v1391 = vmul.f32 %v1323, %v1164
    %v1392 = vmul.f32 %v1328, %v1164
    %v1393 = vmul.f32 %v1333, %v1164
    %v1394 = vmul.f32 %v1338, %v1164
    %v1395 = vmul.f32 %v1343, %v1164
    %v1396 = vmul.f32 %v1348, %v1164
    %v1397 = vmul.f32 %v1353, %v1164
    %v1398 = vmul.f32 %v1358, %v1164
    %v1399 = vmul.f32 %v1363, %v1164
    %v1400 = vmul.f32 %v1368, %v1164
    %v1401 = vmul.f32 %v1373, %v1164
    %v1402 = vmul.f32 %v1378, %v1164
    %v1403 = vmul.f32 %v1383, %v1164
    %v1404 = vmul.f32 %v1388, %v1164
    %v1405 = vadd.f32 %v1389, 1e-05
    %v1406 = vadd.f32 %v1390, 1e-05
    %v1407 = vadd.f32 %v1391, 1e-05
    %v1408 = vadd.f32 %v1392, 1e-05
    %v1409 = vadd.f32 %v1393, 1e-05
    %v1410 = vadd.f32 %v1394, 1e-05
    %v1411 = vadd.f32 %v1395, 1e-05
    %v1412 = vadd.f32 %v1396, 1e-05
    %v1413 = vadd.f32 %v1397, 1e-05
    %v1414 = vadd.f32 %v1398, 1e-05
    %v1415 = vadd.f32 %v1399, 1e-05
    %v1416 = vadd.f32 %v1400, 1e-05
    %v1417 = vadd.f32 %v1401, 1e-05
    %v1418 = vadd.f32 %v1402, 1e-05
    %v1419 = vadd.f32 %v1403, 1e-05
    %v1420 = vadd.f32 %v1404, 1e-05
    %v1421 = vrsqrt.pop %v1405
    %v1422 = vrsqrt.pop %v1406
    %v1423 = vrsqrt.pop %v1407
    %v1424 = vrsqrt.pop %v1408
    %v1425 = vrsqrt.pop %v1409
    %v1426 = vrsqrt.pop %v1410
    %v1427 = vrsqrt.pop %v1411
    %v1428 = vrsqrt.pop %v1412
    %v1429 = vrsqrt.pop %v1413
    %v1430 = vrsqrt.pop %v1414
    %v1431 = vrsqrt.pop %v1415
    %v1432 = vrsqrt.pop %v1416
    %v1433 = vrsqrt.pop %v1417
    %v1434 = vrsqrt.pop %v1418
    %v1435 = vrsqrt.pop %v1419
    %v1436 = vrsqrt.pop %v1420
    %v1437 = vmul.f32 %v1181, %v1421
    %v1438 = vmul.f32 %v1182, %v1421
    %v1439 = vmul.f32 %v1183, %v1421
    %v1440 = vmul.f32 %v1184, %v1421
    %v1441 = vmul.f32 %v1185, %v1422
    %v1442 = vmul.f32 %v1186, %v1422
    %v1443 = vmul.f32 %v1187, %v1422
    %v1444 = vmul.f32 %v1188, %v1422
    %v1445 = vmul.f32 %v1189, %v1423
    %v1446 = vmul.f32 %v1190, %v1423
    %v1447 = vmul.f32 %v1191, %v1423
    %v1448 = vmul.f32 %v1192, %v1423
    %v1449 = vmul.f32 %v1193, %v1424
    %v1450 = vmul.f32 %v1194, %v1424
    %v1451 = vmul.f32 %v1195, %v1424
    %v1452 = vmul.f32 %v1196, %v1424
    %v1453 = vmul.f32 %v1197, %v1425
    %v1454 = vmul.f32 %v1198, %v1425
    %v1455 = vmul.f32 %v1199, %v1425
    %v1456 = vmul.f32 %v1200, %v1425
    %v1457 = vmul.f32 %v1201, %v1426
    %v1458 = vmul.f32 %v1202, %v1426
    %v1459 = vmul.f32 %v1203, %v1426
    %v1460 = vmul.f32 %v1204, %v1426
    %v1461 = vmul.f32 %v1205, %v1427
    %v1462 = vmul.f32 %v1206, %v1427
    %v1463 = vmul.f32 %v1207, %v1427
    %v1464 = vmul.f32 %v1208, %v1427
    %v1465 = vmul.f32 %v1209, %v1428
    %v1466 = vmul.f32 %v1210, %v1428
    %v1467 = vmul.f32 %v1211, %v1428
    %v1468 = vmul.f32 %v1212, %v1428
    %v1469 = vmul.f32 %v1213, %v1429
    %v1470 = vmul.f32 %v1214, %v1429
    %v1471 = vmul.f32 %v1215, %v1429
    %v1472 = vmul.f32 %v1216, %v1429
    %v1473 = vmul.f32 %v1217, %v1430
    %v1474 = vmul.f32 %v1218, %v1430
    %v1475 = vmul.f32 %v1219, %v1430
    %v1476 = vmul.f32 %v1220, %v1430
    %v1477 = vmul.f32 %v1221, %v1431
    %v1478 = vmul.f32 %v1222, %v1431
    %v1479 = vmul.f32 %v1223, %v1431
    %v1480 = vmul.f32 %v1224, %v1431
    %v1481 = vmul.f32 %v1225, %v1432
    %v1482 = vmul.f32 %v1226, %v1432
    %v1483 = vmul.f32 %v1227, %v1432
    %v1484 = vmul.f32 %v1228, %v1432
    %v1485 = vmul.f32 %v1229, %v1433
    %v1486 = vmul.f32 %v1230, %v1433
    %v1487 = vmul.f32 %v1231, %v1433
    %v1488 = vmul.f32 %v1232, %v1433
    %v1489 = vmul.f32 %v1233, %v1434
    %v1490 = vmul.f32 %v1234, %v1434
    %v1491 = vmul.f32 %v1235, %v1434
    %v1492 = vmul.f32 %v1236, %v1434
    %v1493 = vmul.f32 %v1237, %v1435
    %v1494 = vmul.f32 %v1238, %v1435
    %v1495 = vmul.f32 %v1239, %v1435
    %v1496 = vmul.f32 %v1240, %v1435
    %v1497 = vmul.f32 %v1241, %v1436
    %v1498 = vmul.f32 %v1242, %v1436
    %v1499 = vmul.f32 %v1243, %v1436
    %v1500 = vmul.f32 %v1244, %v1436
    %v1502 = vlaneseq
    %v1503 = vshrl.u32 %v1502, 7
    %v1504 = vsub.s32 0, %v1503
    %v1505 = vrot.slane %v1082, %v1504
    %v1506 = vlaneseq
    %v1507 = vshrl.u32 %v1506, 7
    %v1508 = vsub.s32 1, %v1507
    %v1509 = vrot.slane %v1082, %v1508
    %v1510 = vlaneseq
    %v1511 = vshrl.u32 %v1510, 7
    %v1512 = vsub.s32 2, %v1511
    %v1513 = vrot.slane %v1082, %v1512
    %v1514 = vlaneseq
    %v1515 = vshrl.u32 %v1514, 7
    %v1516 = vsub.s32 3, %v1515
    %v1517 = vrot.slane %v1082, %v1516
    %v1522 = vmul.f32 %v1437, %v1505
    %v1523 = vmul.f32 %v1438, %v1509
    %v1524 = vmul.f32 %v1439, %v1513
    %v1525 = vmul.f32 %v1440, %v1517
    %v1526 = vmul.f32 %v1441, %v1505
    %v1527 = vmul.f32 %v1442, %v1509
    %v1528 = vmul.f32 %v1443, %v1513
    %v1529 = vmul.f32 %v1444, %v1517
    %v1530 = vmul.f32 %v1445, %v1505
    %v1531 = vmul.f32 %v1446, %v1509
    %v1532 = vmul.f32 %v1447, %v1513
    %v1533 = vmul.f32 %v1448, %v1517
    %v1534 = vmul.f32 %v1449, %v1505
    %v1535 = vmul.f32 %v1450, %v1509
    %v1536 = vmul.f32 %v1451, %v1513
    %v1537 = vmul.f32 %v1452, %v1517
    %v1538 = vmul.f32 %v1453, %v1505
    %v1539 = vmul.f32 %v1454, %v1509
    %v1540 = vmul.f32 %v1455, %v1513
    %v1541 = vmul.f32 %v1456, %v1517
    %v1542 = vmul.f32 %v1457, %v1505
    %v1543 = vmul.f32 %v1458, %v1509
    %v1544 = vmul.f32 %v1459, %v1513
    %v1545 = vmul.f32 %v1460, %v1517
    %v1546 = vmul.f32 %v1461, %v1505
    %v1547 = vmul.f32 %v1462, %v1509
    %v1548 = vmul.f32 %v1463, %v1513
    %v1549 = vmul.f32 %v1464, %v1517
    %v1550 = vmul.f32 %v1465, %v1505
    %v1551 = vmul.f32 %v1466, %v1509
    %v1552 = vmul.f32 %v1467, %v1513
    %v1553 = vmul.f32 %v1468, %v1517
    %v1554 = vmul.f32 %v1469, %v1505
    %v1555 = vmul.f32 %v1470, %v1509
    %v1556 = vmul.f32 %v1471, %v1513
    %v1557 = vmul.f32 %v1472, %v1517
    %v1558 = vmul.f32 %v1473, %v1505
    %v1559 = vmul.f32 %v1474, %v1509
    %v1560 = vmul.f32 %v1475, %v1513
    %v1561 = vmul.f32 %v1476, %v1517
    %v1562 = vmul.f32 %v1477, %v1505
    %v1563 = vmul.f32 %v1478, %v1509
    %v1564 = vmul.f32 %v1479, %v1513
    %v1565 = vmul.f32 %v1480, %v1517
    %v1566 = vmul.f32 %v1481, %v1505
    %v1567 = vmul.f32 %v1482, %v1509
    %v1568 = vmul.f32 %v1483, %v1513
    %v1569 = vmul.f32 %v1484, %v1517
    %v1570 = vmul.f32 %v1485, %v1505
    %v1571 = vmul.f32 %v1486, %v1509
    %v1572 = vmul.f32 %v1487, %v1513
    %v1573 = vmul.f32 %v1488, %v1517
    %v1574 = vmul.f32 %v1489, %v1505
    %v1575 = vmul.f32 %v1490, %v1509
    %v1576 = vmul.f32 %v1491, %v1513
    %v1577 = vmul.f32 %v1492, %v1517
    %v1578 = vmul.f32 %v1493, %v1505
    %v1579 = vmul.f32 %v1494, %v1509
    %v1580 = vmul.f32 %v1495, %v1513
    %v1581 = vmul.f32 %v1496, %v1517
    %v1582 = vmul.f32 %v1497, %v1505
    %v1583 = vmul.f32 %v1498, %v1509
    %v1584 = vmul.f32 %v1499, %v1513
    %v1585 = vmul.f32 %v1500, %v1517
    %v1587 = vlaneseq
    %v1588 = vshrl.u32 %v1587, 7
    %v1589 = vsub.s32 0, %v1588
    %v1590 = vrot.slane %v1083, %v1589
    %v1591 = vlaneseq
    %v1592 = vshrl.u32 %v1591, 7
    %v1593 = vsub.s32 1, %v1592
    %v1594 = vrot.slane %v1083, %v1593
    %v1595 = vlaneseq
    %v1596 = vshrl.u32 %v1595, 7
    %v1597 = vsub.s32 2, %v1596
    %v1598 = vrot.slane %v1083, %v1597
    %v1599 = vlaneseq
    %v1600 = vshrl.u32 %v1599, 7
    %v1601 = vsub.s32 3, %v1600
    %v1602 = vrot.slane %v1083, %v1601
    %v1607 = vadd.f32 %v1522, %v1590
    %v1608 = vadd.f32 %v1523, %v1594
    %v1609 = vadd.f32 %v1524, %v1598
    %v1610 = vadd.f32 %v1525, %v1602
    %v1611 = vadd.f32 %v1526, %v1590
    %v1612 = vadd.f32 %v1527, %v1594
    %v1613 = vadd.f32 %v1528, %v1598
    %v1614 = vadd.f32 %v1529, %v1602
    %v1615 = vadd.f32 %v1530, %v1590
    %v1616 = vadd.f32 %v1531, %v1594
    %v1617 = vadd.f32 %v1532, %v1598
    %v1618 = vadd.f32 %v1533, %v1602
    %v1619 = vadd.f32 %v1534, %v1590
    %v1620 = vadd.f32 %v1535, %v1594
    %v1621 = vadd.f32 %v1536, %v1598
    %v1622 = vadd.f32 %v1537, %v1602
    %v1623 = vadd.f32 %v1538, %v1590
    %v1624 = vadd.f32 %v1539, %v1594
    %v1625 = vadd.f32 %v1540, %v1598
    %v1626 = vadd.f32 %v1541, %v1602
    %v1627 = vadd.f32 %v1542, %v1590
    %v1628 = vadd.f32 %v1543, %v1594
    %v1629 = vadd.f32 %v1544, %v1598
    %v1630 = vadd.f32 %v1545, %v1602
    %v1631 = vadd.f32 %v1546, %v1590
    %v1632 = vadd.f32 %v1547, %v1594
    %v1633 = vadd.f32 %v1548, %v1598
    %v1634 = vadd.f32 %v1549, %v1602
    %v1635 = vadd.f32 %v1550, %v1590
    %v1636 = vadd.f32 %v1551, %v1594
    %v1637 = vadd.f32 %v1552, %v1598
    %v1638 = vadd.f32 %v1553, %v1602
    %v1639 = vadd.f32 %v1554, %v1590
    %v1640 = vadd.f32 %v1555, %v1594
    %v1641 = vadd.f32 %v1556, %v1598
    %v1642 = vadd.f32 %v1557, %v1602
    %v1643 = vadd.f32 %v1558, %v1590
    %v1644 = vadd.f32 %v1559, %v1594
    %v1645 = vadd.f32 %v1560, %v1598
    %v1646 = vadd.f32 %v1561, %v1602
    %v1647 = vadd.f32 %v1562, %v1590
    %v1648 = vadd.f32 %v1563, %v1594
    %v1649 = vadd.f32 %v1564, %v1598
    %v1650 = vadd.f32 %v1565, %v1602
    %v1651 = vadd.f32 %v1566, %v1590
    %v1652 = vadd.f32 %v1567, %v1594
    %v1653 = vadd.f32 %v1568, %v1598
    %v1654 = vadd.f32 %v1569, %v1602
    %v1655 = vadd.f32 %v1570, %v1590
    %v1656 = vadd.f32 %v1571, %v1594
    %v1657 = vadd.f32 %v1572, %v1598
    %v1658 = vadd.f32 %v1573, %v1602
    %v1659 = vadd.f32 %v1574, %v1590
    %v1660 = vadd.f32 %v1575, %v1594
    %v1661 = vadd.f32 %v1576, %v1598
    %v1662 = vadd.f32 %v1577, %v1602
    %v1663 = vadd.f32 %v1578, %v1590
    %v1664 = vadd.f32 %v1579, %v1594
    %v1665 = vadd.f32 %v1580, %v1598
    %v1666 = vadd.f32 %v1581, %v1602
    %v1667 = vadd.f32 %v1582, %v1590
    %v1668 = vadd.f32 %v1583, %v1594
    %v1669 = vadd.f32 %v1584, %v1598
    %v1670 = vadd.f32 %v1585, %v1602
    %v1671 = vpack.c.bf16 %v1611, %v1607
    %v1672 = vpack.c.bf16 %v1612, %v1608
    %v1673 = vpack.c.bf16 %v1613, %v1609
    %v1674 = vpack.c.bf16 %v1614, %v1610
    %v1675 = vpack.c.bf16 %v1619, %v1615
    %v1676 = vpack.c.bf16 %v1620, %v1616
    %v1677 = vpack.c.bf16 %v1621, %v1617
    %v1678 = vpack.c.bf16 %v1622, %v1618
    %v1679 = vpack.c.bf16 %v1627, %v1623
    %v1680 = vpack.c.bf16 %v1628, %v1624
    %v1681 = vpack.c.bf16 %v1629, %v1625
    %v1682 = vpack.c.bf16 %v1630, %v1626
    %v1683 = vpack.c.bf16 %v1635, %v1631
    %v1684 = vpack.c.bf16 %v1636, %v1632
    %v1685 = vpack.c.bf16 %v1637, %v1633
    %v1686 = vpack.c.bf16 %v1638, %v1634
    %v1687 = vpack.c.bf16 %v1643, %v1639
    %v1688 = vpack.c.bf16 %v1644, %v1640
    %v1689 = vpack.c.bf16 %v1645, %v1641
    %v1690 = vpack.c.bf16 %v1646, %v1642
    %v1691 = vpack.c.bf16 %v1651, %v1647
    %v1692 = vpack.c.bf16 %v1652, %v1648
    %v1693 = vpack.c.bf16 %v1653, %v1649
    %v1694 = vpack.c.bf16 %v1654, %v1650
    %v1695 = vpack.c.bf16 %v1659, %v1655
    %v1696 = vpack.c.bf16 %v1660, %v1656
    %v1697 = vpack.c.bf16 %v1661, %v1657
    %v1698 = vpack.c.bf16 %v1662, %v1658
    %v1699 = vpack.c.bf16 %v1667, %v1663
    %v1700 = vpack.c.bf16 %v1668, %v1664
    %v1701 = vpack.c.bf16 %v1669, %v1665
    %v1702 = vpack.c.bf16 %v1670, %v1666
    %v1703 = vld [vmem:[#allocation7] sm:$0xf]
    %v1704 = vld [vmem:[#allocation7 + $0x4] sm:$0xf]
    %v1705 = vld [vmem:[#allocation7 + $0x8] sm:$0xf]
    %v1706 = vld [vmem:[#allocation7 + $0xc] sm:$0xf]
    %v1707 = vld [vmem:[#allocation7 + $0x10] sm:$0xf]
    %v1708 = vld [vmem:[#allocation7 + $0x14] sm:$0xf]
    %v1709 = vld [vmem:[#allocation7 + $0x18] sm:$0xf]
    %v1710 = vld [vmem:[#allocation7 + $0x1c] sm:$0xf]
    %v1711 = vld [vmem:[#allocation7 + $0x20] sm:$0xf]
    %v1712 = vld [vmem:[#allocation7 + $0x24] sm:$0xf]
    %v1713 = vld [vmem:[#allocation7 + $0x28] sm:$0xf]
    %v1714 = vld [vmem:[#allocation7 + $0x2c] sm:$0xf]
    %v1715 = vld [vmem:[#allocation7 + $0x30] sm:$0xf]
    %v1716 = vld [vmem:[#allocation7 + $0x34] sm:$0xf]
    %v1717 = vld [vmem:[#allocation7 + $0x38] sm:$0xf]
    %v1718 = vld [vmem:[#allocation7 + $0x3c] sm:$0xf]
    %v1719 = vld [vmem:[#allocation7 + $0x40] sm:$0xf]
    %v1720 = vld [vmem:[#allocation7 + $0x44] sm:$0xf]
    %v1721 = vld [vmem:[#allocation7 + $0x48] sm:$0xf]
    %v1722 = vld [vmem:[#allocation7 + $0x4c] sm:$0xf]
    %v1723 = vld [vmem:[#allocation7 + $0x50] sm:$0xf]
    %v1724 = vld [vmem:[#allocation7 + $0x54] sm:$0xf]
    %v1725 = vld [vmem:[#allocation7 + $0x58] sm:$0xf]
    %v1726 = vld [vmem:[#allocation7 + $0x5c] sm:$0xf]
    %v1727 = vld [vmem:[#allocation7 + $0x60] sm:$0xf]
    %v1728 = vld [vmem:[#allocation7 + $0x64] sm:$0xf]
    %v1729 = vld [vmem:[#allocation7 + $0x68] sm:$0xf]
    %v1730 = vld [vmem:[#allocation7 + $0x6c] sm:$0xf]
    %v1731 = vld [vmem:[#allocation7 + $0x70] sm:$0xf]
    %v1732 = vld [vmem:[#allocation7 + $0x74] sm:$0xf]
    %v1733 = vld [vmem:[#allocation7 + $0x78] sm:$0xf]
    %v1734 = vld [vmem:[#allocation7 + $0x7c] sm:$0xf]
    %v1735 = vld [vmem:[#allocation7 + $0x80] sm:$0xf]
    %v1736 = vld [vmem:[#allocation7 + $0x84] sm:$0xf]
    %v1737 = vld [vmem:[#allocation7 + $0x88] sm:$0xf]
    %v1738 = vld [vmem:[#allocation7 + $0x8c] sm:$0xf]
    %v1739 = vld [vmem:[#allocation7 + $0x90] sm:$0xf]
    %v1740 = vld [vmem:[#allocation7 + $0x94] sm:$0xf]
    %v1741 = vld [vmem:[#allocation7 + $0x98] sm:$0xf]
    %v1742 = vld [vmem:[#allocation7 + $0x9c] sm:$0xf]
    %v1743 = vld [vmem:[#allocation7 + $0xa0] sm:$0xf]
    %v1744 = vld [vmem:[#allocation7 + $0xa4] sm:$0xf]
    %v1745 = vld [vmem:[#allocation7 + $0xa8] sm:$0xf]
    %v1746 = vld [vmem:[#allocation7 + $0xac] sm:$0xf]
    %v1747 = vld [vmem:[#allocation7 + $0xb0] sm:$0xf]
    %v1748 = vld [vmem:[#allocation7 + $0xb4] sm:$0xf]
    %v1749 = vld [vmem:[#allocation7 + $0xb8] sm:$0xf]
    %v1750 = vld [vmem:[#allocation7 + $0xbc] sm:$0xf]
    %v1751 = vld [vmem:[#allocation7 + $0xc0] sm:$0xf]
    %v1752 = vld [vmem:[#allocation7 + $0xc4] sm:$0xf]
    %v1753 = vld [vmem:[#allocation7 + $0xc8] sm:$0xf]
    %v1754 = vld [vmem:[#allocation7 + $0xcc] sm:$0xf]
    %v1755 = vld [vmem:[#allocation7 + $0xd0] sm:$0xf]
    %v1756 = vld [vmem:[#allocation7 + $0xd4] sm:$0xf]
    %v1757 = vld [vmem:[#allocation7 + $0xd8] sm:$0xf]
    %v1758 = vld [vmem:[#allocation7 + $0xdc] sm:$0xf]
    %v1759 = vld [vmem:[#allocation7 + $0xe0] sm:$0xf]
    %v1760 = vld [vmem:[#allocation7 + $0xe4] sm:$0xf]
    %v1761 = vld [vmem:[#allocation7 + $0xe8] sm:$0xf]
    %v1762 = vld [vmem:[#allocation7 + $0xec] sm:$0xf]
    %v1763 = vld [vmem:[#allocation7 + $0xf0] sm:$0xf]
    %v1764 = vld [vmem:[#allocation7 + $0xf4] sm:$0xf]
    %v1765 = vld [vmem:[#allocation7 + $0xf8] sm:$0xf]
    %v1766 = vld [vmem:[#allocation7 + $0xfc] sm:$0xf]
    %v1767 = vld [vmem:[%s8] sm:$0x1]
    %v1769 = vlaneseq
    %v1770 = vshrl.u32 %v1769, 7
    %v1771 = vsub.s32 0, %v1770
    %v1772 = vrot.slane %v1767, %v1771
    %v1838 = vunpack.c.l.b16 %v1703
    %v1839 = vunpack.c.l.b16 %v1704
    %v1840 = vunpack.c.l.b16 %v1705
    %v1841 = vunpack.c.l.b16 %v1706
    %v1842 = vunpack.c.l.b16 %v1707
    %v1843 = vunpack.c.l.b16 %v1708
    %v1844 = vunpack.c.l.b16 %v1709
    %v1845 = vunpack.c.l.b16 %v1710
    %v1846 = vunpack.c.l.b16 %v1711
    %v1847 = vunpack.c.l.b16 %v1712
    %v1848 = vunpack.c.l.b16 %v1713
    %v1849 = vunpack.c.l.b16 %v1714
    %v1850 = vunpack.c.l.b16 %v1715
    %v1851 = vunpack.c.l.b16 %v1716
    %v1852 = vunpack.c.l.b16 %v1717
    %v1853 = vunpack.c.l.b16 %v1718
    %v1854 = vunpack.c.l.b16 %v1719
    %v1855 = vunpack.c.l.b16 %v1720
    %v1856 = vunpack.c.l.b16 %v1721
    %v1857 = vunpack.c.l.b16 %v1722
    %v1858 = vunpack.c.l.b16 %v1723
    %v1859 = vunpack.c.l.b16 %v1724
    %v1860 = vunpack.c.l.b16 %v1725
    %v1861 = vunpack.c.l.b16 %v1726
    %v1862 = vunpack.c.l.b16 %v1727
    %v1863 = vunpack.c.l.b16 %v1728
    %v1864 = vunpack.c.l.b16 %v1729
    %v1865 = vunpack.c.l.b16 %v1730
    %v1866 = vunpack.c.l.b16 %v1731
    %v1867 = vunpack.c.l.b16 %v1732
    %v1868 = vunpack.c.l.b16 %v1733
    %v1869 = vunpack.c.l.b16 %v1734
    %v1870 = vunpack.c.l.b16 %v1735
    %v1871 = vunpack.c.l.b16 %v1736
    %v1872 = vunpack.c.l.b16 %v1737
    %v1873 = vunpack.c.l.b16 %v1738
    %v1874 = vunpack.c.l.b16 %v1739
    %v1875 = vunpack.c.l.b16 %v1740
    %v1876 = vunpack.c.l.b16 %v1741
    %v1877 = vunpack.c.l.b16 %v1742
    %v1878 = vunpack.c.l.b16 %v1743
    %v1879 = vunpack.c.l.b16 %v1744
    %v1880 = vunpack.c.l.b16 %v1745
    %v1881 = vunpack.c.l.b16 %v1746
    %v1882 = vunpack.c.l.b16 %v1747
    %v1883 = vunpack.c.l.b16 %v1748
    %v1884 = vunpack.c.l.b16 %v1749
    %v1885 = vunpack.c.l.b16 %v1750
    %v1886 = vunpack.c.l.b16 %v1751
    %v1887 = vunpack.c.l.b16 %v1752
    %v1888 = vunpack.c.l.b16 %v1753
    %v1889 = vunpack.c.l.b16 %v1754
    %v1890 = vunpack.c.l.b16 %v1755
    %v1891 = vunpack.c.l.b16 %v1756
    %v1892 = vunpack.c.l.b16 %v1757
    %v1893 = vunpack.c.l.b16 %v1758
    %v1894 = vunpack.c.l.b16 %v1759
    %v1895 = vunpack.c.l.b16 %v1760
    %v1896 = vunpack.c.l.b16 %v1761
    %v1897 = vunpack.c.l.b16 %v1762
    %v1898 = vunpack.c.l.b16 %v1763
    %v1899 = vunpack.c.l.b16 %v1764
    %v1900 = vunpack.c.l.b16 %v1765
    %v1901 = vunpack.c.l.b16 %v1766
    %v1902 = vpack.c.b16 %v1839, %v1838
    %v1903 = vpack.c.b16 %v1841, %v1840
    %v1904 = vpack.c.b16 %v1843, %v1842
    %v1905 = vpack.c.b16 %v1845, %v1844
    %v1906 = vpack.c.b16 %v1847, %v1846
    %v1907 = vpack.c.b16 %v1849, %v1848
    %v1908 = vpack.c.b16 %v1851, %v1850
    %v1909 = vpack.c.b16 %v1853, %v1852
    %v1910 = vpack.c.b16 %v1855, %v1854
    %v1911 = vpack.c.b16 %v1857, %v1856
    %v1912 = vpack.c.b16 %v1859, %v1858
    %v1913 = vpack.c.b16 %v1861, %v1860
    %v1914 = vpack.c.b16 %v1863, %v1862
    %v1915 = vpack.c.b16 %v1865, %v1864
    %v1916 = vpack.c.b16 %v1867, %v1866
    %v1917 = vpack.c.b16 %v1869, %v1868
    %v1918 = vpack.c.b16 %v1871, %v1870
    %v1919 = vpack.c.b16 %v1873, %v1872
    %v1920 = vpack.c.b16 %v1875, %v1874
    %v1921 = vpack.c.b16 %v1877, %v1876
    %v1922 = vpack.c.b16 %v1879, %v1878
    %v1923 = vpack.c.b16 %v1881, %v1880
    %v1924 = vpack.c.b16 %v1883, %v1882
    %v1925 = vpack.c.b16 %v1885, %v1884
    %v1926 = vpack.c.b16 %v1887, %v1886
    %v1927 = vpack.c.b16 %v1889, %v1888
    %v1928 = vpack.c.b16 %v1891, %v1890
    %v1929 = vpack.c.b16 %v1893, %v1892
    %v1930 = vpack.c.b16 %v1895, %v1894
    %v1931 = vpack.c.b16 %v1897, %v1896
    %v1932 = vpack.c.b16 %v1899, %v1898
    %v1933 = vpack.c.b16 %v1901, %v1900
    %1966 = vmatprep.subr.bf16.mxu0 0
    %1967 = vmatpush1.bf16.msra.mxu0 %v1902
    %1968 = vmatprep.subr.bf16.mxu0 0
    %1969 = vmatpush1.bf16.msra.mxu0 %v1903
    %1970 = vmatprep.subr.bf16.mxu0 0
    %1971 = vmatpush1.bf16.msra.mxu0 %v1904
    %1972 = vmatprep.subr.bf16.mxu0 0
    %1973 = vmatpush1.bf16.msra.mxu0 %v1905
    %1974 = vmatprep.subr.bf16.mxu0 0
    %1975 = vmatpush1.bf16.msra.mxu0 %v1906
    %1976 = vmatprep.subr.bf16.mxu0 0
    %1977 = vmatpush1.bf16.msra.mxu0 %v1907
    %1978 = vmatprep.subr.bf16.mxu0 0
    %1979 = vmatpush1.bf16.msra.mxu0 %v1908
    %1980 = vmatprep.subr.bf16.mxu0 0
    %1981 = vmatpush1.bf16.msra.mxu0 %v1909
    %1982 = vmatprep.subr.bf16.mxu0 0
    %1983 = vmatpush1.bf16.msra.mxu0 %v1910
    %1984 = vmatprep.subr.bf16.mxu0 0
    %1985 = vmatpush1.bf16.msra.mxu0 %v1911
    %1986 = vmatprep.subr.bf16.mxu0 0
    %1987 = vmatpush1.bf16.msra.mxu0 %v1912
    %1988 = vmatprep.subr.bf16.mxu0 0
    %1989 = vmatpush1.bf16.msra.mxu0 %v1913
    %1990 = vmatprep.subr.bf16.mxu0 0
    %1991 = vmatpush1.bf16.msra.mxu0 %v1914
    %1992 = vmatprep.subr.bf16.mxu0 0
    %1993 = vmatpush1.bf16.msra.mxu0 %v1915
    %1994 = vmatprep.subr.bf16.mxu0 0
    %1995 = vmatpush1.bf16.msra.mxu0 %v1916
    %1996 = vmatprep.subr.bf16.mxu0 0
    %1997 = vmatpush1.bf16.msra.mxu0 %v1917
    %1998 = vmatprep.mubr.bf16.mxu0 %v1672
    %1999 = vmatmul.mubr.bf16.gmra.mrb[0].mxu0 %v1671
    %v2000 = vpop.f32.mrb[0].mxu0
    %v2001 = vadd.f32 %v1772, %v2000
    %v2002 = vpop.f32.mrb[0].mxu0
    %v2003 = vpop.f32.mrb[0].mxu0
    %v2004 = vadd.f32 %v1772, %v2003
    %v2005 = vpop.f32.mrb[0].mxu0
    %2006 = vmatprep.mubr.bf16.mxu0 %v1676
    %2007 = vmatmul.mubr.bf16.gmra.mrb[0].mxu0 %v1675
    %v2008 = vpop.f32.mrb[0].mxu0
    %v2009 = vadd.f32 %v1772, %v2008
    %v2010 = vpop.f32.mrb[0].mxu0
    %v2011 = vpop.f32.mrb[0].mxu0
    %v2012 = vadd.f32 %v1772, %v2011
    %v2013 = vpop.f32.mrb[0].mxu0
    %2014 = vmatprep.mubr.bf16.mxu0 %v1680
    %2015 = vmatmul.mubr.bf16.gmra.mrb[0].mxu0 %v1679
    %v2016 = vpop.f32.mrb[0].mxu0
    %v2017 = vadd.f32 %v1772, %v2016
    %v2018 = vpop.f32.mrb[0].mxu0
    %v2019 = vpop.f32.mrb[0].mxu0
    %v2020 = vadd.f32 %v1772, %v2019
    %v2021 = vpop.f32.mrb[0].mxu0
    %2022 = vmatprep.mubr.bf16.mxu0 %v1684
    %2023 = vmatmul.mubr.bf16.gmra.mrb[0].mxu0 %v1683
    %v2024 = vpop.f32.mrb[0].mxu0
    %v2025 = vadd.f32 %v1772, %v2024
    %v2026 = vpop.f32.mrb[0].mxu0
    %v2027 = vpop.f32.mrb[0].mxu0
    %v2028 = vadd.f32 %v1772, %v2027
    %v2029 = vpop.f32.mrb[0].mxu0
    %2030 = vmatprep.mubr.bf16.mxu0 %v1688
    %2031 = vmatmul.mubr.bf16.gmra.mrb[0].mxu0 %v1687
    %v2032 = vpop.f32.mrb[0].mxu0
    %v2033 = vadd.f32 %v1772, %v2032
    %v2034 = vpop.f32.mrb[0].mxu0
    %v2035 = vpop.f32.mrb[0].mxu0
    %v2036 = vadd.f32 %v1772, %v2035
    %v2037 = vpop.f32.mrb[0].mxu0
    %2038 = vmatprep.mubr.bf16.mxu0 %v1692
    %2039 = vmatmul.mubr.bf16.gmra.mrb[0].mxu0 %v1691
    %v2040 = vpop.f32.mrb[0].mxu0
    %v2041 = vadd.f32 %v1772, %v2040
    %v2042 = vpop.f32.mrb[0].mxu0
    %v2043 = vpop.f32.mrb[0].mxu0
    %v2044 = vadd.f32 %v1772, %v2043
    %v2045 = vpop.f32.mrb[0].mxu0
    %2046 = vmatprep.mubr.bf16.mxu0 %v1696
    %2047 = vmatmul.mubr.bf16.gmra.mrb[0].mxu0 %v1695
    %v2048 = vpop.f32.mrb[0].mxu0
    %v2049 = vadd.f32 %v1772, %v2048
    %v2050 = vpop.f32.mrb[0].mxu0
    %v2051 = vpop.f32.mrb[0].mxu0
    %v2052 = vadd.f32 %v1772, %v2051
    %v2053 = vpop.f32.mrb[0].mxu0
    %2054 = vmatprep.mubr.bf16.mxu0 %v1700
    %2055 = vmatmul.mubr.bf16.gmra.mrb[0].mxu0 %v1699
    %v2056 = vpop.f32.mrb[0].mxu0
    %v2057 = vadd.f32 %v1772, %v2056
    %v2058 = vpop.f32.mrb[0].mxu0
    %v2059 = vpop.f32.mrb[0].mxu0
    %v2060 = vadd.f32 %v1772, %v2059
    %v2061 = vpop.f32.mrb[0].mxu0
    %2062 = vdwg.mxu0
    %2063 = vmatprep.subr.bf16.mxu0 0
    %2064 = vmatpush1.bf16.msra.mxu0 %v1918
    %2065 = vmatprep.subr.bf16.mxu0 0
    %2066 = vmatpush1.bf16.msra.mxu0 %v1919
    %2067 = vmatprep.subr.bf16.mxu0 0
    %2068 = vmatpush1.bf16.msra.mxu0 %v1920
    %2069 = vmatprep.subr.bf16.mxu0 0
    %2070 = vmatpush1.bf16.msra.mxu0 %v1921
    %2071 = vmatprep.subr.bf16.mxu0 0
    %2072 = vmatpush1.bf16.msra.mxu0 %v1922
    %2073 = vmatprep.subr.bf16.mxu0 0
    %2074 = vmatpush1.bf16.msra.mxu0 %v1923
    %2075 = vmatprep.subr.bf16.mxu0 0
    %2076 = vmatpush1.bf16.msra.mxu0 %v1924
    %2077 = vmatprep.subr.bf16.mxu0 0
    %2078 = vmatpush1.bf16.msra.mxu0 %v1925
    %2079 = vmatprep.subr.bf16.mxu0 0
    %2080 = vmatpush1.bf16.msra.mxu0 %v1926
    %2081 = vmatprep.subr.bf16.mxu0 0
    %2082 = vmatpush1.bf16.msra.mxu0 %v1927
    %2083 = vmatprep.subr.bf16.mxu0 0
    %2084 = vmatpush1.bf16.msra.mxu0 %v1928
    %2085 = vmatprep.subr.bf16.mxu0 0
    %2086 = vmatpush1.bf16.msra.mxu0 %v1929
    %2087 = vmatprep.subr.bf16.mxu0 0
    %2088 = vmatpush1.bf16.msra.mxu0 %v1930
    %2089 = vmatprep.subr.bf16.mxu0 0
    %2090 = vmatpush1.bf16.msra.mxu0 %v1931
    %2091 = vmatprep.subr.bf16.mxu0 0
    %2092 = vmatpush1.bf16.msra.mxu0 %v1932
    %2093 = vmatprep.subr.bf16.mxu0 0
    %2094 = vmatpush1.bf16.msra.mxu0 %v1933
    %2095 = vmatprep.mubr.bf16.mxu0 %v1674
    %2096 = vmatmul.mubr.bf16.gmra.mrb[0].mxu0 %v1673
    %v2097 = vpop.f32.mrb[0].mxu0
    %v2098 = vadd.f32 %v2001, %v2097
    %v2099 = vpop.f32.mrb[0].mxu0
    %v2100 = vpop.f32.mrb[0].mxu0
    %v2101 = vadd.f32 %v2004, %v2100
    %v2102 = vpop.f32.mrb[0].mxu0
    %2103 = vmatprep.mubr.bf16.mxu0 %v1678
    %2104 = vmatmul.mubr.bf16.gmra.mrb[0].mxu0 %v1677
    %v2105 = vpop.f32.mrb[0].mxu0
    %v2106 = vadd.f32 %v2009, %v2105
    %v2107 = vpop.f32.mrb[0].mxu0
    %v2108 = vpop.f32.mrb[0].mxu0
    %v2109 = vadd.f32 %v2012, %v2108
    %v2110 = vpop.f32.mrb[0].mxu0
    %2111 = vmatprep.mubr.bf16.mxu0 %v1682
    %2112 = vmatmul.mubr.bf16.gmra.mrb[0].mxu0 %v1681
    %v2113 = vpop.f32.mrb[0].mxu0
    %v2114 = vadd.f32 %v2017, %v2113
    %v2115 = vpop.f32.mrb[0].mxu0
    %v2116 = vpop.f32.mrb[0].mxu0
    %v2117 = vadd.f32 %v2020, %v2116
    %v2118 = vpop.f32.mrb[0].mxu0
    %2119 = vmatprep.mubr.bf16.mxu0 %v1686
    %2120 = vmatmul.mubr.bf16.gmra.mrb[0].mxu0 %v1685
    %v2121 = vpop.f32.mrb[0].mxu0
    %v2122 = vadd.f32 %v2025, %v2121
    %v2123 = vpop.f32.mrb[0].mxu0
    %v2124 = vpop.f32.mrb[0].mxu0
    %v2125 = vadd.f32 %v2028, %v2124
    %v2126 = vpop.f32.mrb[0].mxu0
    %2127 = vmatprep.mubr.bf16.mxu0 %v1690
    %2128 = vmatmul.mubr.bf16.gmra.mrb[0].mxu0 %v1689
    %v2129 = vpop.f32.mrb[0].mxu0
    %v2130 = vadd.f32 %v2033, %v2129
    %v2131 = vpop.f32.mrb[0].mxu0
    %v2132 = vpop.f32.mrb[0].mxu0
    %v2133 = vadd.f32 %v2036, %v2132
    %v2134 = vpop.f32.mrb[0].mxu0
    %2135 = vmatprep.mubr.bf16.mxu0 %v1694
    %2136 = vmatmul.mubr.bf16.gmra.mrb[0].mxu0 %v1693
    %v2137 = vpop.f32.mrb[0].mxu0
    %v2138 = vadd.f32 %v2041, %v2137
    %v2139 = vpop.f32.mrb[0].mxu0
    %v2140 = vpop.f32.mrb[0].mxu0
    %v2141 = vadd.f32 %v2044, %v2140
    %v2142 = vpop.f32.mrb[0].mxu0
    %2143 = vmatprep.mubr.bf16.mxu0 %v1698
    %2144 = vmatmul.mubr.bf16.gmra.mrb[0].mxu0 %v1697
    %v2145 = vpop.f32.mrb[0].mxu0
    %v2146 = vadd.f32 %v2049, %v2145
    %v2147 = vpop.f32.mrb[0].mxu0
    %v2148 = vpop.f32.mrb[0].mxu0
    %v2149 = vadd.f32 %v2052, %v2148
    %v2150 = vpop.f32.mrb[0].mxu0
    %2151 = vmatprep.mubr.bf16.mxu0 %v1702
    %2152 = vmatmul.mubr.bf16.gmra.mrb[0].mxu0 %v1701
    %v2153 = vpop.f32.mrb[0].mxu0
    %v2154 = vadd.f32 %v2057, %v2153
    %v2155 = vpop.f32.mrb[0].mxu0
    %v2156 = vpop.f32.mrb[0].mxu0
    %v2157 = vadd.f32 %v2060, %v2156
    %v2158 = vpop.f32.mrb[0].mxu0
    %2159 = vdwg.mxu0
    %2160 = vst [vmem:[#allocation8] sm:$0xff] %v2098
    %2161 = vst [vmem:[#allocation8 + $0x8] sm:$0xff] %v2101
    %2162 = vst [vmem:[#allocation8 + $0x10] sm:$0xff] %v2106
    %2163 = vst [vmem:[#allocation8 + $0x18] sm:$0xff] %v2109
    %2164 = vst [vmem:[#allocation8 + $0x20] sm:$0xff] %v2114
    %2165 = vst [vmem:[#allocation8 + $0x28] sm:$0xff] %v2117
    %2166 = vst [vmem:[#allocation8 + $0x30] sm:$0xff] %v2122
    %2167 = vst [vmem:[#allocation8 + $0x38] sm:$0xff] %v2125
    %2168 = vst [vmem:[#allocation8 + $0x40] sm:$0xff] %v2130
    %2169 = vst [vmem:[#allocation8 + $0x48] sm:$0xff] %v2133
    %2170 = vst [vmem:[#allocation8 + $0x50] sm:$0xff] %v2138
    %2171 = vst [vmem:[#allocation8 + $0x58] sm:$0xff] %v2141
    %2172 = vst [vmem:[#allocation8 + $0x60] sm:$0xff] %v2146
    %2173 = vst [vmem:[#allocation8 + $0x68] sm:$0xff] %v2149
    %2174 = vst [vmem:[#allocation8 + $0x70] sm:$0xff] %v2154
    %2175 = vst [vmem:[#allocation8 + $0x78] sm:$0xff] %v2157
    // Predicated region
    $region50: #{tpu_custom_call.1} parent=1 // pred_check
      _
    $region51: #{tpu_custom_call.1} parent=1 // pred_check_branch
      %2177 = sbr.rel (0) target = $region53
    $region52: #{tpu_custom_call.1} parent=1 // pred_region
      %s2179 = ssub.s32 2048, 2048
      %2180 = vsyncadd [#allocation4], %s2179
      %s2181 = sshll.u32 [#allocation8], 4
      %s2182 = int_to_ptr.vmem [resolvable:$true] %s2181
      %2187 = dma.vmem_to_hbm [thread:$0]  %s2182, 2048, %s9, [#allocation4], 128, 128, 8
    $region53: #{tpu_custom_call.1} parent=1 // pred_fallthru
      _
    // Predicated region
    $region54: #{tpu_custom_call.1} parent=1 // pred_check
      _
    $region55: #{tpu_custom_call.1} parent=1 // pred_check_branch
      %2189 = sbr.rel (0) target = $region57
    $region56: #{tpu_custom_call.1} parent=1 // pred_region
      %2190 = dma.done [#allocation4], 2048
    $region57: #{tpu_custom_call.1} parent=1 // pred_fallthru
      _
    %2191 = vsyncpa [#allocation3], 1
    %2192 = vsyncpa [#allocation6], 1
    %2193 = vsyncpa [#allocation4], 1

// kernel: tpu_custom_call.1
$region0: #{tpu_custom_call.1}
  #allocation0 [shape = 'u32[]', space=smem, size = 0x4, offset = 0x4, fixed_abs, tag = 'smem constant byte address 0x4 - core index']
  #allocation1 [shape = 'u32[144,128]{1,0:T(1,128)}', space=vmem, size = 0x12000, scoped, tag = 'internal scratch']
  %s0 = inlined_call_operand.hbm [shape: f32[128,128], index: 0, kind: input, shape index: {}]
  %s1 = inlined_call_operand.vmem [shape: f32[1,128], index: 1, kind: input, shape index: {}]
  %s2 = inlined_call_operand.vmem [shape: f32[1,128], index: 2, kind: input, shape index: {}]
  %s3 = inlined_call_operand.hbm [shape: bf16[128,512], index: 3, kind: input, shape index: {}]
  %s4 = inlined_call_operand.vmem [shape: f32[1,512], index: 4, kind: input, shape index: {}]
  %s5 = inlined_call_operand.vmem [shape: f32[1,512], index: 5, kind: input, shape index: {}]
  %s6 = inlined_call_operand.vmem [shape: f32[1,512], index: 6, kind: input, shape index: {}]
  %s7 = inlined_call_operand.hbm [shape: bf16[512,128], index: 7, kind: input, shape index: {}]
  %s8 = inlined_call_operand.vmem [shape: f32[1,128], index: 8, kind: input, shape index: {}]
  %s9 = inlined_call_operand.hbm [shape: f32[128,128], index: 9, kind: output, shape index: {}]
  %s10 = sld [smem:[#allocation0]]
  $region58: #{tpu_custom_call.1} parent=0
    _
  %s12 = ssub.s32 1, %s10
  %s13 = scalar_select 0, %s12, %s10
  $region1: #{tpu_custom_call.1} parent=0
    #allocation2 [shape = 'u8[65536]{0}', space=vmem, size = 0x10000, scoped, tag = 'input window, operand 0, single buffered']
    #allocation3 [shape = 's32[1]{0}', space=sflag, size = 0x4, scoped, tag = 'scoped memory for tpu_custom_call.1']
    #allocation4 [shape = 's32[1]{0}', space=sflag, size = 0x4, scoped, tag = 'scoped memory for tpu_custom_call.1']
    #allocation5 [shape = 'u8[131072]{0}', space=vmem, size = 0x20000, scoped, tag = 'input window, operand 3, single buffered']
    #allocation6 [shape = 's32[1]{0}', space=sflag, size = 0x4, scoped, tag = 'scoped memory for tpu_custom_call.1']
    #allocation7 [shape = 'u8[131072]{0}', space=vmem, size = 0x20000, scoped, tag = 'input window, operand 7, single buffered']
    #allocation8 [shape = 'u8[65536]{0}', space=vmem, size = 0x10000, scoped, tag = 'output window, operand 0, single buffered']
    %14 = vsyncpa [#allocation3], 0
    %15 = vsyncpa [#allocation6], 0
    %16 = vsyncpa [#allocation4], 0
    // Predicated region
    $region2: #{tpu_custom_call.1} parent=1 // pred_check
      _
    $region3: #{tpu_custom_call.1} parent=1 // pred_check_branch
      %18 = sbr.rel (0) target = $region5
    $region4: #{tpu_custom_call.1} parent=1 // pred_region
      %s20 = ssub.s32 2048, 2048
      %21 = vsyncadd [#allocation3], %s20
      %s22 = sshll.u32 [#allocation2], 4
      %s23 = int_to_ptr.vmem [resolvable:$true] %s22
      %28 = dma.hbm_to_vmem [thread:$0]  %s0, 2048, %s23, [#allocation3], 128, 128, 8
    $region5: #{tpu_custom_call.1} parent=1 // pred_fallthru
      _
    // Predicated region
    $region6: #{tpu_custom_call.1} parent=1 // pred_check
      _
    $region7: #{tpu_custom_call.1} parent=1 // pred_check_branch
      %30 = sbr.rel (0) target = $region9
    $region8: #{tpu_custom_call.1} parent=1 // pred_region
      _
    $region9: #{tpu_custom_call.1} parent=1 // pred_fallthru
      _
    // Predicated region
    $region10: #{tpu_custom_call.1} parent=1 // pred_check
      _
    $region11: #{tpu_custom_call.1} parent=1 // pred_check_branch
      %32 = sbr.rel (0) target = $region13
    $region12: #{tpu_custom_call.1} parent=1 // pred_region
      _
    $region13: #{tpu_custom_call.1} parent=1 // pred_fallthru
      _
    // Predicated region
    $region14: #{tpu_custom_call.1} parent=1 // pred_check
      _
    $region15: #{tpu_custom_call.1} parent=1 // pred_check_branch
      %34 = sbr.rel (0) target = $region17
    $region16: #{tpu_custom_call.1} parent=1 // pred_region
      %s36 = ssub.s32 4096, 4096
      %37 = vsyncadd [#allocation6], %s36
      %s38 = sshll.u32 [#allocation5], 4
      %s39 = int_to_ptr.vmem [resolvable:$true] %s38
      %44 = dma.hbm_to_vmem [thread:$0]  %s3, 4096, %s39, [#allocation6], 256, 256, 16
    $region17: #{tpu_custom_call.1} parent=1 // pred_fallthru
      _
    // Predicated region
    $region18: #{tpu_custom_call.1} parent=1 // pred_check
      _
    $region19: #{tpu_custom_call.1} parent=1 // pred_check_branch
      %46 = sbr.rel (0) target = $region21
    $region20: #{tpu_custom_call.1} parent=1 // pred_region
      _
    $region21: #{tpu_custom_call.1} parent=1 // pred_fallthru
      _
    // Predicated region
    $region22: #{tpu_custom_call.1} parent=1 // pred_check
      _
    $region23: #{tpu_custom_call.1} parent=1 // pred_check_branch
      %48 = sbr.rel (0) target = $region25
    $region24: #{tpu_custom_call.1} parent=1 // pred_region
      _
    $region25: #{tpu_custom_call.1} parent=1 // pred_fallthru
      _
    // Predicated region
    $region26: #{tpu_custom_call.1} parent=1 // pred_check
      _
    $region27: #{tpu_custom_call.1} parent=1 // pred_check_branch
      %50 = sbr.rel (0) target = $region29
    $region28: #{tpu_custom_call.1} parent=1 // pred_region
      _
    $region29: #{tpu_custom_call.1} parent=1 // pred_fallthru
      _
    // Predicated region
    $region30: #{tpu_custom_call.1} parent=1 // pred_check
      _
    $region31: #{tpu_custom_call.1} parent=1 // pred_check_branch
      %52 = sbr.rel (0) target = $region33
    $region32: #{tpu_custom_call.1} parent=1 // pred_region
      %s54 = ssub.s32 4096, 4096
      %55 = vsyncadd [#allocation6], %s54
      %s56 = sshll.u32 [#allocation7], 4
      %s57 = int_to_ptr.vmem [resolvable:$true] %s56
      %62 = dma.hbm_to_vmem [thread:$0]  %s7, 4096, %s57, [#allocation6], 64, 64, 4
    $region33: #{tpu_custom_call.1} parent=1 // pred_fallthru
      _
    // Predicated region
    $region34: #{tpu_custom_call.1} parent=1 // pred_check
      _
    $region35: #{tpu_custom_call.1} parent=1 // pred_check_branch
      %64 = sbr.rel (0) target = $region37
    $region36: #{tpu_custom_call.1} parent=1 // pred_region
      _
    $region37: #{tpu_custom_call.1} parent=1 // pred_fallthru
      _
    // Predicated region
    $region38: #{tpu_custom_call.1} parent=1 // pred_check
      _
    $region39: #{tpu_custom_call.1} parent=1 // pred_check_branch
      %66 = sbr.rel (0) target = $region41
    $region40: #{tpu_custom_call.1} parent=1 // pred_region
      %67 = dma.done [#allocation3], 2048
    $region41: #{tpu_custom_call.1} parent=1 // pred_fallthru
      _
    // Predicated region
    $region42: #{tpu_custom_call.1} parent=1 // pred_check
      _
    $region43: #{tpu_custom_call.1} parent=1 // pred_check_branch
      %69 = sbr.rel (0) target = $region45
    $region44: #{tpu_custom_call.1} parent=1 // pred_region
      %70 = dma.done [#allocation6], 4096
    $region45: #{tpu_custom_call.1} parent=1 // pred_fallthru
      _
    // Predicated region
    $region46: #{tpu_custom_call.1} parent=1 // pred_check
      _
    $region47: #{tpu_custom_call.1} parent=1 // pred_check_branch
      %72 = sbr.rel (0) target = $region49
    $region48: #{tpu_custom_call.1} parent=1 // pred_region
      %73 = dma.done [#allocation6], 4096
    $region49: #{tpu_custom_call.1} parent=1 // pred_fallthru
      _
    %v75 = vld [vmem:[#allocation2] sm:$0xff]
    %v76 = vld [vmem:[#allocation2 + $0x8] sm:$0xff]
    %v77 = vld [vmem:[#allocation2 + $0x10] sm:$0xff]
    %v78 = vld [vmem:[#allocation2 + $0x18] sm:$0xff]
    %v79 = vld [vmem:[#allocation2 + $0x20] sm:$0xff]
    %v80 = vld [vmem:[#allocation2 + $0x28] sm:$0xff]
    %v81 = vld [vmem:[#allocation2 + $0x30] sm:$0xff]
    %v82 = vld [vmem:[#allocation2 + $0x38] sm:$0xff]
    %v83 = vld [vmem:[#allocation2 + $0x40] sm:$0xff]
    %v84 = vld [vmem:[#allocation2 + $0x48] sm:$0xff]
    %v85 = vld [vmem:[#allocation2 + $0x50] sm:$0xff]
    %v86 = vld [vmem:[#allocation2 + $0x58] sm:$0xff]
    %v87 = vld [vmem:[#allocation2 + $0x60] sm:$0xff]
    %v88 = vld [vmem:[#allocation2 + $0x68] sm:$0xff]
    %v89 = vld [vmem:[#allocation2 + $0x70] sm:$0xff]
    %v90 = vld [vmem:[#allocation2 + $0x78] sm:$0xff]
    %v91 = vld [vmem:[%s1] sm:$0x1]
    %v92 = vld [vmem:[%s2] sm:$0x1]
    %93 = vadd.xlane.f32.xlu0 %v75
    %v94 = vpop.xlane.xlu0 %93
    %95 = vadd.xlane.f32.xlu0 %v76
    %v96 = vpop.xlane.xlu0 %95
    %97 = vadd.xlane.f32.xlu0 %v77
    %v98 = vpop.xlane.xlu0 %97
    %99 = vadd.xlane.f32.xlu0 %v78
    %v100 = vpop.xlane.xlu0 %99
    %101 = vadd.xlane.f32.xlu0 %v79
    %v102 = vpop.xlane.xlu0 %101
    %103 = vadd.xlane.f32.xlu0 %v80
    %v104 = vpop.xlane.xlu0 %103
    %105 = vadd.xlane.f32.xlu0 %v81
    %v106 = vpop.xlane.xlu0 %105
    %107 = vadd.xlane.f32.xlu0 %v82
    %v108 = vpop.xlane.xlu0 %107
    %109 = vadd.xlane.f32.xlu0 %v83
    %v110 = vpop.xlane.xlu0 %109
    %111 = vadd.xlane.f32.xlu0 %v84
    %v112 = vpop.xlane.xlu0 %111
    %113 = vadd.xlane.f32.xlu0 %v85
    %v114 = vpop.xlane.xlu0 %113
    %115 = vadd.xlane.f32.xlu0 %v86
    %v116 = vpop.xlane.xlu0 %115
    %117 = vadd.xlane.f32.xlu0 %v87
    %v118 = vpop.xlane.xlu0 %117
    %119 = vadd.xlane.f32.xlu0 %v88
    %v120 = vpop.xlane.xlu0 %119
    %121 = vadd.xlane.f32.xlu0 %v89
    %v122 = vpop.xlane.xlu0 %121
    %123 = vadd.xlane.f32.xlu0 %v90
    %v124 = vpop.xlane.xlu0 %123
    %v125 = vrcp.pop 128.0
    %v126 = vmul.f32 %v94, %v125
    %v127 = vmul.f32 %v96, %v125
    %v128 = vmul.f32 %v98, %v125
    %v129 = vmul.f32 %v100, %v125
    %v130 = vmul.f32 %v102, %v125
    %v131 = vmul.f32 %v104, %v125
    %v132 = vmul.f32 %v106, %v125
    %v133 = vmul.f32 %v108, %v125
    %v134 = vmul.f32 %v110, %v125
    %v135 = vmul.f32 %v112, %v125
    %v136 = vmul.f32 %v114, %v125
    %v137 = vmul.f32 %v116, %v125
    %v138 = vmul.f32 %v118, %v125
    %v139 = vmul.f32 %v120, %v125
    %v140 = vmul.f32 %v122, %v125
    %v141 = vmul.f32 %v124, %v125
    %v142 = vsub.f32 %v75, %v126
    %v143 = vsub.f32 %v76, %v127
    %v144 = vsub.f32 %v77, %v128
    %v145 = vsub.f32 %v78, %v129
    %v146 = vsub.f32 %v79, %v130
    %v147 = vsub.f32 %v80, %v131
    %v148 = vsub.f32 %v81, %v132
    %v149 = vsub.f32 %v82, %v133
    %v150 = vsub.f32 %v83, %v134
    %v151 = vsub.f32 %v84, %v135
    %v152 = vsub.f32 %v85, %v136
    %v153 = vsub.f32 %v86, %v137
    %v154 = vsub.f32 %v87, %v138
    %v155 = vsub.f32 %v88, %v139
    %v156 = vsub.f32 %v89, %v140
    %v157 = vsub.f32 %v90, %v141
    %v158 = vmul.f32 %v142, %v142
    %v159 = vmul.f32 %v143, %v143
    %v160 = vmul.f32 %v144, %v144
    %v161 = vmul.f32 %v145, %v145
    %v162 = vmul.f32 %v146, %v146
    %v163 = vmul.f32 %v147, %v147
    %v164 = vmul.f32 %v148, %v148
    %v165 = vmul.f32 %v149, %v149
    %v166 = vmul.f32 %v150, %v150
    %v167 = vmul.f32 %v151, %v151
    %v168 = vmul.f32 %v152, %v152
    %v169 = vmul.f32 %v153, %v153
    %v170 = vmul.f32 %v154, %v154
    %v171 = vmul.f32 %v155, %v155
    %v172 = vmul.f32 %v156, %v156
    %v173 = vmul.f32 %v157, %v157
    %174 = vadd.xlane.f32.xlu0 %v158
    %v175 = vpop.xlane.xlu0 %174
    %176 = vadd.xlane.f32.xlu0 %v159
    %v177 = vpop.xlane.xlu0 %176
    %178 = vadd.xlane.f32.xlu0 %v160
    %v179 = vpop.xlane.xlu0 %178
    %180 = vadd.xlane.f32.xlu0 %v161
    %v181 = vpop.xlane.xlu0 %180
    %182 = vadd.xlane.f32.xlu0 %v162
    %v183 = vpop.xlane.xlu0 %182
    %184 = vadd.xlane.f32.xlu0 %v163
    %v185 = vpop.xlane.xlu0 %184
    %186 = vadd.xlane.f32.xlu0 %v164
    %v187 = vpop.xlane.xlu0 %186
    %188 = vadd.xlane.f32.xlu0 %v165
    %v189 = vpop.xlane.xlu0 %188
    %190 = vadd.xlane.f32.xlu0 %v166
    %v191 = vpop.xlane.xlu0 %190
    %192 = vadd.xlane.f32.xlu0 %v167
    %v193 = vpop.xlane.xlu0 %192
    %194 = vadd.xlane.f32.xlu0 %v168
    %v195 = vpop.xlane.xlu0 %194
    %196 = vadd.xlane.f32.xlu0 %v169
    %v197 = vpop.xlane.xlu0 %196
    %198 = vadd.xlane.f32.xlu0 %v170
    %v199 = vpop.xlane.xlu0 %198
    %200 = vadd.xlane.f32.xlu0 %v171
    %v201 = vpop.xlane.xlu0 %200
    %202 = vadd.xlane.f32.xlu0 %v172
    %v203 = vpop.xlane.xlu0 %202
    %204 = vadd.xlane.f32.xlu0 %v173
    %v205 = vpop.xlane.xlu0 %204
    %v206 = vmul.f32 %v175, %v125
    %v207 = vmul.f32 %v177, %v125
    %v208 = vmul.f32 %v179, %v125
    %v209 = vmul.f32 %v181, %v125
    %v210 = vmul.f32 %v183, %v125
    %v211 = vmul.f32 %v185, %v125
    %v212 = vmul.f32 %v187, %v125
    %v213 = vmul.f32 %v189, %v125
    %v214 = vmul.f32 %v191, %v125
    %v215 = vmul.f32 %v193, %v125
    %v216 = vmul.f32 %v195, %v125
    %v217 = vmul.f32 %v197, %v125
    %v218 = vmul.f32 %v199, %v125
    %v219 = vmul.f32 %v201, %v125
    %v220 = vmul.f32 %v203, %v125
    %v221 = vmul.f32 %v205, %v125
    %v222 = vadd.f32 %v206, 1e-05
    %v223 = vadd.f32 %v207, 1e-05
    %v224 = vadd.f32 %v208, 1e-05
    %v225 = vadd.f32 %v209, 1e-05
    %v226 = vadd.f32 %v210, 1e-05
    %v227 = vadd.f32 %v211, 1e-05
    %v228 = vadd.f32 %v212, 1e-05
    %v229 = vadd.f32 %v213, 1e-05
    %v230 = vadd.f32 %v214, 1e-05
    %v231 = vadd.f32 %v215, 1e-05
    %v232 = vadd.f32 %v216, 1e-05
    %v233 = vadd.f32 %v217, 1e-05
    %v234 = vadd.f32 %v218, 1e-05
    %v235 = vadd.f32 %v219, 1e-05
    %v236 = vadd.f32 %v220, 1e-05
    %v237 = vadd.f32 %v221, 1e-05
    %v238 = vrsqrt.pop %v222
    %v239 = vrsqrt.pop %v223
    %v240 = vrsqrt.pop %v224
    %v241 = vrsqrt.pop %v225
    %v242 = vrsqrt.pop %v226
    %v243 = vrsqrt.pop %v227
    %v244 = vrsqrt.pop %v228
    %v245 = vrsqrt.pop %v229
    %v246 = vrsqrt.pop %v230
    %v247 = vrsqrt.pop %v231
    %v248 = vrsqrt.pop %v232
    %v249 = vrsqrt.pop %v233
    %v250 = vrsqrt.pop %v234
    %v251 = vrsqrt.pop %v235
    %v252 = vrsqrt.pop %v236
    %v253 = vrsqrt.pop %v237
    %v254 = vmul.f32 %v142, %v238
    %v255 = vmul.f32 %v143, %v239
    %v256 = vmul.f32 %v144, %v240
    %v257 = vmul.f32 %v145, %v241
    %v258 = vmul.f32 %v146, %v242
    %v259 = vmul.f32 %v147, %v243
    %v260 = vmul.f32 %v148, %v244
    %v261 = vmul.f32 %v149, %v245
    %v262 = vmul.f32 %v150, %v246
    %v263 = vmul.f32 %v151, %v247
    %v264 = vmul.f32 %v152, %v248
    %v265 = vmul.f32 %v153, %v249
    %v266 = vmul.f32 %v154, %v250
    %v267 = vmul.f32 %v155, %v251
    %v268 = vmul.f32 %v156, %v252
    %v269 = vmul.f32 %v157, %v253
    %v271 = vlaneseq
    %v272 = vshrl.u32 %v271, 7
    %v273 = vsub.s32 0, %v272
    %v274 = vrot.slane %v91, %v273
    %v276 = vmul.f32 %v254, %v274
    %v277 = vmul.f32 %v255, %v274
    %v278 = vmul.f32 %v256, %v274
    %v279 = vmul.f32 %v257, %v274
    %v280 = vmul.f32 %v258, %v274
    %v281 = vmul.f32 %v259, %v274
    %v282 = vmul.f32 %v260, %v274
    %v283 = vmul.f32 %v261, %v274
    %v284 = vmul.f32 %v262, %v274
    %v285 = vmul.f32 %v263, %v274
    %v286 = vmul.f32 %v264, %v274
    %v287 = vmul.f32 %v265, %v274
    %v288 = vmul.f32 %v266, %v274
    %v289 = vmul.f32 %v267, %v274
    %v290 = vmul.f32 %v268, %v274
    %v291 = vmul.f32 %v269, %v274
    %v293 = vlaneseq
    %v294 = vshrl.u32 %v293, 7
    %v295 = vsub.s32 0, %v294
    %v296 = vrot.slane %v92, %v295
    %v298 = vadd.f32 %v276, %v296
    %v299 = vadd.f32 %v277, %v296
    %v300 = vadd.f32 %v278, %v296
    %v301 = vadd.f32 %v279, %v296
    %v302 = vadd.f32 %v280, %v296
    %v303 = vadd.f32 %v281, %v296
    %v304 = vadd.f32 %v282, %v296
    %v305 = vadd.f32 %v283, %v296
    %v306 = vadd.f32 %v284, %v296
    %v307 = vadd.f32 %v285, %v296
    %v308 = vadd.f32 %v286, %v296
    %v309 = vadd.f32 %v287, %v296
    %v310 = vadd.f32 %v288, %v296
    %v311 = vadd.f32 %v289, %v296
    %v312 = vadd.f32 %v290, %v296
    %v313 = vadd.f32 %v291, %v296
    %v314 = vpack.c.bf16 %v299, %v298
    %v315 = vpack.c.bf16 %v301, %v300
    %v316 = vpack.c.bf16 %v303, %v302
    %v317 = vpack.c.bf16 %v305, %v304
    %v318 = vpack.c.bf16 %v307, %v306
    %v319 = vpack.c.bf16 %v309, %v308
    %v320 = vpack.c.bf16 %v311, %v310
    %v321 = vpack.c.bf16 %v313, %v312
    %v322 = vld [vmem:[#allocation5] sm:$0xff]
    %v323 = vld [vmem:[#allocation5 + $0x8] sm:$0xff]
    %v324 = vld [vmem:[#allocation5 + $0x10] sm:$0xff]
    %v325 = vld [vmem:[#allocation5 + $0x18] sm:$0xff]
    %v326 = vld [vmem:[#allocation5 + $0x20] sm:$0xff]
    %v327 = vld [vmem:[#allocation5 + $0x28] sm:$0xff]
    %v328 = vld [vmem:[#allocation5 + $0x30] sm:$0xff]
    %v329 = vld [vmem:[#allocation5 + $0x38] sm:$0xff]
    %v330 = vld [vmem:[#allocation5 + $0x40] sm:$0xff]
    %v331 = vld [vmem:[#allocation5 + $0x48] sm:$0xff]
    %v332 = vld [vmem:[#allocation5 + $0x50] sm:$0xff]
    %v333 = vld [vmem:[#allocation5 + $0x58] sm:$0xff]
    %v334 = vld [vmem:[#allocation5 + $0x60] sm:$0xff]
    %v335 = vld [vmem:[#allocation5 + $0x68] sm:$0xff]
    %v336 = vld [vmem:[#allocation5 + $0x70] sm:$0xff]
    %v337 = vld [vmem:[#allocation5 + $0x78] sm:$0xff]
    %v338 = vld [vmem:[#allocation5 + $0x80] sm:$0xff]
    %v339 = vld [vmem:[#allocation5 + $0x88] sm:$0xff]
    %v340 = vld [vmem:[#allocation5 + $0x90] sm:$0xff]
    %v341 = vld [vmem:[#allocation5 + $0x98] sm:$0xff]
    %v342 = vld [vmem:[#allocation5 + $0xa0] sm:$0xff]
    %v343 = vld [vmem:[#allocation5 + $0xa8] sm:$0xff]
    %v344 = vld [vmem:[#allocation5 + $0xb0] sm:$0xff]
    %v345 = vld [vmem:[#allocation5 + $0xb8] sm:$0xff]
    %v346 = vld [vmem:[#allocation5 + $0xc0] sm:$0xff]
    %v347 = vld [vmem:[#allocation5 + $0xc8] sm:$0xff]
    %v348 = vld [vmem:[#allocation5 + $0xd0] sm:$0xff]
    %v349 = vld [vmem:[#allocation5 + $0xd8] sm:$0xff]
    %v350 = vld [vmem:[#allocation5 + $0xe0] sm:$0xff]
    %v351 = vld [vmem:[#allocation5 + $0xe8] sm:$0xff]
    %v352 = vld [vmem:[#allocation5 + $0xf0] sm:$0xff]
    %v353 = vld [vmem:[#allocation5 + $0xf8] sm:$0xff]
    %v354 = vld [vmem:[%s4] sm:$0xf]
    %v356 = vlaneseq
    %v357 = vshrl.u32 %v356, 7
    %v358 = vsub.s32 0, %v357
    %v359 = vrot.slane %v354, %v358
    %v360 = vlaneseq
    %v361 = vshrl.u32 %v360, 7
    %v362 = vsub.s32 1, %v361
    %v363 = vrot.slane %v354, %v362
    %v364 = vlaneseq
    %v365 = vshrl.u32 %v364, 7
    %v366 = vsub.s32 2, %v365
    %v367 = vrot.slane %v354, %v366
    %v368 = vlaneseq
    %v369 = vshrl.u32 %v368, 7
    %v370 = vsub.s32 3, %v369
    %v371 = vrot.slane %v354, %v370
    %v408 = vunpack.c.l.b16 %v322
    %v409 = vunpack.c.h.b16 %v322
    %v410 = vunpack.c.l.b16 %v323
    %v411 = vunpack.c.h.b16 %v323
    %v412 = vunpack.c.l.b16 %v324
    %v413 = vunpack.c.h.b16 %v324
    %v414 = vunpack.c.l.b16 %v325
    %v415 = vunpack.c.h.b16 %v325
    %v416 = vunpack.c.l.b16 %v326
    %v417 = vunpack.c.h.b16 %v326
    %v418 = vunpack.c.l.b16 %v327
    %v419 = vunpack.c.h.b16 %v327
    %v420 = vunpack.c.l.b16 %v328
    %v421 = vunpack.c.h.b16 %v328
    %v422 = vunpack.c.l.b16 %v329
    %v423 = vunpack.c.h.b16 %v329
    %v424 = vunpack.c.l.b16 %v330
    %v425 = vunpack.c.h.b16 %v330
    %v426 = vunpack.c.l.b16 %v331
    %v427 = vunpack.c.h.b16 %v331
    %v428 = vunpack.c.l.b16 %v332
    %v429 = vunpack.c.h.b16 %v332
    %v430 = vunpack.c.l.b16 %v333
    %v431 = vunpack.c.h.b16 %v333
    %v432 = vunpack.c.l.b16 %v334
    %v433 = vunpack.c.h.b16 %v334
    %v434 = vunpack.c.l.b16 %v335
    %v435 = vunpack.c.h.b16 %v335
    %v436 = vunpack.c.l.b16 %v336
    %v437 = vunpack.c.h.b16 %v336
    %v438 = vunpack.c.l.b16 %v337
    %v439 = vunpack.c.h.b16 %v337
    %v440 = vunpack.c.l.b16 %v338
    %v441 = vunpack.c.h.b16 %v338
    %v442 = vunpack.c.l.b16 %v339
    %v443 = vunpack.c.h.b16 %v339
    %v444 = vunpack.c.l.b16 %v340
    %v445 = vunpack.c.h.b16 %v340
    %v446 = vunpack.c.l.b16 %v341
    %v447 = vunpack.c.h.b16 %v341
    %v448 = vunpack.c.l.b16 %v342
    %v449 = vunpack.c.h.b16 %v342
    %v450 = vunpack.c.l.b16 %v343
    %v451 = vunpack.c.h.b16 %v343
    %v452 = vunpack.c.l.b16 %v344
    %v453 = vunpack.c.h.b16 %v344
    %v454 = vunpack.c.l.b16 %v345
    %v455 = vunpack.c.h.b16 %v345
    %v456 = vunpack.c.l.b16 %v346
    %v457 = vunpack.c.h.b16 %v346
    %v458 = vunpack.c.l.b16 %v347
    %v459 = vunpack.c.h.b16 %v347
    %v460 = vunpack.c.l.b16 %v348
    %v461 = vunpack.c.h.b16 %v348
    %v462 = vunpack.c.l.b16 %v349
    %v463 = vunpack.c.h.b16 %v349
    %v464 = vunpack.c.l.b16 %v350
    %v465 = vunpack.c.h.b16 %v350
    %v466 = vunpack.c.l.b16 %v351
    %v467 = vunpack.c.h.b16 %v351
    %v468 = vunpack.c.l.b16 %v352
    %v469 = vunpack.c.h.b16 %v352
    %v470 = vunpack.c.l.b16 %v353
    %v471 = vunpack.c.h.b16 %v353
    %v472 = vpack.c.b16 %v412, %v408
    %v473 = vpack.c.b16 %v413, %v409
    %v474 = vpack.c.b16 %v414, %v410
    %v475 = vpack.c.b16 %v415, %v411
    %v476 = vpack.c.b16 %v420, %v416
    %v477 = vpack.c.b16 %v421, %v417
    %v478 = vpack.c.b16 %v422, %v418
    %v479 = vpack.c.b16 %v423, %v419
    %v480 = vpack.c.b16 %v428, %v424
    %v481 = vpack.c.b16 %v429, %v425
    %v482 = vpack.c.b16 %v430, %v426
    %v483 = vpack.c.b16 %v431, %v427
    %v484 = vpack.c.b16 %v436, %v432
    %v485 = vpack.c.b16 %v437, %v433
    %v486 = vpack.c.b16 %v438, %v434
    %v487 = vpack.c.b16 %v439, %v435
    %v488 = vpack.c.b16 %v444, %v440
    %v489 = vpack.c.b16 %v445, %v441
    %v490 = vpack.c.b16 %v446, %v442
    %v491 = vpack.c.b16 %v447, %v443
    %v492 = vpack.c.b16 %v452, %v448
    %v493 = vpack.c.b16 %v453, %v449
    %v494 = vpack.c.b16 %v454, %v450
    %v495 = vpack.c.b16 %v455, %v451
    %v496 = vpack.c.b16 %v460, %v456
    %v497 = vpack.c.b16 %v461, %v457
    %v498 = vpack.c.b16 %v462, %v458
    %v499 = vpack.c.b16 %v463, %v459
    %v500 = vpack.c.b16 %v468, %v464
    %v501 = vpack.c.b16 %v469, %v465
    %v502 = vpack.c.b16 %v470, %v466
    %v503 = vpack.c.b16 %v471, %v467
    %536 = vmatprep.subr.bf16.mxu0 %v473
    %537 = vmatpush1.bf16.msra.mxu0 %v472
    %538 = vmatprep.subr.bf16.mxu0 %v477
    %539 = vmatpush1.bf16.msra.mxu0 %v476
    %540 = vmatprep.subr.bf16.mxu0 %v481
    %541 = vmatpush1.bf16.msra.mxu0 %v480
    %542 = vmatprep.subr.bf16.mxu0 %v485
    %543 = vmatpush1.bf16.msra.mxu0 %v484
    %544 = vmatprep.subr.bf16.mxu0 %v489
    %545 = vmatpush1.bf16.msra.mxu0 %v488
    %546 = vmatprep.subr.bf16.mxu0 %v493
    %547 = vmatpush1.bf16.msra.mxu0 %v492
    %548 = vmatprep.subr.bf16.mxu0 %v497
    %549 = vmatpush1.bf16.msra.mxu0 %v496
    %550 = vmatprep.subr.bf16.mxu0 %v501
    %551 = vmatpush1.bf16.msra.mxu0 %v500
    %552 = vmatprep.subr.bf16.mxu0 0
    %553 = vmatpush1.bf16.msra.mxu0 0
    %554 = vmatprep.subr.bf16.mxu0 0
    %555 = vmatpush1.bf16.msra.mxu0 0
    %556 = vmatprep.subr.bf16.mxu0 0
    %557 = vmatpush1.bf16.msra.mxu0 0
    %558 = vmatprep.subr.bf16.mxu0 0
    %559 = vmatpush1.bf16.msra.mxu0 0
    %560 = vmatprep.subr.bf16.mxu0 0
    %561 = vmatpush1.bf16.msra.mxu0 0
    %562 = vmatprep.subr.bf16.mxu0 0
    %563 = vmatpush1.bf16.msra.mxu0 0
    %564 = vmatprep.subr.bf16.mxu0 0
    %565 = vmatpush1.bf16.msra.mxu0 0
    %566 = vmatprep.subr.bf16.mxu0 0
    %567 = vmatpush1.bf16.msra.mxu0 0
    %568 = vmatprep.mubr.bf16.mxu0 0
    %569 = vmatmul.mubr.bf16.gmra.mrb[0].mxu0 %v314
    %v570 = vpop.f32.mrb[0].mxu0
    %v571 = vadd.f32 %v359, %v570
    %v572 = vpop.f32.mrb[0].mxu0
    %v573 = vadd.f32 %v363, %v572
    %v574 = vpop.f32.mrb[0].mxu0
    %v575 = vadd.f32 %v359, %v574
    %v576 = vpop.f32.mrb[0].mxu0
    %v577 = vadd.f32 %v363, %v576
    %578 = vmatprep.mubr.bf16.mxu0 0
    %579 = vmatmul.mubr.bf16.gmra.mrb[0].mxu0 %v315
    %v580 = vpop.f32.mrb[0].mxu0
    %v581 = vadd.f32 %v359, %v580
    %v582 = vpop.f32.mrb[0].mxu0
    %v583 = vadd.f32 %v363, %v582
    %v584 = vpop.f32.mrb[0].mxu0
    %v585 = vadd.f32 %v359, %v584
    %v586 = vpop.f32.mrb[0].mxu0
    %v587 = vadd.f32 %v363, %v586
    %588 = vmatprep.mubr.bf16.mxu0 0
    %589 = vmatmul.mubr.bf16.gmra.mrb[0].mxu0 %v316
    %v590 = vpop.f32.mrb[0].mxu0
    %v591 = vadd.f32 %v359, %v590
    %v592 = vpop.f32.mrb[0].mxu0
    %v593 = vadd.f32 %v363, %v592
    %v594 = vpop.f32.mrb[0].mxu0
    %v595 = vadd.f32 %v359, %v594
    %v596 = vpop.f32.mrb[0].mxu0
    %v597 = vadd.f32 %v363, %v596
    %598 = vmatprep.mubr.bf16.mxu0 0
    %599 = vmatmul.mubr.bf16.gmra.mrb[0].mxu0 %v317
    %v600 = vpop.f32.mrb[0].mxu0
    %v601 = vadd.f32 %v359, %v600
    %v602 = vpop.f32.mrb[0].mxu0
    %v603 = vadd.f32 %v363, %v602
    %v604 = vpop.f32.mrb[0].mxu0
    %v605 = vadd.f32 %v359, %v604
    %v606 = vpop.f32.mrb[0].mxu0
    %v607 = vadd.f32 %v363, %v606
    %608 = vmatprep.mubr.bf16.mxu0 0
    %609 = vmatmul.mubr.bf16.gmra.mrb[0].mxu0 %v318
    %v610 = vpop.f32.mrb[0].mxu0
    %v611 = vadd.f32 %v359, %v610
    %v612 = vpop.f32.mrb[0].mxu0
    %v613 = vadd.f32 %v363, %v612
    %v614 = vpop.f32.mrb[0].mxu0
    %v615 = vadd.f32 %v359, %v614
    %v616 = vpop.f32.mrb[0].mxu0
    %v617 = vadd.f32 %v363, %v616
    %618 = vmatprep.mubr.bf16.mxu0 0
    %619 = vmatmul.mubr.bf16.gmra.mrb[0].mxu0 %v319
    %v620 = vpop.f32.mrb[0].mxu0
    %v621 = vadd.f32 %v359, %v620
    %v622 = vpop.f32.mrb[0].mxu0
    %v623 = vadd.f32 %v363, %v622
    %v624 = vpop.f32.mrb[0].mxu0
    %v625 = vadd.f32 %v359, %v624
    %v626 = vpop.f32.mrb[0].mxu0
    %v627 = vadd.f32 %v363, %v626
    %628 = vmatprep.mubr.bf16.mxu0 0
    %629 = vmatmul.mubr.bf16.gmra.mrb[0].mxu0 %v320
    %v630 = vpop.f32.mrb[0].mxu0
    %v631 = vadd.f32 %v359, %v630
    %v632 = vpop.f32.mrb[0].mxu0
    %v633 = vadd.f32 %v363, %v632
    %v634 = vpop.f32.mrb[0].mxu0
    %v635 = vadd.f32 %v359, %v634
    %v636 = vpop.f32.mrb[0].mxu0
    %v637 = vadd.f32 %v363, %v636
    %638 = vmatprep.mubr.bf16.mxu0 0
    %639 = vmatmul.mubr.bf16.gmra.mrb[0].mxu0 %v321
    %v640 = vpop.f32.mrb[0].mxu0
    %v641 = vadd.f32 %v359, %v640
    %v642 = vpop.f32.mrb[0].mxu0
    %v643 = vadd.f32 %v363, %v642
    %v644 = vpop.f32.mrb[0].mxu0
    %v645 = vadd.f32 %v359, %v644
    %v646 = vpop.f32.mrb[0].mxu0
    %v647 = vadd.f32 %v363, %v646
    %648 = vdwg.mxu0
    %649 = vmatprep.subr.bf16.mxu0 %v475
    %650 = vmatpush1.bf16.msra.mxu0 %v474
    %651 = vmatprep.subr.bf16.mxu0 %v479
    %652 = vmatpush1.bf16.msra.mxu0 %v478
    %653 = vmatprep.subr.bf16.mxu0 %v483
    %654 = vmatpush1.bf16.msra.mxu0 %v482
    %655 = vmatprep.subr.bf16.mxu0 %v487
    %656 = vmatpush1.bf16.msra.mxu0 %v486
    %657 = vmatprep.subr.bf16.mxu0 %v491
    %658 = vmatpush1.bf16.msra.mxu0 %v490
    %659 = vmatprep.subr.bf16.mxu0 %v495
    %660 = vmatpush1.bf16.msra.mxu0 %v494
    %661 = vmatprep.subr.bf16.mxu0 %v499
    %662 = vmatpush1.bf16.msra.mxu0 %v498
    %663 = vmatprep.subr.bf16.mxu0 %v503
    %664 = vmatpush1.bf16.msra.mxu0 %v502
    %665 = vmatprep.subr.bf16.mxu0 0
    %666 = vmatpush1.bf16.msra.mxu0 0
    %667 = vmatprep.subr.bf16.mxu0 0
    %668 = vmatpush1.bf16.msra.mxu0 0
    %669 = vmatprep.subr.bf16.mxu0 0
    %670 = vmatpush1.bf16.msra.mxu0 0
    %671 = vmatprep.subr.bf16.mxu0 0
    %672 = vmatpush1.bf16.msra.mxu0 0
    %673 = vmatprep.subr.bf16.mxu0 0
    %674 = vmatpush1.bf16.msra.mxu0 0
    %675 = vmatprep.subr.bf16.mxu0 0
    %676 = vmatpush1.bf16.msra.mxu0 0
    %677 = vmatprep.subr.bf16.mxu0 0
    %678 = vmatpush1.bf16.msra.mxu0 0
    %679 = vmatprep.subr.bf16.mxu0 0
    %680 = vmatpush1.bf16.msra.mxu0 0
    %681 = vmatprep.mubr.bf16.mxu0 0
    %682 = vmatmul.mubr.bf16.gmra.mrb[0].mxu0 %v314
    %v683 = vpop.f32.mrb[0].mxu0
    %v684 = vadd.f32 %v367, %v683
    %v685 = vpop.f32.mrb[0].mxu0
    %v686 = vadd.f32 %v371, %v685
    %v687 = vpop.f32.mrb[0].mxu0
    %v688 = vadd.f32 %v367, %v687
    %v689 = vpop.f32.mrb[0].mxu0
    %v690 = vadd.f32 %v371, %v689
    %691 = vmatprep.mubr.bf16.mxu0 0
    %692 = vmatmul.mubr.bf16.gmra.mrb[0].mxu0 %v315
    %v693 = vpop.f32.mrb[0].mxu0
    %v694 = vadd.f32 %v367, %v693
    %v695 = vpop.f32.mrb[0].mxu0
    %v696 = vadd.f32 %v371, %v695
    %v697 = vpop.f32.mrb[0].mxu0
    %v698 = vadd.f32 %v367, %v697
    %v699 = vpop.f32.mrb[0].mxu0
    %v700 = vadd.f32 %v371, %v699
    %701 = vmatprep.mubr.bf16.mxu0 0
    %702 = vmatmul.mubr.bf16.gmra.mrb[0].mxu0 %v316
    %v703 = vpop.f32.mrb[0].mxu0
    %v704 = vadd.f32 %v367, %v703
    %v705 = vpop.f32.mrb[0].mxu0
    %v706 = vadd.f32 %v371, %v705
    %v707 = vpop.f32.mrb[0].mxu0
    %v708 = vadd.f32 %v367, %v707
    %v709 = vpop.f32.mrb[0].mxu0
    %v710 = vadd.f32 %v371, %v709
    %711 = vmatprep.mubr.bf16.mxu0 0
    %712 = vmatmul.mubr.bf16.gmra.mrb[0].mxu0 %v317
    %v713 = vpop.f32.mrb[0].mxu0
    %v714 = vadd.f32 %v367, %v713
    %v715 = vpop.f32.mrb[0].mxu0
    %v716 = vadd.f32 %v371, %v715
    %v717 = vpop.f32.mrb[0].mxu0
    %v718 = vadd.f32 %v367, %v717
    %v719 = vpop.f32.mrb[0].mxu0
    %v720 = vadd.f32 %v371, %v719
    %721 = vmatprep.mubr.bf16.mxu0 0
    %722 = vmatmul.mubr.bf16.gmra.mrb[0].mxu0 %v318
    %v723 = vpop.f32.mrb[0].mxu0
    %v724 = vadd.f32 %v367, %v723
    %v725 = vpop.f32.mrb[0].mxu0
    %v726 = vadd.f32 %v371, %v725
    %v727 = vpop.f32.mrb[0].mxu0
    %v728 = vadd.f32 %v367, %v727
    %v729 = vpop.f32.mrb[0].mxu0
    %v730 = vadd.f32 %v371, %v729
    %731 = vmatprep.mubr.bf16.mxu0 0
    %732 = vmatmul.mubr.bf16.gmra.mrb[0].mxu0 %v319
    %v733 = vpop.f32.mrb[0].mxu0
    %v734 = vadd.f32 %v367, %v733
    %v735 = vpop.f32.mrb[0].mxu0
    %v736 = vadd.f32 %v371, %v735
    %v737 = vpop.f32.mrb[0].mxu0
    %v738 = vadd.f32 %v367, %v737
    %v739 = vpop.f32.mrb[0].mxu0
    %v740 = vadd.f32 %v371, %v739
    %741 = vmatprep.mubr.bf16.mxu0 0
    %742 = vmatmul.mubr.bf16.gmra.mrb[0].mxu0 %v320
    %v743 = vpop.f32.mrb[0].mxu0
    %v744 = vadd.f32 %v367, %v743
    %v745 = vpop.f32.mrb[0].mxu0
    %v746 = vadd.f32 %v371, %v745
    %v747 = vpop.f32.mrb[0].mxu0
    %v748 = vadd.f32 %v367, %v747
    %v749 = vpop.f32.mrb[0].mxu0
    %v750 = vadd.f32 %v371, %v749
    %751 = vmatprep.mubr.bf16.mxu0 0
    %752 = vmatmul.mubr.bf16.gmra.mrb[0].mxu0 %v321
    %v753 = vpop.f32.mrb[0].mxu0
    %v754 = vadd.f32 %v367, %v753
    %v755 = vpop.f32.mrb[0].mxu0
    %v756 = vadd.f32 %v371, %v755
    %v757 = vpop.f32.mrb[0].mxu0
    %v758 = vadd.f32 %v367, %v757
    %v759 = vpop.f32.mrb[0].mxu0
    %v760 = vadd.f32 %v371, %v759
    %761 = vdwg.mxu0
    %v762 = vmul.f32 %v571, 0.5
    %v763 = vmul.f32 %v573, 0.5
    %v764 = vmul.f32 %v684, 0.5
    %v765 = vmul.f32 %v686, 0.5
    %v766 = vmul.f32 %v575, 0.5
    %v767 = vmul.f32 %v577, 0.5
    %v768 = vmul.f32 %v688, 0.5
    %v769 = vmul.f32 %v690, 0.5
    %v770 = vmul.f32 %v581, 0.5
    %v771 = vmul.f32 %v583, 0.5
    %v772 = vmul.f32 %v694, 0.5
    %v773 = vmul.f32 %v696, 0.5
    %v774 = vmul.f32 %v585, 0.5
    %v775 = vmul.f32 %v587, 0.5
    %v776 = vmul.f32 %v698, 0.5
    %v777 = vmul.f32 %v700, 0.5
    %v778 = vmul.f32 %v591, 0.5
    %v779 = vmul.f32 %v593, 0.5
    %v780 = vmul.f32 %v704, 0.5
    %v781 = vmul.f32 %v706, 0.5
    %v782 = vmul.f32 %v595, 0.5
    %v783 = vmul.f32 %v597, 0.5
    %v784 = vmul.f32 %v708, 0.5
    %v785 = vmul.f32 %v710, 0.5
    %v786 = vmul.f32 %v601, 0.5
    %v787 = vmul.f32 %v603, 0.5
    %v788 = vmul.f32 %v714, 0.5
    %v789 = vmul.f32 %v716, 0.5
    %v790 = vmul.f32 %v605, 0.5
    %v791 = vmul.f32 %v607, 0.5
    %v792 = vmul.f32 %v718, 0.5
    %v793 = vmul.f32 %v720, 0.5
    %v794 = vmul.f32 %v611, 0.5
    %v795 = vmul.f32 %v613, 0.5
    %v796 = vmul.f32 %v724, 0.5
    %v797 = vmul.f32 %v726, 0.5
    %v798 = vmul.f32 %v615, 0.5
    %v799 = vmul.f32 %v617, 0.5
    %v800 = vmul.f32 %v728, 0.5
    %v801 = vmul.f32 %v730, 0.5
    %v802 = vmul.f32 %v621, 0.5
    %v803 = vmul.f32 %v623, 0.5
    %v804 = vmul.f32 %v734, 0.5
    %v805 = vmul.f32 %v736, 0.5
    %v806 = vmul.f32 %v625, 0.5
    %v807 = vmul.f32 %v627, 0.5
    %v808 = vmul.f32 %v738, 0.5
    %v809 = vmul.f32 %v740, 0.5
    %v810 = vmul.f32 %v631, 0.5
    %v811 = vmul.f32 %v633, 0.5
    %v812 = vmul.f32 %v744, 0.5
    %v813 = vmul.f32 %v746, 0.5
    %v814 = vmul.f32 %v635, 0.5
    %v815 = vmul.f32 %v637, 0.5
    %v816 = vmul.f32 %v748, 0.5
    %v817 = vmul.f32 %v750, 0.5
    %v818 = vmul.f32 %v641, 0.5
    %v819 = vmul.f32 %v643, 0.5
    %v820 = vmul.f32 %v754, 0.5
    %v821 = vmul.f32 %v756, 0.5
    %v822 = vmul.f32 %v645, 0.5
    %v823 = vmul.f32 %v647, 0.5
    %v824 = vmul.f32 %v758, 0.5
    %v825 = vmul.f32 %v760, 0.5
    %v826 = vmul.f32 %v571, 0.70710677
    %v827 = vmul.f32 %v573, 0.70710677
    %v828 = vmul.f32 %v684, 0.70710677
    %v829 = vmul.f32 %v686, 0.70710677
    %v830 = vmul.f32 %v575, 0.70710677
    %v831 = vmul.f32 %v577, 0.70710677
    %v832 = vmul.f32 %v688, 0.70710677
    %v833 = vmul.f32 %v690, 0.70710677
    %v834 = vmul.f32 %v581, 0.70710677
    %v835 = vmul.f32 %v583, 0.70710677
    %v836 = vmul.f32 %v694, 0.70710677
    %v837 = vmul.f32 %v696, 0.70710677
    %v838 = vmul.f32 %v585, 0.70710677
    %v839 = vmul.f32 %v587, 0.70710677
    %v840 = vmul.f32 %v698, 0.70710677
    %v841 = vmul.f32 %v700, 0.70710677
    %v842 = vmul.f32 %v591, 0.70710677
    %v843 = vmul.f32 %v593, 0.70710677
    %v844 = vmul.f32 %v704, 0.70710677
    %v845 = vmul.f32 %v706, 0.70710677
    %v846 = vmul.f32 %v595, 0.70710677
    %v847 = vmul.f32 %v597, 0.70710677
    %v848 = vmul.f32 %v708, 0.70710677
    %v849 = vmul.f32 %v710, 0.70710677
    %v850 = vmul.f32 %v601, 0.70710677
    %v851 = vmul.f32 %v603, 0.70710677
    %v852 = vmul.f32 %v714, 0.70710677
    %v853 = vmul.f32 %v716, 0.70710677
    %v854 = vmul.f32 %v605, 0.70710677
    %v855 = vmul.f32 %v607, 0.70710677
    %v856 = vmul.f32 %v718, 0.70710677
    %v857 = vmul.f32 %v720, 0.70710677
    %v858 = vmul.f32 %v611, 0.70710677
    %v859 = vmul.f32 %v613, 0.70710677
    %v860 = vmul.f32 %v724, 0.70710677
    %v861 = vmul.f32 %v726, 0.70710677
    %v862 = vmul.f32 %v615, 0.70710677
    %v863 = vmul.f32 %v617, 0.70710677
    %v864 = vmul.f32 %v728, 0.70710677
    %v865 = vmul.f32 %v730, 0.70710677
    %v866 = vmul.f32 %v621, 0.70710677
    %v867 = vmul.f32 %v623, 0.70710677
    %v868 = vmul.f32 %v734, 0.70710677
    %v869 = vmul.f32 %v736, 0.70710677
    %v870 = vmul.f32 %v625, 0.70710677
    %v871 = vmul.f32 %v627, 0.70710677
    %v872 = vmul.f32 %v738, 0.70710677
    %v873 = vmul.f32 %v740, 0.70710677
    %v874 = vmul.f32 %v631, 0.70710677
    %v875 = vmul.f32 %v633, 0.70710677
    %v876 = vmul.f32 %v744, 0.70710677
    %v877 = vmul.f32 %v746, 0.70710677
    %v878 = vmul.f32 %v635, 0.70710677
    %v879 = vmul.f32 %v637, 0.70710677
    %v880 = vmul.f32 %v748, 0.70710677
    %v881 = vmul.f32 %v750, 0.70710677
    %v882 = vmul.f32 %v641, 0.70710677
    %v883 = vmul.f32 %v643, 0.70710677
    %v884 = vmul.f32 %v754, 0.70710677
    %v885 = vmul.f32 %v756, 0.70710677
    %v886 = vmul.f32 %v645, 0.70710677
    %v887 = vmul.f32 %v647, 0.70710677
    %v888 = vmul.f32 %v758, 0.70710677
    %v889 = vmul.f32 %v760, 0.70710677
    %v890 = verf.f32.pop %v826
    %v891 = verf.f32.pop %v827
    %v892 = verf.f32.pop %v828
    %v893 = verf.f32.pop %v829
    %v894 = verf.f32.pop %v830
    %v895 = verf.f32.pop %v831
    %v896 = verf.f32.pop %v832
    %v897 = verf.f32.pop %v833
    %v898 = verf.f32.pop %v834
    %v899 = verf.f32.pop %v835
    %v900 = verf.f32.pop %v836
    %v901 = verf.f32.pop %v837
    %v902 = verf.f32.pop %v838
    %v903 = verf.f32.pop %v839
    %v904 = verf.f32.pop %v840
    %v905 = verf.f32.pop %v841
    %v906 = verf.f32.pop %v842
    %v907 = verf.f32.pop %v843
    %v908 = verf.f32.pop %v844
    %v909 = verf.f32.pop %v845
    %v910 = verf.f32.pop %v846
    %v911 = verf.f32.pop %v847
    %v912 = verf.f32.pop %v848
    %v913 = verf.f32.pop %v849
    %v914 = verf.f32.pop %v850
    %v915 = verf.f32.pop %v851
    %v916 = verf.f32.pop %v852
    %v917 = verf.f32.pop %v853
    %v918 = verf.f32.pop %v854
    %v919 = verf.f32.pop %v855
    %v920 = verf.f32.pop %v856
    %v921 = verf.f32.pop %v857
    %v922 = verf.f32.pop %v858
    %v923 = verf.f32.pop %v859
    %v924 = verf.f32.pop %v860
    %v925 = verf.f32.pop %v861
    %v926 = verf.f32.pop %v862
    %v927 = verf.f32.pop %v863
    %v928 = verf.f32.pop %v864
    %v929 = verf.f32.pop %v865
    %v930 = verf.f32.pop %v866
    %v931 = verf.f32.pop %v867
    %v932 = verf.f32.pop %v868
    %v933 = verf.f32.pop %v869
    %v934 = verf.f32.pop %v870
    %v935 = verf.f32.pop %v871
    %v936 = verf.f32.pop %v872
    %v937 = verf.f32.pop %v873
    %v938 = verf.f32.pop %v874
    %v939 = verf.f32.pop %v875
    %v940 = verf.f32.pop %v876
    %v941 = verf.f32.pop %v877
    %v942 = verf.f32.pop %v878
    %v943 = verf.f32.pop %v879
    %v944 = verf.f32.pop %v880
    %v945 = verf.f32.pop %v881
    %v946 = verf.f32.pop %v882
    %v947 = verf.f32.pop %v883
    %v948 = verf.f32.pop %v884
    %v949 = verf.f32.pop %v885
    %v950 = verf.f32.pop %v886
    %v951 = verf.f32.pop %v887
    %v952 = verf.f32.pop %v888
    %v953 = verf.f32.pop %v889
    %v954 = vadd.f32 %v890, 1.0
    %v955 = vadd.f32 %v891, 1.0
    %v956 = vadd.f32 %v892, 1.0
    %v957 = vadd.f32 %v893, 1.0
    %v958 = vadd.f32 %v894, 1.0
    %v959 = vadd.f32 %v895, 1.0
    %v960 = vadd.f32 %v896, 1.0
    %v961 = vadd.f32 %v897, 1.0
    %v962 = vadd.f32 %v898, 1.0
    %v963 = vadd.f32 %v899, 1.0
    %v964 = vadd.f32 %v900, 1.0
    %v965 = vadd.f32 %v901, 1.0
    %v966 = vadd.f32 %v902, 1.0
    %v967 = vadd.f32 %v903, 1.0
    %v968 = vadd.f32 %v904, 1.0
    %v969 = vadd.f32 %v905, 1.0
    %v970 = vadd.f32 %v906, 1.0
    %v971 = vadd.f32 %v907, 1.0
    %v972 = vadd.f32 %v908, 1.0
    %v973 = vadd.f32 %v909, 1.0
    %v974 = vadd.f32 %v910, 1.0
    %v975 = vadd.f32 %v911, 1.0
    %v976 = vadd.f32 %v912, 1.0
    %v977 = vadd.f32 %v913, 1.0
    %v978 = vadd.f32 %v914, 1.0
    %v979 = vadd.f32 %v915, 1.0
    %v980 = vadd.f32 %v916, 1.0
    %v981 = vadd.f32 %v917, 1.0
    %v982 = vadd.f32 %v918, 1.0
    %v983 = vadd.f32 %v919, 1.0
    %v984 = vadd.f32 %v920, 1.0
    %v985 = vadd.f32 %v921, 1.0
    %v986 = vadd.f32 %v922, 1.0
    %v987 = vadd.f32 %v923, 1.0
    %v988 = vadd.f32 %v924, 1.0
    %v989 = vadd.f32 %v925, 1.0
    %v990 = vadd.f32 %v926, 1.0
    %v991 = vadd.f32 %v927, 1.0
    %v992 = vadd.f32 %v928, 1.0
    %v993 = vadd.f32 %v929, 1.0
    %v994 = vadd.f32 %v930, 1.0
    %v995 = vadd.f32 %v931, 1.0
    %v996 = vadd.f32 %v932, 1.0
    %v997 = vadd.f32 %v933, 1.0
    %v998 = vadd.f32 %v934, 1.0
    %v999 = vadd.f32 %v935, 1.0
    %v1000 = vadd.f32 %v936, 1.0
    %v1001 = vadd.f32 %v937, 1.0
    %v1002 = vadd.f32 %v938, 1.0
    %v1003 = vadd.f32 %v939, 1.0
    %v1004 = vadd.f32 %v940, 1.0
    %v1005 = vadd.f32 %v941, 1.0
    %v1006 = vadd.f32 %v942, 1.0
    %v1007 = vadd.f32 %v943, 1.0
    %v1008 = vadd.f32 %v944, 1.0
    %v1009 = vadd.f32 %v945, 1.0
    %v1010 = vadd.f32 %v946, 1.0
    %v1011 = vadd.f32 %v947, 1.0
    %v1012 = vadd.f32 %v948, 1.0
    %v1013 = vadd.f32 %v949, 1.0
    %v1014 = vadd.f32 %v950, 1.0
    %v1015 = vadd.f32 %v951, 1.0
    %v1016 = vadd.f32 %v952, 1.0
    %v1017 = vadd.f32 %v953, 1.0
    %v1018 = vmul.f32 %v762, %v954
    %v1019 = vmul.f32 %v763, %v955
    %v1020 = vmul.f32 %v764, %v956
    %v1021 = vmul.f32 %v765, %v957
    %v1022 = vmul.f32 %v766, %v958
    %v1023 = vmul.f32 %v767, %v959
    %v1024 = vmul.f32 %v768, %v960
    %v1025 = vmul.f32 %v769, %v961
    %v1026 = vmul.f32 %v770, %v962
    %v1027 = vmul.f32 %v771, %v963
    %v1028 = vmul.f32 %v772, %v964
    %v1029 = vmul.f32 %v773, %v965
    %v1030 = vmul.f32 %v774, %v966
    %v1031 = vmul.f32 %v775, %v967
    %v1032 = vmul.f32 %v776, %v968
    %v1033 = vmul.f32 %v777, %v969
    %v1034 = vmul.f32 %v778, %v970
    %v1035 = vmul.f32 %v779, %v971
    %v1036 = vmul.f32 %v780, %v972
    %v1037 = vmul.f32 %v781, %v973
    %v1038 = vmul.f32 %v782, %v974
    %v1039 = vmul.f32 %v783, %v975
    %v1040 = vmul.f32 %v784, %v976
    %v1041 = vmul.f32 %v785, %v977
    %v1042 = vmul.f32 %v786, %v978
    %v1043 = vmul.f32 %v787, %v979
    %v1044 = vmul.f32 %v788, %v980
    %v1045 = vmul.f32 %v789, %v981
    %v1046 = vmul.f32 %v790, %v982
    %v1047 = vmul.f32 %v791, %v983
    %v1048 = vmul.f32 %v792, %v984
    %v1049 = vmul.f32 %v793, %v985
    %v1050 = vmul.f32 %v794, %v986
    %v1051 = vmul.f32 %v795, %v987
    %v1052 = vmul.f32 %v796, %v988
    %v1053 = vmul.f32 %v797, %v989
    %v1054 = vmul.f32 %v798, %v990
    %v1055 = vmul.f32 %v799, %v991
    %v1056 = vmul.f32 %v800, %v992
    %v1057 = vmul.f32 %v801, %v993
    %v1058 = vmul.f32 %v802, %v994
    %v1059 = vmul.f32 %v803, %v995
    %v1060 = vmul.f32 %v804, %v996
    %v1061 = vmul.f32 %v805, %v997
    %v1062 = vmul.f32 %v806, %v998
    %v1063 = vmul.f32 %v807, %v999
    %v1064 = vmul.f32 %v808, %v1000
    %v1065 = vmul.f32 %v809, %v1001
    %v1066 = vmul.f32 %v810, %v1002
    %v1067 = vmul.f32 %v811, %v1003
    %v1068 = vmul.f32 %v812, %v1004
    %v1069 = vmul.f32 %v813, %v1005
    %v1070 = vmul.f32 %v814, %v1006
    %v1071 = vmul.f32 %v815, %v1007
    %v1072 = vmul.f32 %v816, %v1008
    %v1073 = vmul.f32 %v817, %v1009
    %v1074 = vmul.f32 %v818, %v1010
    %v1075 = vmul.f32 %v819, %v1011
    %v1076 = vmul.f32 %v820, %v1012
    %v1077 = vmul.f32 %v821, %v1013
    %v1078 = vmul.f32 %v822, %v1014
    %v1079 = vmul.f32 %v823, %v1015
    %v1080 = vmul.f32 %v824, %v1016
    %v1081 = vmul.f32 %v825, %v1017
    %v1082 = vld [vmem:[%s5] sm:$0xf]
    %v1083 = vld [vmem:[%s6] sm:$0xf]
    %v1084 = vadd.f32 %v1018, %v1019
    %v1085 = vadd.f32 %v1084, %v1020
    %v1086 = vadd.f32 %v1085, %v1021
    %1087 = vadd.xlane.f32.xlu0 %v1086
    %v1088 = vpop.xlane.xlu0 %1087
    %v1089 = vadd.f32 %v1022, %v1023
    %v1090 = vadd.f32 %v1089, %v1024
    %v1091 = vadd.f32 %v1090, %v1025
    %1092 = vadd.xlane.f32.xlu0 %v1091
    %v1093 = vpop.xlane.xlu0 %1092
    %v1094 = vadd.f32 %v1026, %v1027
    %v1095 = vadd.f32 %v1094, %v1028
    %v1096 = vadd.f32 %v1095, %v1029
    %1097 = vadd.xlane.f32.xlu0 %v1096
    %v1098 = vpop.xlane.xlu0 %1097
    %v1099 = vadd.f32 %v1030, %v1031
    %v1100 = vadd.f32 %v1099, %v1032
    %v1101 = vadd.f32 %v1100, %v1033
    %1102 = vadd.xlane.f32.xlu0 %v1101
    %v1103 = vpop.xlane.xlu0 %1102
    %v1104 = vadd.f32 %v1034, %v1035
    %v1105 = vadd.f32 %v1104, %v1036
    %v1106 = vadd.f32 %v1105, %v1037
    %1107 = vadd.xlane.f32.xlu0 %v1106
    %v1108 = vpop.xlane.xlu0 %1107
    %v1109 = vadd.f32 %v1038, %v1039
    %v1110 = vadd.f32 %v1109, %v1040
    %v1111 = vadd.f32 %v1110, %v1041
    %1112 = vadd.xlane.f32.xlu0 %v1111
    %v1113 = vpop.xlane.xlu0 %1112
    %v1114 = vadd.f32 %v1042, %v1043
    %v1115 = vadd.f32 %v1114, %v1044
    %v1116 = vadd.f32 %v1115, %v1045
    %1117 = vadd.xlane.f32.xlu0 %v1116
    %v1118 = vpop.xlane.xlu0 %1117
    %v1119 = vadd.f32 %v1046, %v1047
    %v1120 = vadd.f32 %v1119, %v1048
    %v1121 = vadd.f32 %v1120, %v1049
    %1122 = vadd.xlane.f32.xlu0 %v1121
    %v1123 = vpop.xlane.xlu0 %1122
    %v1124 = vadd.f32 %v1050, %v1051
    %v1125 = vadd.f32 %v1124, %v1052
    %v1126 = vadd.f32 %v1125, %v1053
    %1127 = vadd.xlane.f32.xlu0 %v1126
    %v1128 = vpop.xlane.xlu0 %1127
    %v1129 = vadd.f32 %v1054, %v1055
    %v1130 = vadd.f32 %v1129, %v1056
    %v1131 = vadd.f32 %v1130, %v1057
    %1132 = vadd.xlane.f32.xlu0 %v1131
    %v1133 = vpop.xlane.xlu0 %1132
    %v1134 = vadd.f32 %v1058, %v1059
    %v1135 = vadd.f32 %v1134, %v1060
    %v1136 = vadd.f32 %v1135, %v1061
    %1137 = vadd.xlane.f32.xlu0 %v1136
    %v1138 = vpop.xlane.xlu0 %1137
    %v1139 = vadd.f32 %v1062, %v1063
    %v1140 = vadd.f32 %v1139, %v1064
    %v1141 = vadd.f32 %v1140, %v1065
    %1142 = vadd.xlane.f32.xlu0 %v1141
    %v1143 = vpop.xlane.xlu0 %1142
    %v1144 = vadd.f32 %v1066, %v1067
    %v1145 = vadd.f32 %v1144, %v1068
    %v1146 = vadd.f32 %v1145, %v1069
    %1147 = vadd.xlane.f32.xlu0 %v1146
    %v1148 = vpop.xlane.xlu0 %1147
    %v1149 = vadd.f32 %v1070, %v1071
    %v1150 = vadd.f32 %v1149, %v1072
    %v1151 = vadd.f32 %v1150, %v1073
    %1152 = vadd.xlane.f32.xlu0 %v1151
    %v1153 = vpop.xlane.xlu0 %1152
    %v1154 = vadd.f32 %v1074, %v1075
    %v1155 = vadd.f32 %v1154, %v1076
    %v1156 = vadd.f32 %v1155, %v1077
    %1157 = vadd.xlane.f32.xlu0 %v1156
    %v1158 = vpop.xlane.xlu0 %1157
    %v1159 = vadd.f32 %v1078, %v1079
    %v1160 = vadd.f32 %v1159, %v1080
    %v1161 = vadd.f32 %v1160, %v1081
    %1162 = vadd.xlane.f32.xlu0 %v1161
    %v1163 = vpop.xlane.xlu0 %1162
    %v1164 = vrcp.pop 512.0
    %v1165 = vmul.f32 %v1088, %v1164
    %v1166 = vmul.f32 %v1093, %v1164
    %v1167 = vmul.f32 %v1098, %v1164
    %v1168 = vmul.f32 %v1103, %v1164
    %v1169 = vmul.f32 %v1108, %v1164
    %v1170 = vmul.f32 %v1113, %v1164
    %v1171 = vmul.f32 %v1118, %v1164
    %v1172 = vmul.f32 %v1123, %v1164
    %v1173 = vmul.f32 %v1128, %v1164
    %v1174 = vmul.f32 %v1133, %v1164
    %v1175 = vmul.f32 %v1138, %v1164
    %v1176 = vmul.f32 %v1143, %v1164
    %v1177 = vmul.f32 %v1148, %v1164
    %v1178 = vmul.f32 %v1153, %v1164
    %v1179 = vmul.f32 %v1158, %v1164
    %v1180 = vmul.f32 %v1163, %v1164
    %v1181 = vsub.f32 %v1018, %v1165
    %v1182 = vsub.f32 %v1019, %v1165
    %v1183 = vsub.f32 %v1020, %v1165
    %v1184 = vsub.f32 %v1021, %v1165
    %v1185 = vsub.f32 %v1022, %v1166
    %v1186 = vsub.f32 %v1023, %v1166
    %v1187 = vsub.f32 %v1024, %v1166
    %v1188 = vsub.f32 %v1025, %v1166
    %v1189 = vsub.f32 %v1026, %v1167
    %v1190 = vsub.f32 %v1027, %v1167
    %v1191 = vsub.f32 %v1028, %v1167
    %v1192 = vsub.f32 %v1029, %v1167
    %v1193 = vsub.f32 %v1030, %v1168
    %v1194 = vsub.f32 %v1031, %v1168
    %v1195 = vsub.f32 %v1032, %v1168
    %v1196 = vsub.f32 %v1033, %v1168
    %v1197 = vsub.f32 %v1034, %v1169
    %v1198 = vsub.f32 %v1035, %v1169
    %v1199 = vsub.f32 %v1036, %v1169
    %v1200 = vsub.f32 %v1037, %v1169
    %v1201 = vsub.f32 %v1038, %v1170
    %v1202 = vsub.f32 %v1039, %v1170
    %v1203 = vsub.f32 %v1040, %v1170
    %v1204 = vsub.f32 %v1041, %v1170
    %v1205 = vsub.f32 %v1042, %v1171
    %v1206 = vsub.f32 %v1043, %v1171
    %v1207 = vsub.f32 %v1044, %v1171
    %v1208 = vsub.f32 %v1045, %v1171
    %v1209 = vsub.f32 %v1046, %v1172
    %v1210 = vsub.f32 %v1047, %v1172
    %v1211 = vsub.f32 %v1048, %v1172
    %v1212 = vsub.f32 %v1049, %v1172
    %v1213 = vsub.f32 %v1050, %v1173
    %v1214 = vsub.f32 %v1051, %v1173
    %v1215 = vsub.f32 %v1052, %v1173
    %v1216 = vsub.f32 %v1053, %v1173
    %v1217 = vsub.f32 %v1054, %v1174
    %v1218 = vsub.f32 %v1055, %v1174
    %v1219 = vsub.f32 %v1056, %v1174
    %v1220 = vsub.f32 %v1057, %v1174
    %v1221 = vsub.f32 %v1058, %v1175
    %v1222 = vsub.f32 %v1059, %v1175
    %v1223 = vsub.f32 %v1060, %v1175
    %v1224 = vsub.f32 %v1061, %v1175
    %v1225 = vsub.f32 %v1062, %v1176
    %v1226 = vsub.f32 %v1063, %v1176
    %v1227 = vsub.f32 %v1064, %v1176
    %v1228 = vsub.f32 %v1065, %v1176
    %v1229 = vsub.f32 %v1066, %v1177
    %v1230 = vsub.f32 %v1067, %v1177
    %v1231 = vsub.f32 %v1068, %v1177
    %v1232 = vsub.f32 %v1069, %v1177
    %v1233 = vsub.f32 %v1070, %v1178
    %v1234 = vsub.f32 %v1071, %v1178
    %v1235 = vsub.f32 %v1072, %v1178
    %v1236 = vsub.f32 %v1073, %v1178
    %v1237 = vsub.f32 %v1074, %v1179
    %v1238 = vsub.f32 %v1075, %v1179
    %v1239 = vsub.f32 %v1076, %v1179
    %v1240 = vsub.f32 %v1077, %v1179
    %v1241 = vsub.f32 %v1078, %v1180
    %v1242 = vsub.f32 %v1079, %v1180
    %v1243 = vsub.f32 %v1080, %v1180
    %v1244 = vsub.f32 %v1081, %v1180
    %v1245 = vmul.f32 %v1181, %v1181
    %v1246 = vmul.f32 %v1182, %v1182
    %v1247 = vmul.f32 %v1183, %v1183
    %v1248 = vmul.f32 %v1184, %v1184
    %v1249 = vmul.f32 %v1185, %v1185
    %v1250 = vmul.f32 %v1186, %v1186
    %v1251 = vmul.f32 %v1187, %v1187
    %v1252 = vmul.f32 %v1188, %v1188
    %v1253 = vmul.f32 %v1189, %v1189
    %v1254 = vmul.f32 %v1190, %v1190
    %v1255 = vmul.f32 %v1191, %v1191
    %v1256 = vmul.f32 %v1192, %v1192
    %v1257 = vmul.f32 %v1193, %v1193
    %v1258 = vmul.f32 %v1194, %v1194
    %v1259 = vmul.f32 %v1195, %v1195
    %v1260 = vmul.f32 %v1196, %v1196
    %v1261 = vmul.f32 %v1197, %v1197
    %v1262 = vmul.f32 %v1198, %v1198
    %v1263 = vmul.f32 %v1199, %v1199
    %v1264 = vmul.f32 %v1200, %v1200
    %v1265 = vmul.f32 %v1201, %v1201
    %v1266 = vmul.f32 %v1202, %v1202
    %v1267 = vmul.f32 %v1203, %v1203
    %v1268 = vmul.f32 %v1204, %v1204
    %v1269 = vmul.f32 %v1205, %v1205
    %v1270 = vmul.f32 %v1206, %v1206
    %v1271 = vmul.f32 %v1207, %v1207
    %v1272 = vmul.f32 %v1208, %v1208
    %v1273 = vmul.f32 %v1209, %v1209
    %v1274 = vmul.f32 %v1210, %v1210
    %v1275 = vmul.f32 %v1211, %v1211
    %v1276 = vmul.f32 %v1212, %v1212
    %v1277 = vmul.f32 %v1213, %v1213
    %v1278 = vmul.f32 %v1214, %v1214
    %v1279 = vmul.f32 %v1215, %v1215
    %v1280 = vmul.f32 %v1216, %v1216
    %v1281 = vmul.f32 %v1217, %v1217
    %v1282 = vmul.f32 %v1218, %v1218
    %v1283 = vmul.f32 %v1219, %v1219
    %v1284 = vmul.f32 %v1220, %v1220
    %v1285 = vmul.f32 %v1221, %v1221
    %v1286 = vmul.f32 %v1222, %v1222
    %v1287 = vmul.f32 %v1223, %v1223
    %v1288 = vmul.f32 %v1224, %v1224
    %v1289 = vmul.f32 %v1225, %v1225
    %v1290 = vmul.f32 %v1226, %v1226
    %v1291 = vmul.f32 %v1227, %v1227
    %v1292 = vmul.f32 %v1228, %v1228
    %v1293 = vmul.f32 %v1229, %v1229
    %v1294 = vmul.f32 %v1230, %v1230
    %v1295 = vmul.f32 %v1231, %v1231
    %v1296 = vmul.f32 %v1232, %v1232
    %v1297 = vmul.f32 %v1233, %v1233
    %v1298 = vmul.f32 %v1234, %v1234
    %v1299 = vmul.f32 %v1235, %v1235
    %v1300 = vmul.f32 %v1236, %v1236
    %v1301 = vmul.f32 %v1237, %v1237
    %v1302 = vmul.f32 %v1238, %v1238
    %v1303 = vmul.f32 %v1239, %v1239
    %v1304 = vmul.f32 %v1240, %v1240
    %v1305 = vmul.f32 %v1241, %v1241
    %v1306 = vmul.f32 %v1242, %v1242
    %v1307 = vmul.f32 %v1243, %v1243
    %v1308 = vmul.f32 %v1244, %v1244
    %v1309 = vadd.f32 %v1245, %v1246
    %v1310 = vadd.f32 %v1309, %v1247
    %v1311 = vadd.f32 %v1310, %v1248
    %1312 = vadd.xlane.f32.xlu0 %v1311
    %v1313 = vpop.xlane.xlu0 %1312
    %v1314 = vadd.f32 %v1249, %v1250
    %v1315 = vadd.f32 %v1314, %v1251
    %v1316 = vadd.f32 %v1315, %v1252
    %1317 = vadd.xlane.f32.xlu0 %v1316
    %v1318 = vpop.xlane.xlu0 %1317
    %v1319 = vadd.f32 %v1253, %v1254
    %v1320 = vadd.f32 %v1319, %v1255
    %v1321 = vadd.f32 %v1320, %v1256
    %1322 = vadd.xlane.f32.xlu0 %v1321
    %v1323 = vpop.xlane.xlu0 %1322
    %v1324 = vadd.f32 %v1257, %v1258
    %v1325 = vadd.f32 %v1324, %v1259
    %v1326 = vadd.f32 %v1325, %v1260
    %1327 = vadd.xlane.f32.xlu0 %v1326
    %v1328 = vpop.xlane.xlu0 %1327
    %v1329 = vadd.f32 %v1261, %v1262
    %v1330 = vadd.f32 %v1329, %v1263
    %v1331 = vadd.f32 %v1330, %v1264
    %1332 = vadd.xlane.f32.xlu0 %v1331
    %v1333 = vpop.xlane.xlu0 %1332
    %v1334 = vadd.f32 %v1265, %v1266
    %v1335 = vadd.f32 %v1334, %v1267
    %v1336 = vadd.f32 %v1335, %v1268
    %1337 = vadd.xlane.f32.xlu0 %v1336
    %v1338 = vpop.xlane.xlu0 %1337
    %v1339 = vadd.f32 %v1269, %v1270
    %v1340 = vadd.f32 %v1339, %v1271
    %v1341 = vadd.f32 %v1340, %v1272
    %1342 = vadd.xlane.f32.xlu0 %v1341
    %v1343 = vpop.xlane.xlu0 %1342
    %v1344 = vadd.f32 %v1273, %v1274
    %v1345 = vadd.f32 %v1344, %v1275
    %v1346 = vadd.f32 %v1345, %v1276
    %1347 = vadd.xlane.f32.xlu0 %v1346
    %v1348 = vpop.xlane.xlu0 %1347
    %v1349 = vadd.f32 %v1277, %v1278
    %v1350 = vadd.f32 %v1349, %v1279
    %v1351 = vadd.f32 %v1350, %v1280
    %1352 = vadd.xlane.f32.xlu0 %v1351
    %v1353 = vpop.xlane.xlu0 %1352
    %v1354 = vadd.f32 %v1281, %v1282
    %v1355 = vadd.f32 %v1354, %v1283
    %v1356 = vadd.f32 %v1355, %v1284
    %1357 = vadd.xlane.f32.xlu0 %v1356
    %v1358 = vpop.xlane.xlu0 %1357
    %v1359 = vadd.f32 %v1285, %v1286
    %v1360 = vadd.f32 %v1359, %v1287
    %v1361 = vadd.f32 %v1360, %v1288
    %1362 = vadd.xlane.f32.xlu0 %v1361
    %v1363 = vpop.xlane.xlu0 %1362
    %v1364 = vadd.f32 %v1289, %v1290
    %v1365 = vadd.f32 %v1364, %v1291
    %v1366 = vadd.f32 %v1365, %v1292
    %1367 = vadd.xlane.f32.xlu0 %v1366
    %v1368 = vpop.xlane.xlu0 %1367
    %v1369 = vadd.f32 %v1293, %v1294
    %v1370 = vadd.f32 %v1369, %v1295
    %v1371 = vadd.f32 %v1370, %v1296
    %1372 = vadd.xlane.f32.xlu0 %v1371
    %v1373 = vpop.xlane.xlu0 %1372
    %v1374 = vadd.f32 %v1297, %v1298
    %v1375 = vadd.f32 %v1374, %v1299
    %v1376 = vadd.f32 %v1375, %v1300
    %1377 = vadd.xlane.f32.xlu0 %v1376
    %v1378 = vpop.xlane.xlu0 %1377
    %v1379 = vadd.f32 %v1301, %v1302
    %v1380 = vadd.f32 %v1379, %v1303
    %v1381 = vadd.f32 %v1380, %v1304
    %1382 = vadd.xlane.f32.xlu0 %v1381
    %v1383 = vpop.xlane.xlu0 %1382
    %v1384 = vadd.f32 %v1305, %v1306
    %v1385 = vadd.f32 %v1384, %v1307
    %v1386 = vadd.f32 %v1385, %v1308
    %1387 = vadd.xlane.f32.xlu0 %v1386
    %v1388 = vpop.xlane.xlu0 %1387
    %v1389 = vmul.f32 %v1313, %v1164
    %v1390 = vmul.f32 %v1318, %v1164
    %v1391 = vmul.f32 %v1323, %v1164
    %v1392 = vmul.f32 %v1328, %v1164
    %v1393 = vmul.f32 %v1333, %v1164
    %v1394 = vmul.f32 %v1338, %v1164
    %v1395 = vmul.f32 %v1343, %v1164
    %v1396 = vmul.f32 %v1348, %v1164
    %v1397 = vmul.f32 %v1353, %v1164
    %v1398 = vmul.f32 %v1358, %v1164
    %v1399 = vmul.f32 %v1363, %v1164
    %v1400 = vmul.f32 %v1368, %v1164
    %v1401 = vmul.f32 %v1373, %v1164
    %v1402 = vmul.f32 %v1378, %v1164
    %v1403 = vmul.f32 %v1383, %v1164
    %v1404 = vmul.f32 %v1388, %v1164
    %v1405 = vadd.f32 %v1389, 1e-05
    %v1406 = vadd.f32 %v1390, 1e-05
    %v1407 = vadd.f32 %v1391, 1e-05
    %v1408 = vadd.f32 %v1392, 1e-05
    %v1409 = vadd.f32 %v1393, 1e-05
    %v1410 = vadd.f32 %v1394, 1e-05
    %v1411 = vadd.f32 %v1395, 1e-05
    %v1412 = vadd.f32 %v1396, 1e-05
    %v1413 = vadd.f32 %v1397, 1e-05
    %v1414 = vadd.f32 %v1398, 1e-05
    %v1415 = vadd.f32 %v1399, 1e-05
    %v1416 = vadd.f32 %v1400, 1e-05
    %v1417 = vadd.f32 %v1401, 1e-05
    %v1418 = vadd.f32 %v1402, 1e-05
    %v1419 = vadd.f32 %v1403, 1e-05
    %v1420 = vadd.f32 %v1404, 1e-05
    %v1421 = vrsqrt.pop %v1405
    %v1422 = vrsqrt.pop %v1406
    %v1423 = vrsqrt.pop %v1407
    %v1424 = vrsqrt.pop %v1408
    %v1425 = vrsqrt.pop %v1409
    %v1426 = vrsqrt.pop %v1410
    %v1427 = vrsqrt.pop %v1411
    %v1428 = vrsqrt.pop %v1412
    %v1429 = vrsqrt.pop %v1413
    %v1430 = vrsqrt.pop %v1414
    %v1431 = vrsqrt.pop %v1415
    %v1432 = vrsqrt.pop %v1416
    %v1433 = vrsqrt.pop %v1417
    %v1434 = vrsqrt.pop %v1418
    %v1435 = vrsqrt.pop %v1419
    %v1436 = vrsqrt.pop %v1420
    %v1437 = vmul.f32 %v1181, %v1421
    %v1438 = vmul.f32 %v1182, %v1421
    %v1439 = vmul.f32 %v1183, %v1421
    %v1440 = vmul.f32 %v1184, %v1421
    %v1441 = vmul.f32 %v1185, %v1422
    %v1442 = vmul.f32 %v1186, %v1422
    %v1443 = vmul.f32 %v1187, %v1422
    %v1444 = vmul.f32 %v1188, %v1422
    %v1445 = vmul.f32 %v1189, %v1423
    %v1446 = vmul.f32 %v1190, %v1423
    %v1447 = vmul.f32 %v1191, %v1423
    %v1448 = vmul.f32 %v1192, %v1423
    %v1449 = vmul.f32 %v1193, %v1424
    %v1450 = vmul.f32 %v1194, %v1424
    %v1451 = vmul.f32 %v1195, %v1424
    %v1452 = vmul.f32 %v1196, %v1424
    %v1453 = vmul.f32 %v1197, %v1425
    %v1454 = vmul.f32 %v1198, %v1425
    %v1455 = vmul.f32 %v1199, %v1425
    %v1456 = vmul.f32 %v1200, %v1425
    %v1457 = vmul.f32 %v1201, %v1426
    %v1458 = vmul.f32 %v1202, %v1426
    %v1459 = vmul.f32 %v1203, %v1426
    %v1460 = vmul.f32 %v1204, %v1426
    %v1461 = vmul.f32 %v1205, %v1427
    %v1462 = vmul.f32 %v1206, %v1427
    %v1463 = vmul.f32 %v1207, %v1427
    %v1464 = vmul.f32 %v1208, %v1427
    %v1465 = vmul.f32 %v1209, %v1428
    %v1466 = vmul.f32 %v1210, %v1428
    %v1467 = vmul.f32 %v1211, %v1428
    %v1468 = vmul.f32 %v1212, %v1428
    %v1469 = vmul.f32 %v1213, %v1429
    %v1470 = vmul.f32 %v1214, %v1429
    %v1471 = vmul.f32 %v1215, %v1429
    %v1472 = vmul.f32 %v1216, %v1429
    %v1473 = vmul.f32 %v1217, %v1430
    %v1474 = vmul.f32 %v1218, %v1430
    %v1475 = vmul.f32 %v1219, %v1430
    %v1476 = vmul.f32 %v1220, %v1430
    %v1477 = vmul.f32 %v1221, %v1431
    %v1478 = vmul.f32 %v1222, %v1431
    %v1479 = vmul.f32 %v1223, %v1431
    %v1480 = vmul.f32 %v1224, %v1431
    %v1481 = vmul.f32 %v1225, %v1432
    %v1482 = vmul.f32 %v1226, %v1432
    %v1483 = vmul.f32 %v1227, %v1432
    %v1484 = vmul.f32 %v1228, %v1432
    %v1485 = vmul.f32 %v1229, %v1433
    %v1486 = vmul.f32 %v1230, %v1433
    %v1487 = vmul.f32 %v1231, %v1433
    %v1488 = vmul.f32 %v1232, %v1433
    %v1489 = vmul.f32 %v1233, %v1434
    %v1490 = vmul.f32 %v1234, %v1434
    %v1491 = vmul.f32 %v1235, %v1434
    %v1492 = vmul.f32 %v1236, %v1434
    %v1493 = vmul.f32 %v1237, %v1435
    %v1494 = vmul.f32 %v1238, %v1435
    %v1495 = vmul.f32 %v1239, %v1435
    %v1496 = vmul.f32 %v1240, %v1435
    %v1497 = vmul.f32 %v1241, %v1436
    %v1498 = vmul.f32 %v1242, %v1436
    %v1499 = vmul.f32 %v1243, %v1436
    %v1500 = vmul.f32 %v1244, %v1436
    %v1502 = vlaneseq
    %v1503 = vshrl.u32 %v1502, 7
    %v1504 = vsub.s32 0, %v1503
    %v1505 = vrot.slane %v1082, %v1504
    %v1506 = vlaneseq
    %v1507 = vshrl.u32 %v1506, 7
    %v1508 = vsub.s32 1, %v1507
    %v1509 = vrot.slane %v1082, %v1508
    %v1510 = vlaneseq
    %v1511 = vshrl.u32 %v1510, 7
    %v1512 = vsub.s32 2, %v1511
    %v1513 = vrot.slane %v1082, %v1512
    %v1514 = vlaneseq
    %v1515 = vshrl.u32 %v1514, 7
    %v1516 = vsub.s32 3, %v1515
    %v1517 = vrot.slane %v1082, %v1516
    %v1522 = vmul.f32 %v1437, %v1505
    %v1523 = vmul.f32 %v1438, %v1509
    %v1524 = vmul.f32 %v1439, %v1513
    %v1525 = vmul.f32 %v1440, %v1517
    %v1526 = vmul.f32 %v1441, %v1505
    %v1527 = vmul.f32 %v1442, %v1509
    %v1528 = vmul.f32 %v1443, %v1513
    %v1529 = vmul.f32 %v1444, %v1517
    %v1530 = vmul.f32 %v1445, %v1505
    %v1531 = vmul.f32 %v1446, %v1509
    %v1532 = vmul.f32 %v1447, %v1513
    %v1533 = vmul.f32 %v1448, %v1517
    %v1534 = vmul.f32 %v1449, %v1505
    %v1535 = vmul.f32 %v1450, %v1509
    %v1536 = vmul.f32 %v1451, %v1513
    %v1537 = vmul.f32 %v1452, %v1517
    %v1538 = vmul.f32 %v1453, %v1505
    %v1539 = vmul.f32 %v1454, %v1509
    %v1540 = vmul.f32 %v1455, %v1513
    %v1541 = vmul.f32 %v1456, %v1517
    %v1542 = vmul.f32 %v1457, %v1505
    %v1543 = vmul.f32 %v1458, %v1509
    %v1544 = vmul.f32 %v1459, %v1513
    %v1545 = vmul.f32 %v1460, %v1517
    %v1546 = vmul.f32 %v1461, %v1505
    %v1547 = vmul.f32 %v1462, %v1509
    %v1548 = vmul.f32 %v1463, %v1513
    %v1549 = vmul.f32 %v1464, %v1517
    %v1550 = vmul.f32 %v1465, %v1505
    %v1551 = vmul.f32 %v1466, %v1509
    %v1552 = vmul.f32 %v1467, %v1513
    %v1553 = vmul.f32 %v1468, %v1517
    %v1554 = vmul.f32 %v1469, %v1505
    %v1555 = vmul.f32 %v1470, %v1509
    %v1556 = vmul.f32 %v1471, %v1513
    %v1557 = vmul.f32 %v1472, %v1517
    %v1558 = vmul.f32 %v1473, %v1505
    %v1559 = vmul.f32 %v1474, %v1509
    %v1560 = vmul.f32 %v1475, %v1513
    %v1561 = vmul.f32 %v1476, %v1517
    %v1562 = vmul.f32 %v1477, %v1505
    %v1563 = vmul.f32 %v1478, %v1509
    %v1564 = vmul.f32 %v1479, %v1513
    %v1565 = vmul.f32 %v1480, %v1517
    %v1566 = vmul.f32 %v1481, %v1505
    %v1567 = vmul.f32 %v1482, %v1509
    %v1568 = vmul.f32 %v1483, %v1513
    %v1569 = vmul.f32 %v1484, %v1517
    %v1570 = vmul.f32 %v1485, %v1505
    %v1571 = vmul.f32 %v1486, %v1509
    %v1572 = vmul.f32 %v1487, %v1513
    %v1573 = vmul.f32 %v1488, %v1517
    %v1574 = vmul.f32 %v1489, %v1505
    %v1575 = vmul.f32 %v1490, %v1509
    %v1576 = vmul.f32 %v1491, %v1513
    %v1577 = vmul.f32 %v1492, %v1517
    %v1578 = vmul.f32 %v1493, %v1505
    %v1579 = vmul.f32 %v1494, %v1509
    %v1580 = vmul.f32 %v1495, %v1513
    %v1581 = vmul.f32 %v1496, %v1517
    %v1582 = vmul.f32 %v1497, %v1505
    %v1583 = vmul.f32 %v1498, %v1509
    %v1584 = vmul.f32 %v1499, %v1513
    %v1585 = vmul.f32 %v1500, %v1517
    %v1587 = vlaneseq
    %v1588 = vshrl.u32 %v1587, 7
    %v1589 = vsub.s32 0, %v1588
    %v1590 = vrot.slane %v1083, %v1589
    %v1591 = vlaneseq
    %v1592 = vshrl.u32 %v1591, 7
    %v1593 = vsub.s32 1, %v1592
    %v1594 = vrot.slane %v1083, %v1593
    %v1595 = vlaneseq
    %v1596 = vshrl.u32 %v1595, 7
    %v1597 = vsub.s32 2, %v1596
    %v1598 = vrot.slane %v1083, %v1597
    %v1599 = vlaneseq
    %v1600 = vshrl.u32 %v1599, 7
    %v1601 = vsub.s32 3, %v1600
    %v1602 = vrot.slane %v1083, %v1601
    %v1607 = vadd.f32 %v1522, %v1590
    %v1608 = vadd.f32 %v1523, %v1594
    %v1609 = vadd.f32 %v1524, %v1598
    %v1610 = vadd.f32 %v1525, %v1602
    %v1611 = vadd.f32 %v1526, %v1590
    %v1612 = vadd.f32 %v1527, %v1594
    %v1613 = vadd.f32 %v1528, %v1598
    %v1614 = vadd.f32 %v1529, %v1602
    %v1615 = vadd.f32 %v1530, %v1590
    %v1616 = vadd.f32 %v1531, %v1594
    %v1617 = vadd.f32 %v1532, %v1598
    %v1618 = vadd.f32 %v1533, %v1602
    %v1619 = vadd.f32 %v1534, %v1590
    %v1620 = vadd.f32 %v1535, %v1594
    %v1621 = vadd.f32 %v1536, %v1598
    %v1622 = vadd.f32 %v1537, %v1602
    %v1623 = vadd.f32 %v1538, %v1590
    %v1624 = vadd.f32 %v1539, %v1594
    %v1625 = vadd.f32 %v1540, %v1598
    %v1626 = vadd.f32 %v1541, %v1602
    %v1627 = vadd.f32 %v1542, %v1590
    %v1628 = vadd.f32 %v1543, %v1594
    %v1629 = vadd.f32 %v1544, %v1598
    %v1630 = vadd.f32 %v1545, %v1602
    %v1631 = vadd.f32 %v1546, %v1590
    %v1632 = vadd.f32 %v1547, %v1594
    %v1633 = vadd.f32 %v1548, %v1598
    %v1634 = vadd.f32 %v1549, %v1602
    %v1635 = vadd.f32 %v1550, %v1590
    %v1636 = vadd.f32 %v1551, %v1594
    %v1637 = vadd.f32 %v1552, %v1598
    %v1638 = vadd.f32 %v1553, %v1602
    %v1639 = vadd.f32 %v1554, %v1590
    %v1640 = vadd.f32 %v1555, %v1594
    %v1641 = vadd.f32 %v1556, %v1598
    %v1642 = vadd.f32 %v1557, %v1602
    %v1643 = vadd.f32 %v1558, %v1590
    %v1644 = vadd.f32 %v1559, %v1594
    %v1645 = vadd.f32 %v1560, %v1598
    %v1646 = vadd.f32 %v1561, %v1602
    %v1647 = vadd.f32 %v1562, %v1590
    %v1648 = vadd.f32 %v1563, %v1594
    %v1649 = vadd.f32 %v1564, %v1598
    %v1650 = vadd.f32 %v1565, %v1602
    %v1651 = vadd.f32 %v1566, %v1590
    %v1652 = vadd.f32 %v1567, %v1594
    %v1653 = vadd.f32 %v1568, %v1598
    %v1654 = vadd.f32 %v1569, %v1602
    %v1655 = vadd.f32 %v1570, %v1590
    %v1656 = vadd.f32 %v1571, %v1594
    %v1657 = vadd.f32 %v1572, %v1598
    %v1658 = vadd.f32 %v1573, %v1602
    %v1659 = vadd.f32 %v1574, %v1590
    %v1660 = vadd.f32 %v1575, %v1594
    %v1661 = vadd.f32 %v1576, %v1598
    %v1662 = vadd.f32 %v1577, %v1602
    %v1663 = vadd.f32 %v1578, %v1590
    %v1664 = vadd.f32 %v1579, %v1594
    %v1665 = vadd.f32 %v1580, %v1598
    %v1666 = vadd.f32 %v1581, %v1602
    %v1667 = vadd.f32 %v1582, %v1590
    %v1668 = vadd.f32 %v1583, %v1594
    %v1669 = vadd.f32 %v1584, %v1598
    %v1670 = vadd.f32 %v1585, %v1602
    %v1671 = vpack.c.bf16 %v1611, %v1607
    %v1672 = vpack.c.bf16 %v1612, %v1608
    %v1673 = vpack.c.bf16 %v1613, %v1609
    %v1674 = vpack.c.bf16 %v1614, %v1610
    %v1675 = vpack.c.bf16 %v1619, %v1615
    %v1676 = vpack.c.bf16 %v1620, %v1616
    %v1677 = vpack.c.bf16 %v1621, %v1617
    %v1678 = vpack.c.bf16 %v1622, %v1618
    %v1679 = vpack.c.bf16 %v1627, %v1623
    %v1680 = vpack.c.bf16 %v1628, %v1624
    %v1681 = vpack.c.bf16 %v1629, %v1625
    %v1682 = vpack.c.bf16 %v1630, %v1626
    %v1683 = vpack.c.bf16 %v1635, %v1631
    %v1684 = vpack.c.bf16 %v1636, %v1632
    %v1685 = vpack.c.bf16 %v1637, %v1633
    %v1686 = vpack.c.bf16 %v1638, %v1634
    %v1687 = vpack.c.bf16 %v1643, %v1639
    %v1688 = vpack.c.bf16 %v1644, %v1640
    %v1689 = vpack.c.bf16 %v1645, %v1641
    %v1690 = vpack.c.bf16 %v1646, %v1642
    %v1691 = vpack.c.bf16 %v1651, %v1647
    %v1692 = vpack.c.bf16 %v1652, %v1648
    %v1693 = vpack.c.bf16 %v1653, %v1649
    %v1694 = vpack.c.bf16 %v1654, %v1650
    %v1695 = vpack.c.bf16 %v1659, %v1655
    %v1696 = vpack.c.bf16 %v1660, %v1656
    %v1697 = vpack.c.bf16 %v1661, %v1657
    %v1698 = vpack.c.bf16 %v1662, %v1658
    %v1699 = vpack.c.bf16 %v1667, %v1663
    %v1700 = vpack.c.bf16 %v1668, %v1664
    %v1701 = vpack.c.bf16 %v1669, %v1665
    %v1702 = vpack.c.bf16 %v1670, %v1666
    %v1703 = vld [vmem:[#allocation7] sm:$0xf]
    %v1704 = vld [vmem:[#allocation7 + $0x4] sm:$0xf]
    %v1705 = vld [vmem:[#allocation7 + $0x8] sm:$0xf]
    %v1706 = vld [vmem:[#allocation7 + $0xc] sm:$0xf]
    %v1707 = vld [vmem:[#allocation7 + $0x10] sm:$0xf]
    %v1708 = vld [vmem:[#allocation7 + $0x14] sm:$0xf]
    %v1709 = vld [vmem:[#allocation7 + $0x18] sm:$0xf]
    %v1710 = vld [vmem:[#allocation7 + $0x1c] sm:$0xf]
    %v1711 = vld [vmem:[#allocation7 + $0x20] sm:$0xf]
    %v1712 = vld [vmem:[#allocation7 + $0x24] sm:$0xf]
    %v1713 = vld [vmem:[#allocation7 + $0x28] sm:$0xf]
    %v1714 = vld [vmem:[#allocation7 + $0x2c] sm:$0xf]
    %v1715 = vld [vmem:[#allocation7 + $0x30] sm:$0xf]
    %v1716 = vld [vmem:[#allocation7 + $0x34] sm:$0xf]
    %v1717 = vld [vmem:[#allocation7 + $0x38] sm:$0xf]
    %v1718 = vld [vmem:[#allocation7 + $0x3c] sm:$0xf]
    %v1719 = vld [vmem:[#allocation7 + $0x40] sm:$0xf]
    %v1720 = vld [vmem:[#allocation7 + $0x44] sm:$0xf]
    %v1721 = vld [vmem:[#allocation7 + $0x48] sm:$0xf]
    %v1722 = vld [vmem:[#allocation7 + $0x4c] sm:$0xf]
    %v1723 = vld [vmem:[#allocation7 + $0x50] sm:$0xf]
    %v1724 = vld [vmem:[#allocation7 + $0x54] sm:$0xf]
    %v1725 = vld [vmem:[#allocation7 + $0x58] sm:$0xf]
    %v1726 = vld [vmem:[#allocation7 + $0x5c] sm:$0xf]
    %v1727 = vld [vmem:[#allocation7 + $0x60] sm:$0xf]
    %v1728 = vld [vmem:[#allocation7 + $0x64] sm:$0xf]
    %v1729 = vld [vmem:[#allocation7 + $0x68] sm:$0xf]
    %v1730 = vld [vmem:[#allocation7 + $0x6c] sm:$0xf]
    %v1731 = vld [vmem:[#allocation7 + $0x70] sm:$0xf]
    %v1732 = vld [vmem:[#allocation7 + $0x74] sm:$0xf]
    %v1733 = vld [vmem:[#allocation7 + $0x78] sm:$0xf]
    %v1734 = vld [vmem:[#allocation7 + $0x7c] sm:$0xf]
    %v1735 = vld [vmem:[#allocation7 + $0x80] sm:$0xf]
    %v1736 = vld [vmem:[#allocation7 + $0x84] sm:$0xf]
    %v1737 = vld [vmem:[#allocation7 + $0x88] sm:$0xf]
    %v1738 = vld [vmem:[#allocation7 + $0x8c] sm:$0xf]
    %v1739 = vld [vmem:[#allocation7 + $0x90] sm:$0xf]
    %v1740 = vld [vmem:[#allocation7 + $0x94] sm:$0xf]
    %v1741 = vld [vmem:[#allocation7 + $0x98] sm:$0xf]
    %v1742 = vld [vmem:[#allocation7 + $0x9c] sm:$0xf]
    %v1743 = vld [vmem:[#allocation7 + $0xa0] sm:$0xf]
    %v1744 = vld [vmem:[#allocation7 + $0xa4] sm:$0xf]
    %v1745 = vld [vmem:[#allocation7 + $0xa8] sm:$0xf]
    %v1746 = vld [vmem:[#allocation7 + $0xac] sm:$0xf]
    %v1747 = vld [vmem:[#allocation7 + $0xb0] sm:$0xf]
    %v1748 = vld [vmem:[#allocation7 + $0xb4] sm:$0xf]
    %v1749 = vld [vmem:[#allocation7 + $0xb8] sm:$0xf]
    %v1750 = vld [vmem:[#allocation7 + $0xbc] sm:$0xf]
    %v1751 = vld [vmem:[#allocation7 + $0xc0] sm:$0xf]
    %v1752 = vld [vmem:[#allocation7 + $0xc4] sm:$0xf]
    %v1753 = vld [vmem:[#allocation7 + $0xc8] sm:$0xf]
    %v1754 = vld [vmem:[#allocation7 + $0xcc] sm:$0xf]
    %v1755 = vld [vmem:[#allocation7 + $0xd0] sm:$0xf]
    %v1756 = vld [vmem:[#allocation7 + $0xd4] sm:$0xf]
    %v1757 = vld [vmem:[#allocation7 + $0xd8] sm:$0xf]
    %v1758 = vld [vmem:[#allocation7 + $0xdc] sm:$0xf]
    %v1759 = vld [vmem:[#allocation7 + $0xe0] sm:$0xf]
    %v1760 = vld [vmem:[#allocation7 + $0xe4] sm:$0xf]
    %v1761 = vld [vmem:[#allocation7 + $0xe8] sm:$0xf]
    %v1762 = vld [vmem:[#allocation7 + $0xec] sm:$0xf]
    %v1763 = vld [vmem:[#allocation7 + $0xf0] sm:$0xf]
    %v1764 = vld [vmem:[#allocation7 + $0xf4] sm:$0xf]
    %v1765 = vld [vmem:[#allocation7 + $0xf8] sm:$0xf]
    %v1766 = vld [vmem:[#allocation7 + $0xfc] sm:$0xf]
    %v1767 = vld [vmem:[%s8] sm:$0x1]
    %v1769 = vlaneseq
    %v1770 = vshrl.u32 %v1769, 7
    %v1771 = vsub.s32 0, %v1770
    %v1772 = vrot.slane %v1767, %v1771
    %v1838 = vunpack.c.l.b16 %v1703
    %v1839 = vunpack.c.l.b16 %v1704
    %v1840 = vunpack.c.l.b16 %v1705
    %v1841 = vunpack.c.l.b16 %v1706
    %v1842 = vunpack.c.l.b16 %v1707
    %v1843 = vunpack.c.l.b16 %v1708
    %v1844 = vunpack.c.l.b16 %v1709
    %v1845 = vunpack.c.l.b16 %v1710
    %v1846 = vunpack.c.l.b16 %v1711
    %v1847 = vunpack.c.l.b16 %v1712
    %v1848 = vunpack.c.l.b16 %v1713
    %v1849 = vunpack.c.l.b16 %v1714
    %v1850 = vunpack.c.l.b16 %v1715
    %v1851 = vunpack.c.l.b16 %v1716
    %v1852 = vunpack.c.l.b16 %v1717
    %v1853 = vunpack.c.l.b16 %v1718
    %v1854 = vunpack.c.l.b16 %v1719
    %v1855 = vunpack.c.l.b16 %v1720
    %v1856 = vunpack.c.l.b16 %v1721
    %v1857 = vunpack.c.l.b16 %v1722
    %v1858 = vunpack.c.l.b16 %v1723
    %v1859 = vunpack.c.l.b16 %v1724
    %v1860 = vunpack.c.l.b16 %v1725
    %v1861 = vunpack.c.l.b16 %v1726
    %v1862 = vunpack.c.l.b16 %v1727
    %v1863 = vunpack.c.l.b16 %v1728
    %v1864 = vunpack.c.l.b16 %v1729
    %v1865 = vunpack.c.l.b16 %v1730
    %v1866 = vunpack.c.l.b16 %v1731
    %v1867 = vunpack.c.l.b16 %v1732
    %v1868 = vunpack.c.l.b16 %v1733
    %v1869 = vunpack.c.l.b16 %v1734
    %v1870 = vunpack.c.l.b16 %v1735
    %v1871 = vunpack.c.l.b16 %v1736
    %v1872 = vunpack.c.l.b16 %v1737
    %v1873 = vunpack.c.l.b16 %v1738
    %v1874 = vunpack.c.l.b16 %v1739
    %v1875 = vunpack.c.l.b16 %v1740
    %v1876 = vunpack.c.l.b16 %v1741
    %v1877 = vunpack.c.l.b16 %v1742
    %v1878 = vunpack.c.l.b16 %v1743
    %v1879 = vunpack.c.l.b16 %v1744
    %v1880 = vunpack.c.l.b16 %v1745
    %v1881 = vunpack.c.l.b16 %v1746
    %v1882 = vunpack.c.l.b16 %v1747
    %v1883 = vunpack.c.l.b16 %v1748
    %v1884 = vunpack.c.l.b16 %v1749
    %v1885 = vunpack.c.l.b16 %v1750
    %v1886 = vunpack.c.l.b16 %v1751
    %v1887 = vunpack.c.l.b16 %v1752
    %v1888 = vunpack.c.l.b16 %v1753
    %v1889 = vunpack.c.l.b16 %v1754
    %v1890 = vunpack.c.l.b16 %v1755
    %v1891 = vunpack.c.l.b16 %v1756
    %v1892 = vunpack.c.l.b16 %v1757
    %v1893 = vunpack.c.l.b16 %v1758
    %v1894 = vunpack.c.l.b16 %v1759
    %v1895 = vunpack.c.l.b16 %v1760
    %v1896 = vunpack.c.l.b16 %v1761
    %v1897 = vunpack.c.l.b16 %v1762
    %v1898 = vunpack.c.l.b16 %v1763
    %v1899 = vunpack.c.l.b16 %v1764
    %v1900 = vunpack.c.l.b16 %v1765
    %v1901 = vunpack.c.l.b16 %v1766
    %v1902 = vpack.c.b16 %v1839, %v1838
    %v1903 = vpack.c.b16 %v1841, %v1840
    %v1904 = vpack.c.b16 %v1843, %v1842
    %v1905 = vpack.c.b16 %v1845, %v1844
    %v1906 = vpack.c.b16 %v1847, %v1846
    %v1907 = vpack.c.b16 %v1849, %v1848
    %v1908 = vpack.c.b16 %v1851, %v1850
    %v1909 = vpack.c.b16 %v1853, %v1852
    %v1910 = vpack.c.b16 %v1855, %v1854
    %v1911 = vpack.c.b16 %v1857, %v1856
    %v1912 = vpack.c.b16 %v1859, %v1858
    %v1913 = vpack.c.b16 %v1861, %v1860
    %v1914 = vpack.c.b16 %v1863, %v1862
    %v1915 = vpack.c.b16 %v1865, %v1864
    %v1916 = vpack.c.b16 %v1867, %v1866
    %v1917 = vpack.c.b16 %v1869, %v1868
    %v1918 = vpack.c.b16 %v1871, %v1870
    %v1919 = vpack.c.b16 %v1873, %v1872
    %v1920 = vpack.c.b16 %v1875, %v1874
    %v1921 = vpack.c.b16 %v1877, %v1876
    %v1922 = vpack.c.b16 %v1879, %v1878
    %v1923 = vpack.c.b16 %v1881, %v1880
    %v1924 = vpack.c.b16 %v1883, %v1882
    %v1925 = vpack.c.b16 %v1885, %v1884
    %v1926 = vpack.c.b16 %v1887, %v1886
    %v1927 = vpack.c.b16 %v1889, %v1888
    %v1928 = vpack.c.b16 %v1891, %v1890
    %v1929 = vpack.c.b16 %v1893, %v1892
    %v1930 = vpack.c.b16 %v1895, %v1894
    %v1931 = vpack.c.b16 %v1897, %v1896
    %v1932 = vpack.c.b16 %v1899, %v1898
    %v1933 = vpack.c.b16 %v1901, %v1900
    %1966 = vmatprep.subr.bf16.mxu0 0
    %1967 = vmatpush1.bf16.msra.mxu0 %v1902
    %1968 = vmatprep.subr.bf16.mxu0 0
    %1969 = vmatpush1.bf16.msra.mxu0 %v1903
    %1970 = vmatprep.subr.bf16.mxu0 0
    %1971 = vmatpush1.bf16.msra.mxu0 %v1904
    %1972 = vmatprep.subr.bf16.mxu0 0
    %1973 = vmatpush1.bf16.msra.mxu0 %v1905
    %1974 = vmatprep.subr.bf16.mxu0 0
    %1975 = vmatpush1.bf16.msra.mxu0 %v1906
    %1976 = vmatprep.subr.bf16.mxu0 0
    %1977 = vmatpush1.bf16.msra.mxu0 %v1907
    %1978 = vmatprep.subr.bf16.mxu0 0
    %1979 = vmatpush1.bf16.msra.mxu0 %v1908
    %1980 = vmatprep.subr.bf16.mxu0 0
    %1981 = vmatpush1.bf16.msra.mxu0 %v1909
    %1982 = vmatprep.subr.bf16.mxu0 0
    %1983 = vmatpush1.bf16.msra.mxu0 %v1910
    %1984 = vmatprep.subr.bf16.mxu0 0
    %1985 = vmatpush1.bf16.msra.mxu0 %v1911
    %1986 = vmatprep.subr.bf16.mxu0 0
    %1987 = vmatpush1.bf16.msra.mxu0 %v1912
    %1988 = vmatprep.subr.bf16.mxu0 0
    %1989 = vmatpush1.bf16.msra.mxu0 %v1913
    %1990 = vmatprep.subr.bf16.mxu0 0
    %1991 = vmatpush1.bf16.msra.mxu0 %v1914
    %1992 = vmatprep.subr.bf16.mxu0 0
    %1993 = vmatpush1.bf16.msra.mxu0 %v1915
    %1994 = vmatprep.subr.bf16.mxu0 0
    %1995 = vmatpush1.bf16.msra.mxu0 %v1916
    %1996 = vmatprep.subr.bf16.mxu0 0
    %1997 = vmatpush1.bf16.msra.mxu0 %v1917
    %1998 = vmatprep.mubr.bf16.mxu0 %v1672
    %1999 = vmatmul.mubr.bf16.gmra.mrb[0].mxu0 %v1671
    %v2000 = vpop.f32.mrb[0].mxu0
    %v2001 = vadd.f32 %v1772, %v2000
    %v2002 = vpop.f32.mrb[0].mxu0
    %v2003 = vpop.f32.mrb[0].mxu0
    %v2004 = vadd.f32 %v1772, %v2003
    %v2005 = vpop.f32.mrb[0].mxu0
    %2006 = vmatprep.mubr.bf16.mxu0 %v1676
    %2007 = vmatmul.mubr.bf16.gmra.mrb[0].mxu0 %v1675
    %v2008 = vpop.f32.mrb[0].mxu0
    %v2009 = vadd.f32 %v1772, %v2008
    %v2010 = vpop.f32.mrb[0].mxu0
    %v2011 = vpop.f32.mrb[0].mxu0
    %v2012 = vadd.f32 %v1772, %v2011
    %v2013 = vpop.f32.mrb[0].mxu0
    %2014 = vmatprep.mubr.bf16.mxu0 %v1680
    %2015 = vmatmul.mubr.bf16.gmra.mrb[0].mxu0 %v1679
    %v2016 = vpop.f32.mrb[0].mxu0
    %v2017 = vadd.f32 %v1772, %v2016
    %v2018 = vpop.f32.mrb[0].mxu0
    %v2019 = vpop.f32.mrb[0].mxu0
    %v2020 = vadd.f32 %v1772, %v2019
    %v2021 = vpop.f32.mrb[0].mxu0
    %2022 = vmatprep.mubr.bf16.mxu0 %v1684
    %2023 = vmatmul.mubr.bf16.gmra.mrb[0].mxu0 %v1683
    %v2024 = vpop.f32.mrb[0].mxu0
    %v2025 = vadd.f32 %v1772, %v2024
    %v2026 = vpop.f32.mrb[0].mxu0
    %v2027 = vpop.f32.mrb[0].mxu0
    %v2028 = vadd.f32 %v1772, %v2027
    %v2029 = vpop.f32.mrb[0].mxu0
    %2030 = vmatprep.mubr.bf16.mxu0 %v1688
    %2031 = vmatmul.mubr.bf16.gmra.mrb[0].mxu0 %v1687
    %v2032 = vpop.f32.mrb[0].mxu0
    %v2033 = vadd.f32 %v1772, %v2032
    %v2034 = vpop.f32.mrb[0].mxu0
    %v2035 = vpop.f32.mrb[0].mxu0
    %v2036 = vadd.f32 %v1772, %v2035
    %v2037 = vpop.f32.mrb[0].mxu0
    %2038 = vmatprep.mubr.bf16.mxu0 %v1692
    %2039 = vmatmul.mubr.bf16.gmra.mrb[0].mxu0 %v1691
    %v2040 = vpop.f32.mrb[0].mxu0
    %v2041 = vadd.f32 %v1772, %v2040
    %v2042 = vpop.f32.mrb[0].mxu0
    %v2043 = vpop.f32.mrb[0].mxu0
    %v2044 = vadd.f32 %v1772, %v2043
    %v2045 = vpop.f32.mrb[0].mxu0
    %2046 = vmatprep.mubr.bf16.mxu0 %v1696
    %2047 = vmatmul.mubr.bf16.gmra.mrb[0].mxu0 %v1695
    %v2048 = vpop.f32.mrb[0].mxu0
    %v2049 = vadd.f32 %v1772, %v2048
    %v2050 = vpop.f32.mrb[0].mxu0
    %v2051 = vpop.f32.mrb[0].mxu0
    %v2052 = vadd.f32 %v1772, %v2051
    %v2053 = vpop.f32.mrb[0].mxu0
    %2054 = vmatprep.mubr.bf16.mxu0 %v1700
    %2055 = vmatmul.mubr.bf16.gmra.mrb[0].mxu0 %v1699
    %v2056 = vpop.f32.mrb[0].mxu0
    %v2057 = vadd.f32 %v1772, %v2056
    %v2058 = vpop.f32.mrb[0].mxu0
    %v2059 = vpop.f32.mrb[0].mxu0
    %v2060 = vadd.f32 %v1772, %v2059
    %v2061 = vpop.f32.mrb[0].mxu0
    %2062 = vdwg.mxu0
    %2063 = vmatprep.subr.bf16.mxu0 0
    %2064 = vmatpush1.bf16.msra.mxu0 %v1918
    %2065 = vmatprep.subr.bf16.mxu0 0
    %2066 = vmatpush1.bf16.msra.mxu0 %v1919
    %2067 = vmatprep.subr.bf16.mxu0 0
    %2068 = vmatpush1.bf16.msra.mxu0 %v1920
    %2069 = vmatprep.subr.bf16.mxu0 0
    %2070 = vmatpush1.bf16.msra.mxu0 %v1921
    %2071 = vmatprep.subr.bf16.mxu0 0
    %2072 = vmatpush1.bf16.msra.mxu0 %v1922
    %2073 = vmatprep.subr.bf16.mxu0 0
    %2074 = vmatpush1.bf16.msra.mxu0 %v1923
    %2075 = vmatprep.subr.bf16.mxu0 0
    %2076 = vmatpush1.bf16.msra.mxu0 %v1924
    %2077 = vmatprep.subr.bf16.mxu0 0
    %2078 = vmatpush1.bf16.msra.mxu0 %v1925
    %2079 = vmatprep.subr.bf16.mxu0 0
    %2080 = vmatpush1.bf16.msra.mxu0 %v1926
    %2081 = vmatprep.subr.bf16.mxu0 0
    %2082 = vmatpush1.bf16.msra.mxu0 %v1927
    %2083 = vmatprep.subr.bf16.mxu0 0
    %2084 = vmatpush1.bf16.msra.mxu0 %v1928
    %2085 = vmatprep.subr.bf16.mxu0 0
    %2086 = vmatpush1.bf16.msra.mxu0 %v1929
    %2087 = vmatprep.subr.bf16.mxu0 0
    %2088 = vmatpush1.bf16.msra.mxu0 %v1930
    %2089 = vmatprep.subr.bf16.mxu0 0
    %2090 = vmatpush1.bf16.msra.mxu0 %v1931
    %2091 = vmatprep.subr.bf16.mxu0 0
    %2092 = vmatpush1.bf16.msra.mxu0 %v1932
    %2093 = vmatprep.subr.bf16.mxu0 0
    %2094 = vmatpush1.bf16.msra.mxu0 %v1933
    %2095 = vmatprep.mubr.bf16.mxu0 %v1674
    %2096 = vmatmul.mubr.bf16.gmra.mrb[0].mxu0 %v1673
    %v2097 = vpop.f32.mrb[0].mxu0
    %v2098 = vadd.f32 %v2001, %v2097
    %v2099 = vpop.f32.mrb[0].mxu0
    %v2100 = vpop.f32.mrb[0].mxu0
    %v2101 = vadd.f32 %v2004, %v2100
    %v2102 = vpop.f32.mrb[0].mxu0
    %2103 = vmatprep.mubr.bf16.mxu0 %v1678
    %2104 = vmatmul.mubr.bf16.gmra.mrb[0].mxu0 %v1677
    %v2105 = vpop.f32.mrb[0].mxu0
    %v2106 = vadd.f32 %v2009, %v2105
    %v2107 = vpop.f32.mrb[0].mxu0
    %v2108 = vpop.f32.mrb[0].mxu0
    %v2109 = vadd.f32 %v2012, %v2108
    %v2110 = vpop.f32.mrb[0].mxu0
    %2111 = vmatprep.mubr.bf16.mxu0 %v1682
    %2112 = vmatmul.mubr.bf16.gmra.mrb[0].mxu0 %v1681
    %v2113 = vpop.f32.mrb[0].mxu0
    %v2114 = vadd.f32 %v2017, %v2113
    %v2115 = vpop.f32.mrb[0].mxu0
    %v2116 = vpop.f32.mrb[0].mxu0
    %v2117 = vadd.f32 %v2020, %v2116
    %v2118 = vpop.f32.mrb[0].mxu0
    %2119 = vmatprep.mubr.bf16.mxu0 %v1686
    %2120 = vmatmul.mubr.bf16.gmra.mrb[0].mxu0 %v1685
    %v2121 = vpop.f32.mrb[0].mxu0
    %v2122 = vadd.f32 %v2025, %v2121
    %v2123 = vpop.f32.mrb[0].mxu0
    %v2124 = vpop.f32.mrb[0].mxu0
    %v2125 = vadd.f32 %v2028, %v2124
    %v2126 = vpop.f32.mrb[0].mxu0
    %2127 = vmatprep.mubr.bf16.mxu0 %v1690
    %2128 = vmatmul.mubr.bf16.gmra.mrb[0].mxu0 %v1689
    %v2129 = vpop.f32.mrb[0].mxu0
    %v2130 = vadd.f32 %v2033, %v2129
    %v2131 = vpop.f32.mrb[0].mxu0
    %v2132 = vpop.f32.mrb[0].mxu0
    %v2133 = vadd.f32 %v2036, %v2132
    %v2134 = vpop.f32.mrb[0].mxu0
    %2135 = vmatprep.mubr.bf16.mxu0 %v1694
    %2136 = vmatmul.mubr.bf16.gmra.mrb[0].mxu0 %v1693
    %v2137 = vpop.f32.mrb[0].mxu0
    %v2138 = vadd.f32 %v2041, %v2137
    %v2139 = vpop.f32.mrb[0].mxu0
    %v2140 = vpop.f32.mrb[0].mxu0
    %v2141 = vadd.f32 %v2044, %v2140
    %v2142 = vpop.f32.mrb[0].mxu0
    %2143 = vmatprep.mubr.bf16.mxu0 %v1698
    %2144 = vmatmul.mubr.bf16.gmra.mrb[0].mxu0 %v1697
    %v2145 = vpop.f32.mrb[0].mxu0
    %v2146 = vadd.f32 %v2049, %v2145
    %v2147 = vpop.f32.mrb[0].mxu0
    %v2148 = vpop.f32.mrb[0].mxu0
    %v2149 = vadd.f32 %v2052, %v2148
    %v2150 = vpop.f32.mrb[0].mxu0
    %2151 = vmatprep.mubr.bf16.mxu0 %v1702
    %2152 = vmatmul.mubr.bf16.gmra.mrb[0].mxu0 %v1701
    %v2153 = vpop.f32.mrb[0].mxu0
    %v2154 = vadd.f32 %v2057, %v2153
    %v2155 = vpop.f32.mrb[0].mxu0
    %v2156 = vpop.f32.mrb[0].mxu0
    %v2157 = vadd.f32 %v2060, %v2156
    %v2158 = vpop.f32.mrb[0].mxu0
    %2159 = vdwg.mxu0
    %2160 = vst [vmem:[#allocation8] sm:$0xff] %v2098
    %2161 = vst [vmem:[#allocation8 + $0x8] sm:$0xff] %v2101
    %2162 = vst [vmem:[#allocation8 + $0x10] sm:$0xff] %v2106
    %2163 = vst [vmem:[#allocation8 + $0x18] sm:$0xff] %v2109
    %2164 = vst [vmem:[#allocation8 + $0x20] sm:$0xff] %v2114
    %2165 = vst [vmem:[#allocation8 + $0x28] sm:$0xff] %v2117
    %2166 = vst [vmem:[#allocation8 + $0x30] sm:$0xff] %v2122
    %2167 = vst [vmem:[#allocation8 + $0x38] sm:$0xff] %v2125
    %2168 = vst [vmem:[#allocation8 + $0x40] sm:$0xff] %v2130
    %2169 = vst [vmem:[#allocation8 + $0x48] sm:$0xff] %v2133
    %2170 = vst [vmem:[#allocation8 + $0x50] sm:$0xff] %v2138
    %2171 = vst [vmem:[#allocation8 + $0x58] sm:$0xff] %v2141
    %2172 = vst [vmem:[#allocation8 + $0x60] sm:$0xff] %v2146
    %2173 = vst [vmem:[#allocation8 + $0x68] sm:$0xff] %v2149
    %2174 = vst [vmem:[#allocation8 + $0x70] sm:$0xff] %v2154
    %2175 = vst [vmem:[#allocation8 + $0x78] sm:$0xff] %v2157
    // Predicated region
    $region50: #{tpu_custom_call.1} parent=1 // pred_check
      _
    $region51: #{tpu_custom_call.1} parent=1 // pred_check_branch
      %2177 = sbr.rel (0) target = $region53
    $region52: #{tpu_custom_call.1} parent=1 // pred_region
      %s2179 = ssub.s32 2048, 2048
      %2180 = vsyncadd [#allocation4], %s2179
      %s2181 = sshll.u32 [#allocation8], 4
      %s2182 = int_to_ptr.vmem [resolvable:$true] %s2181
      %2187 = dma.vmem_to_hbm [thread:$0]  %s2182, 2048, %s9, [#allocation4], 128, 128, 8
    $region53: #{tpu_custom_call.1} parent=1 // pred_fallthru
      _
    // Predicated region
    $region54: #{tpu_custom_call.1} parent=1 // pred_check
      _
    $region55: #{tpu_custom_call.1} parent=1 // pred_check_branch
      %2189 = sbr.rel (0) target = $region57
    $region56: #{tpu_custom_call.1} parent=1 // pred_region
      %2190 = dma.done [#allocation4], 2048
    $region57: #{tpu_custom_call.1} parent=1 // pred_fallthru
      _
    %2191 = vsyncpa [#allocation3], 1
    %2192 = vsyncpa [#allocation6], 1
    %2193 = vsyncpa [#allocation4], 1

</llo_original>
